<compile_context>
chip_gen: v6e
topology: v6e:2x2x1
jax: 0.10.0
libtpu: 0.0.40
codegen_flags: <defaults>
</compile_context>

<pallas_src>
import functools
import numpy as np
import jax
import jax.numpy as jnp
from jax.experimental import pallas as pl
from jax.experimental.pallas import tpu as pltpu

KT, KH, KW = 2, 3, 3                # conv_res0 / conv_res1 kernel (2, 3, 3)
N_TAPS = KT * KH * KW               # 18
RES_BALANCE = 0.5
CLIP_ACT = 256.0
MP_SILU_SCALE = 1.0 / 0.596


def mp_silu(x):
    # EDM2 magnitude-preserving SiLU (divide folded to a multiply)
    return x * jax.nn.sigmoid(x) * MP_SILU_SCALE


# ---------------------------------------------------------------------------
# Fused Pallas kernel: conv_res0 -> (emb gate, pre-folded) -> mp_silu ->
#                      conv_res1 -> mp_sum residual -> clip
# ---------------------------------------------------------------------------
def _block_kernel(xs_ref, xr_ref, mask_ref, w0_ref, w1_ref, o_ref, *,
                  shifts, res_a, res_b, clip):
    """One (batch, temporal-tile) grid step.

    xs_ref   (1, 1, C,    L) bf16 : mp_silu(x), zero-padded planes, flattened
    xr_ref   (1, 1, C,    L) f32  : raw x (residual branch), same flat layout
    mask_ref (1, L)          f32  : 1 at plane-interior positions, 0 at halo
    w0_ref   (1, 18, Cmid, C) bf16: conv_res0 taps, pre-scaled by the emb gate
    w1_ref   (18, Cout, Cmid) bf16: conv_res1 taps
    o_ref    (1, 1, Cout, L) f32
    """
    xs = xs_ref[0, 0]                               # (C, L) bf16
    L = xs.shape[-1]
    cmid = w0_ref.shape[2]
    cout = w1_ref.shape[1]

    def lane_shift(v, off):
        # result[:, q] = v[:, (q + off) % L]; kept output positions never wrap.
        s = off % L
        if s == 0:
            return v
        # TODO(synk): pltpu.roll would do this on the XLU slot instead of copies.
        return jnp.concatenate([v[:, s:], v[:, :s]], axis=-1)

    # --- conv_res0 (2x3x3, emb gate folded into weights) as 18 shifted matmuls
    acc0 = jnp.zeros((cmid, L), jnp.float32)
    for tap, off in enumerate(shifts):
        acc0 = acc0 + jnp.dot(w0_ref[0, tap], lane_shift(xs, off),
                              preferred_element_type=jnp.float32)

    # mp_silu; the interior mask re-zeroes the halo so it doubles as conv_res1's
    # spatial zero padding.  Intermediate y stays in VMEM (never hits HBM).
    y = (mask_ref[...] * mp_silu(acc0)).astype(jnp.bfloat16)   # (Cmid, L)

    # --- conv_res1 (2x3x3) on the VMEM-resident intermediate
    acc1 = jnp.zeros((cout, L), jnp.float32)
    for tap, off in enumerate(shifts):
        acc1 = acc1 + jnp.dot(w1_ref[tap], lane_shift(y, off),
                              preferred_element_type=jnp.float32)

    # --- mp_sum residual + clip (constants folded to multiplies)
    out = res_a * xr_ref[0, 0] + res_b * acc1
    o_ref[0, 0] = jnp.clip(out, -clip, clip)


# ---------------------------------------------------------------------------
# Wrapper: layout / halo / weight prep in plain JAX, single pallas_call
# ---------------------------------------------------------------------------
@functools.partial(jax.jit, static_argnames=("t_tile",))
def block_forward_pallas(x_ncthw, emb, params, *, t_tile=2):
    """Block.forward (flavor='enc', resample='keep', conv_skip=None), eval mode."""
    w0, w1, wemb, emb_gain = params["w0"], params["w1"], params["wemb"], params["emb_gain"]
    N, C, T, H, W = x_ncthw.shape
    Cmid = w0.shape[0]
    Cout = w1.shape[0]
    Cemb = wemb.shape[1]
    assert C == Cout, "conv_skip is None only when in_channels == out_channels"

    # Temporal tile: the M-tiling axis of the grid.  Each tile carries a 2-frame
    # halo (kernel depth 2 + temporal wrap).  Shrink t_tile for v7x's 64 MiB VMEM
    # at large H/W; larger tiles amortize the halo recompute.
    TT = min(t_tile, T)
    assert T % TT == 0, "t_tile must divide T"
    nT = T // TT

    P = (H + 2) * (W + 2)            # one zero-padded (H, W) plane, flattened
    L = (TT + 2) * P                 # temporal tile + 2 halo frames

    # ----- activations: temporal wrap halo + spatial zero pad + flatten -----
    x_f = x_ncthw.astype(jnp.float32)
    # output frame t needs x frames {t, t+1, t+2} with wrap (two stacked depth-2 convs)
    x_ext = jnp.take(x_f, np.arange(T + 2, dtype=np.int32) % T, axis=2)       # (N,C,T+2,H,W)
    x_pad = jnp.pad(x_ext, ((0, 0), (0, 0), (0, 0), (1, 1), (1, 1)))          # (N,C,T+2,H+2,W+2)
    fidx = (np.arange(TT + 2, dtype=np.int32)[None, :]
            + TT * np.arange(nT, dtype=np.int32)[:, None])                    # (nT, TT+2)
    x_tiles = jnp.take(x_pad, fidx, axis=2)                                   # (N,C,nT,TT+2,H+2,W+2)
    x_tiles = jnp.transpose(x_tiles, (0, 2, 1, 3, 4, 5))                      # (N,nT,C,TT+2,H+2,W+2)
    x_raw = x_tiles.reshape(N, nT, C, L)                                      # f32 residual branch
    xs = mp_silu(x_raw).astype(jnp.bfloat16)                                  # conv_res0 input (silu once per element)

    # plane-interior mask (also provides conv_res1's zero padding of y)
    m2 = jnp.pad(jnp.ones((H, W), jnp.float32), ((1, 1), (1, 1)))             # (H+2, W+2)
    mask = jnp.tile(m2.reshape(1, P), (1, TT + 2)).reshape(1, L)

    # ----- weights: MP scaling, taps flattened, emb gate hoisted + folded -----
    w0m = jnp.transpose(w0, (2, 3, 4, 0, 1)).reshape(N_TAPS, Cmid, C) / np.sqrt(float(w0[0].size))
    w1m = jnp.transpose(w1, (2, 3, 4, 0, 1)).reshape(N_TAPS, Cout, Cmid) / np.sqrt(float(w1[0].size))
    wem = wemb.reshape(Cmid, Cemb) * (emb_gain / np.sqrt(float(Cemb)))
    c_gate = emb.reshape(N, Cemb).astype(jnp.float32) @ wem.T + 1.0           # (N, Cmid)
    w0g = (w0m[None] * c_gate[:, None, :, None]).astype(jnp.bfloat16)         # (N, 18, Cmid, C)
    w1b = w1m.astype(jnp.bfloat16)                                            # (18, Cout, Cmid)

    # static lane offsets of the 18 conv taps in the flat (frame, plane) layout
    shifts = tuple(dt * P + (dh - 1) * (W + 2) + (dw - 1)
                   for dt in range(KT) for dh in range(KH) for dw in range(KW))
    t = RES_BALANCE
    norm = 1.0 / np.sqrt((1.0 - t) ** 2 + t ** 2)
    kern = functools.partial(_block_kernel, shifts=shifts,
                             res_a=float((1.0 - t) * norm), res_b=float(t * norm),
                             clip=float(CLIP_ACT))

    out_flat = pl.pallas_call(
        kern,
        out_shape=jax.ShapeDtypeStruct((N, nT, Cout, L), jnp.float32),
        grid=(N, nT),
        in_specs=[
            pl.BlockSpec((1, 1, C, L), lambda n, s: (n, s, 0, 0)),            # mp_silu(x), bf16
            pl.BlockSpec((1, 1, C, L), lambda n, s: (n, s, 0, 0)),            # raw x residual, f32
            pl.BlockSpec((1, L), lambda n, s: (0, 0)),                        # interior mask
            pl.BlockSpec((1, N_TAPS, Cmid, C), lambda n, s: (n, 0, 0, 0)),    # gated conv_res0 taps
            pl.BlockSpec((N_TAPS, Cout, Cmid), lambda n, s: (0, 0, 0)),       # conv_res1 taps
        ],
        out_specs=pl.BlockSpec((1, 1, Cout, L), lambda n, s: (n, s, 0, 0)),
        compiler_params=pltpu.CompilerParams(
            dimension_semantics=("parallel", "parallel")),
    )(xs, x_raw, mask, w0g, w1b)

    # drop the temporal/spatial halo and return to NCTHW
    out = out_flat.reshape(N, nT, Cout, TT + 2, H + 2, W + 2)[:, :, :, :TT, 1:H + 1, 1:W + 1]
    out = jnp.transpose(out, (0, 2, 1, 3, 4, 5)).reshape(N, Cout, T, H, W)
    return out


# ---------------------------------------------------------------------------
# Pure-JAX reference (independent: lax.conv_general_dilated, NCTHW like torch)
# ---------------------------------------------------------------------------
def _mpconv3d_ref(x, w, gain):
    w = w * (gain / np.sqrt(float(w[0].size)))
    if w.shape[-3] == 2:
        x = jnp.concatenate([x, x[:, :, 0:1]], axis=2)
    return jax.lax.conv_general_dilated(
        x, w, window_strides=(1, 1, 1),
        padding=[(0, 0), (w.shape[-2] // 2,) * 2, (w.shape[-1] // 2,) * 2],
        dimension_numbers=("NCDHW", "OIDHW", "NCDHW"))


def block_forward_ref(x, emb, params):
    w0, w1, wemb, emb_gain = params["w0"], params["w1"], params["wemb"], params["emb_gain"]
    y = _mpconv3d_ref(mp_silu(x), w0, 1.0)
    c = _mpconv3d_ref(emb, wemb, emb_gain) + 1.0
    y = mp_silu(y * c)
    y = _mpconv3d_ref(y, w1, 1.0)
    t = RES_BALANCE
    out = ((1.0 - t) * x + t * y) / np.sqrt((1.0 - t) ** 2 + t ** 2)
    return jnp.clip(out, -CLIP_ACT, CLIP_ACT)


if __name__ == "__main__":
    # Block(level=0, in_channels=8, out_channels=8, emb_channels=8, flavor='enc',
    #       resample_mode='keep', mlp_multiplier=2, mlp_groups=1) -> conv_skip is None.
    N, C, T, H, W = 2, 8, 4, 8, 8
    Cemb = 8
    mlp_multiplier = 2
    Cmid = C * mlp_multiplier

    key = jax.random.PRNGKey(0)
    kx, ke, k0, k1, k2 = jax.random.split(key, 5)
    x = jax.random.normal(kx, (N, C, T, H, W), jnp.float32)
    emb = jax.random.normal(ke, (N, Cemb, 1, 1, 1), jnp.float32)

    params = {
        "w0": jax.random.normal(k0, (Cmid, C, KT, KH, KW), jnp.float32),      # conv_res0.weight
        "w1": jax.random.normal(k1, (C, Cmid, KT, KH, KW), jnp.float32),      # conv_res1.weight
        "wemb": jax.random.normal(k2, (Cmid, Cemb, 1, 1, 1), jnp.float32),    # emb_linear.weight
        # torch init is zeros([]); use a nonzero value here so the gate path is exercised.
        "emb_gain": jnp.asarray(0.7, jnp.float32),
    }

    out = jax.block_until_ready(block_forward_pallas(x, emb, params, t_tile=2))
    ref = jax.block_until_ready(block_forward_ref(x, emb, params))
    assert out.shape == (N, C, T, H, W)
    # bf16 matmul operands (f32 accumulation) -> slightly looser tolerance
    np.testing.assert_allclose(np.asarray(out), np.asarray(ref), atol=3e-2, rtol=3e-2)
    print("KERNEL_OK")
</pallas_src>

<mosaic_0001>
module attributes {stable_mosaic.version = 11 : i64} {
  func.func @_block_kernel(%arg0: i32, %arg1: i32, %arg2: memref<1x1x8x400xbf16, #tpu.memory_space<vmem>>, %arg3: memref<1x1x8x400xf32, #tpu.memory_space<vmem>>, %arg4: memref<1x400xf32, #tpu.memory_space<vmem>>, %arg5: memref<1x18x16x8xbf16, #tpu.memory_space<vmem>>, %arg6: memref<18x8x16xbf16, #tpu.memory_space<vmem>>, %arg7: memref<1x1x8x400xf32, #tpu.memory_space<vmem>>) attributes {dimension_semantics = [#tpu.dimension_semantics<parallel>, #tpu.dimension_semantics<parallel>], iteration_bounds = array<i64: 2, 2>, scalar_prefetch = 0 : i64, scratch_operands = 0 : i64, tpu.core_type = #tpu.core_type<tc>, window_params = [{transform_indices = @transform_0, window_bounds = array<i64: 1, 1, 8, 400>}, {transform_indices = @transform_1, window_bounds = array<i64: 1, 1, 8, 400>}, {pipeline_mode = #tpu.pipeline_mode<synchronous>, transform_indices = @transform_2, window_bounds = array<i64: 1, 400>}, {transform_indices = @transform_3, window_bounds = array<i64: 1, 18, 16, 8>}, {pipeline_mode = #tpu.pipeline_mode<synchronous>, transform_indices = @transform_4, window_bounds = array<i64: 18, 8, 16>}, {transform_indices = @transform_5, window_bounds = array<i64: 1, 1, 8, 400>}]} {
    %c0 = arith.constant 0 : index
    %c0_0 = arith.constant 0 : index
    %c0_1 = arith.constant 0 : index
    %c0_2 = arith.constant 0 : index
    %0 = vector.load %arg2[%c0, %c0_0, %c0_1, %c0_2] : memref<1x1x8x400xbf16, #tpu.memory_space<vmem>>, vector<1x1x8x400xbf16>
    %1 = vector.shape_cast %0 : vector<1x1x8x400xbf16> to vector<8x400xbf16>
    %cst = arith.constant 0.000000e+00 : f32
    %2 = vector.broadcast %cst : f32 to vector<16x400xf32>
    %c0_3 = arith.constant 0 : index
    %c0_4 = arith.constant 0 : index
    %c0_5 = arith.constant 0 : index
    %c0_6 = arith.constant 0 : index
    %3 = vector.load %arg5[%c0_3, %c0_4, %c0_5, %c0_6] : memref<1x18x16x8xbf16, #tpu.memory_space<vmem>>, vector<1x1x16x8xbf16>
    %4 = vector.shape_cast %3 : vector<1x1x16x8xbf16> to vector<16x8xbf16>
    %5 = vector.extract_strided_slice %1 {offsets = [0, 389], sizes = [8, 11], strides = [1, 1]} : vector<8x400xbf16> to vector<8x11xbf16>
    %6 = vector.extract_strided_slice %1 {offsets = [0, 0], sizes = [8, 389], strides = [1, 1]} : vector<8x400xbf16> to vector<8x389xbf16>
    %7 = tpu.concatenate %5, %6 in 1 : vector<8x11xbf16>, vector<8x389xbf16> -> vector<8x400xbf16>
    %cst_7 = arith.constant dense<0.000000e+00> : vector<16x400xf32>
    %8 = tpu.matmul %4, %7, %cst_7 {dimension_numbers = #tpu.dot_dimension_numbers<[1], [0], [0], [1], [0, 0, 1, 1], [], []>} : vector<16x8xbf16>, vector<8x400xbf16>, vector<16x400xf32> -> vector<16x400xf32>
    %9 = arith.addf %2, %8 : vector<16x400xf32>
    %c0_8 = arith.constant 0 : index
    %c1 = arith.constant 1 : index
    %c0_9 = arith.constant 0 : index
    %c0_10 = arith.constant 0 : index
    %10 = vector.load %arg5[%c0_8, %c1, %c0_9, %c0_10] : memref<1x18x16x8xbf16, #tpu.memory_space<vmem>>, vector<1x1x16x8xbf16>
    %11 = vector.shape_cast %10 : vector<1x1x16x8xbf16> to vector<16x8xbf16>
    %12 = vector.extract_strided_slice %1 {offsets = [0, 390], sizes = [8, 10], strides = [1, 1]} : vector<8x400xbf16> to vector<8x10xbf16>
    %13 = vector.extract_strided_slice %1 {offsets = [0, 0], sizes = [8, 390], strides = [1, 1]} : vector<8x400xbf16> to vector<8x390xbf16>
    %14 = tpu.concatenate %12, %13 in 1 : vector<8x10xbf16>, vector<8x390xbf16> -> vector<8x400xbf16>
    %cst_11 = arith.constant dense<0.000000e+00> : vector<16x400xf32>
    %15 = tpu.matmul %11, %14, %cst_11 {dimension_numbers = #tpu.dot_dimension_numbers<[1], [0], [0], [1], [0, 0, 1, 1], [], []>} : vector<16x8xbf16>, vector<8x400xbf16>, vector<16x400xf32> -> vector<16x400xf32>
    %16 = arith.addf %9, %15 : vector<16x400xf32>
    %c0_12 = arith.constant 0 : index
    %c2 = arith.constant 2 : index
    %c0_13 = arith.constant 0 : index
    %c0_14 = arith.constant 0 : index
    %17 = vector.load %arg5[%c0_12, %c2, %c0_13, %c0_14] : memref<1x18x16x8xbf16, #tpu.memory_space<vmem>>, vector<1x1x16x8xbf16>
    %18 = vector.shape_cast %17 : vector<1x1x16x8xbf16> to vector<16x8xbf16>
    %19 = vector.extract_strided_slice %1 {offsets = [0, 391], sizes = [8, 9], strides = [1, 1]} : vector<8x400xbf16> to vector<8x9xbf16>
    %20 = vector.extract_strided_slice %1 {offsets = [0, 0], sizes = [8, 391], strides = [1, 1]} : vector<8x400xbf16> to vector<8x391xbf16>
    %21 = tpu.concatenate %19, %20 in 1 : vector<8x9xbf16>, vector<8x391xbf16> -> vector<8x400xbf16>
    %cst_15 = arith.constant dense<0.000000e+00> : vector<16x400xf32>
    %22 = tpu.matmul %18, %21, %cst_15 {dimension_numbers = #tpu.dot_dimension_numbers<[1], [0], [0], [1], [0, 0, 1, 1], [], []>} : vector<16x8xbf16>, vector<8x400xbf16>, vector<16x400xf32> -> vector<16x400xf32>
    %23 = arith.addf %16, %22 : vector<16x400xf32>
    %c0_16 = arith.constant 0 : index
    %c3 = arith.constant 3 : index
    %c0_17 = arith.constant 0 : index
    %c0_18 = arith.constant 0 : index
    %24 = vector.load %arg5[%c0_16, %c3, %c0_17, %c0_18] : memref<1x18x16x8xbf16, #tpu.memory_space<vmem>>, vector<1x1x16x8xbf16>
    %25 = vector.shape_cast %24 : vector<1x1x16x8xbf16> to vector<16x8xbf16>
    %26 = vector.extract_strided_slice %1 {offsets = [0, 399], sizes = [8, 1], strides = [1, 1]} : vector<8x400xbf16> to vector<8x1xbf16>
    %27 = vector.extract_strided_slice %1 {offsets = [0, 0], sizes = [8, 399], strides = [1, 1]} : vector<8x400xbf16> to vector<8x399xbf16>
    %28 = tpu.concatenate %26, %27 in 1 : vector<8x1xbf16>, vector<8x399xbf16> -> vector<8x400xbf16>
    %cst_19 = arith.constant dense<0.000000e+00> : vector<16x400xf32>
    %29 = tpu.matmul %25, %28, %cst_19 {dimension_numbers = #tpu.dot_dimension_numbers<[1], [0], [0], [1], [0, 0, 1, 1], [], []>} : vector<16x8xbf16>, vector<8x400xbf16>, vector<16x400xf32> -> vector<16x400xf32>
    %30 = arith.addf %23, %29 : vector<16x400xf32>
    %c0_20 = arith.constant 0 : index
    %c4 = arith.constant 4 : index
    %c0_21 = arith.constant 0 : index
    %c0_22 = arith.constant 0 : index
    %31 = vector.load %arg5[%c0_20, %c4, %c0_21, %c0_22] : memref<1x18x16x8xbf16, #tpu.memory_space<vmem>>, vector<1x1x16x8xbf16>
    %32 = vector.shape_cast %31 : vector<1x1x16x8xbf16> to vector<16x8xbf16>
    %cst_23 = arith.constant dense<0.000000e+00> : vector<16x400xf32>
    %33 = tpu.matmul %32, %1, %cst_23 {dimension_numbers = #tpu.dot_dimension_numbers<[1], [0], [0], [1], [0, 0, 1, 1], [], []>} : vector<16x8xbf16>, vector<8x400xbf16>, vector<16x400xf32> -> vector<16x400xf32>
    %34 = arith.addf %30, %33 : vector<16x400xf32>
    %c0_24 = arith.constant 0 : index
    %c5 = arith.constant 5 : index
    %c0_25 = arith.constant 0 : index
    %c0_26 = arith.constant 0 : index
    %35 = vector.load %arg5[%c0_24, %c5, %c0_25, %c0_26] : memref<1x18x16x8xbf16, #tpu.memory_space<vmem>>, vector<1x1x16x8xbf16>
    %36 = vector.shape_cast %35 : vector<1x1x16x8xbf16> to vector<16x8xbf16>
    %37 = vector.extract_strided_slice %1 {offsets = [0, 1], sizes = [8, 399], strides = [1, 1]} : vector<8x400xbf16> to vector<8x399xbf16>
    %38 = vector.extract_strided_slice %1 {offsets = [0, 0], sizes = [8, 1], strides = [1, 1]} : vector<8x400xbf16> to vector<8x1xbf16>
    %39 = tpu.concatenate %37, %38 in 1 : vector<8x399xbf16>, vector<8x1xbf16> -> vector<8x400xbf16>
    %cst_27 = arith.constant dense<0.000000e+00> : vector<16x400xf32>
    %40 = tpu.matmul %36, %39, %cst_27 {dimension_numbers = #tpu.dot_dimension_numbers<[1], [0], [0], [1], [0, 0, 1, 1], [], []>} : vector<16x8xbf16>, vector<8x400xbf16>, vector<16x400xf32> -> vector<16x400xf32>
    %41 = arith.addf %34, %40 : vector<16x400xf32>
    %c0_28 = arith.constant 0 : index
    %c6 = arith.constant 6 : index
    %c0_29 = arith.constant 0 : index
    %c0_30 = arith.constant 0 : index
    %42 = vector.load %arg5[%c0_28, %c6, %c0_29, %c0_30] : memref<1x18x16x8xbf16, #tpu.memory_space<vmem>>, vector<1x1x16x8xbf16>
    %43 = vector.shape_cast %42 : vector<1x1x16x8xbf16> to vector<16x8xbf16>
    %44 = vector.extract_strided_slice %1 {offsets = [0, 9], sizes = [8, 391], strides = [1, 1]} : vector<8x400xbf16> to vector<8x391xbf16>
    %45 = vector.extract_strided_slice %1 {offsets = [0, 0], sizes = [8, 9], strides = [1, 1]} : vector<8x400xbf16> to vector<8x9xbf16>
    %46 = tpu.concatenate %44, %45 in 1 : vector<8x391xbf16>, vector<8x9xbf16> -> vector<8x400xbf16>
    %cst_31 = arith.constant dense<0.000000e+00> : vector<16x400xf32>
    %47 = tpu.matmul %43, %46, %cst_31 {dimension_numbers = #tpu.dot_dimension_numbers<[1], [0], [0], [1], [0, 0, 1, 1], [], []>} : vector<16x8xbf16>, vector<8x400xbf16>, vector<16x400xf32> -> vector<16x400xf32>
    %48 = arith.addf %41, %47 : vector<16x400xf32>
    %c0_32 = arith.constant 0 : index
    %c7 = arith.constant 7 : index
    %c0_33 = arith.constant 0 : index
    %c0_34 = arith.constant 0 : index
    %49 = vector.load %arg5[%c0_32, %c7, %c0_33, %c0_34] : memref<1x18x16x8xbf16, #tpu.memory_space<vmem>>, vector<1x1x16x8xbf16>
    %50 = vector.shape_cast %49 : vector<1x1x16x8xbf16> to vector<16x8xbf16>
    %51 = vector.extract_strided_slice %1 {offsets = [0, 10], sizes = [8, 390], strides = [1, 1]} : vector<8x400xbf16> to vector<8x390xbf16>
    %52 = vector.extract_strided_slice %1 {offsets = [0, 0], sizes = [8, 10], strides = [1, 1]} : vector<8x400xbf16> to vector<8x10xbf16>
    %53 = tpu.concatenate %51, %52 in 1 : vector<8x390xbf16>, vector<8x10xbf16> -> vector<8x400xbf16>
    %cst_35 = arith.constant dense<0.000000e+00> : vector<16x400xf32>
    %54 = tpu.matmul %50, %53, %cst_35 {dimension_numbers = #tpu.dot_dimension_numbers<[1], [0], [0], [1], [0, 0, 1, 1], [], []>} : vector<16x8xbf16>, vector<8x400xbf16>, vector<16x400xf32> -> vector<16x400xf32>
    %55 = arith.addf %48, %54 : vector<16x400xf32>
    %c0_36 = arith.constant 0 : index
    %c8 = arith.constant 8 : index
    %c0_37 = arith.constant 0 : index
    %c0_38 = arith.constant 0 : index
    %56 = vector.load %arg5[%c0_36, %c8, %c0_37, %c0_38] : memref<1x18x16x8xbf16, #tpu.memory_space<vmem>>, vector<1x1x16x8xbf16>
    %57 = vector.shape_cast %56 : vector<1x1x16x8xbf16> to vector<16x8xbf16>
    %58 = vector.extract_strided_slice %1 {offsets = [0, 11], sizes = [8, 389], strides = [1, 1]} : vector<8x400xbf16> to vector<8x389xbf16>
    %59 = vector.extract_strided_slice %1 {offsets = [0, 0], sizes = [8, 11], strides = [1, 1]} : vector<8x400xbf16> to vector<8x11xbf16>
    %60 = tpu.concatenate %58, %59 in 1 : vector<8x389xbf16>, vector<8x11xbf16> -> vector<8x400xbf16>
    %cst_39 = arith.constant dense<0.000000e+00> : vector<16x400xf32>
    %61 = tpu.matmul %57, %60, %cst_39 {dimension_numbers = #tpu.dot_dimension_numbers<[1], [0], [0], [1], [0, 0, 1, 1], [], []>} : vector<16x8xbf16>, vector<8x400xbf16>, vector<16x400xf32> -> vector<16x400xf32>
    %62 = arith.addf %55, %61 : vector<16x400xf32>
    %c0_40 = arith.constant 0 : index
    %c9 = arith.constant 9 : index
    %c0_41 = arith.constant 0 : index
    %c0_42 = arith.constant 0 : index
    %63 = vector.load %arg5[%c0_40, %c9, %c0_41, %c0_42] : memref<1x18x16x8xbf16, #tpu.memory_space<vmem>>, vector<1x1x16x8xbf16>
    %64 = vector.shape_cast %63 : vector<1x1x16x8xbf16> to vector<16x8xbf16>
    %65 = vector.extract_strided_slice %1 {offsets = [0, 89], sizes = [8, 311], strides = [1, 1]} : vector<8x400xbf16> to vector<8x311xbf16>
    %66 = vector.extract_strided_slice %1 {offsets = [0, 0], sizes = [8, 89], strides = [1, 1]} : vector<8x400xbf16> to vector<8x89xbf16>
    %67 = tpu.concatenate %65, %66 in 1 : vector<8x311xbf16>, vector<8x89xbf16> -> vector<8x400xbf16>
    %cst_43 = arith.constant dense<0.000000e+00> : vector<16x400xf32>
    %68 = tpu.matmul %64, %67, %cst_43 {dimension_numbers = #tpu.dot_dimension_numbers<[1], [0], [0], [1], [0, 0, 1, 1], [], []>} : vector<16x8xbf16>, vector<8x400xbf16>, vector<16x400xf32> -> vector<16x400xf32>
    %69 = arith.addf %62, %68 : vector<16x400xf32>
    %c0_44 = arith.constant 0 : index
    %c10 = arith.constant 10 : index
    %c0_45 = arith.constant 0 : index
    %c0_46 = arith.constant 0 : index
    %70 = vector.load %arg5[%c0_44, %c10, %c0_45, %c0_46] : memref<1x18x16x8xbf16, #tpu.memory_space<vmem>>, vector<1x1x16x8xbf16>
    %71 = vector.shape_cast %70 : vector<1x1x16x8xbf16> to vector<16x8xbf16>
    %72 = vector.extract_strided_slice %1 {offsets = [0, 90], sizes = [8, 310], strides = [1, 1]} : vector<8x400xbf16> to vector<8x310xbf16>
    %73 = vector.extract_strided_slice %1 {offsets = [0, 0], sizes = [8, 90], strides = [1, 1]} : vector<8x400xbf16> to vector<8x90xbf16>
    %74 = tpu.concatenate %72, %73 in 1 : vector<8x310xbf16>, vector<8x90xbf16> -> vector<8x400xbf16>
    %cst_47 = arith.constant dense<0.000000e+00> : vector<16x400xf32>
    %75 = tpu.matmul %71, %74, %cst_47 {dimension_numbers = #tpu.dot_dimension_numbers<[1], [0], [0], [1], [0, 0, 1, 1], [], []>} : vector<16x8xbf16>, vector<8x400xbf16>, vector<16x400xf32> -> vector<16x400xf32>
    %76 = arith.addf %69, %75 : vector<16x400xf32>
    %c0_48 = arith.constant 0 : index
    %c11 = arith.constant 11 : index
    %c0_49 = arith.constant 0 : index
    %c0_50 = arith.constant 0 : index
    %77 = vector.load %arg5[%c0_48, %c11, %c0_49, %c0_50] : memref<1x18x16x8xbf16, #tpu.memory_space<vmem>>, vector<1x1x16x8xbf16>
    %78 = vector.shape_cast %77 : vector<1x1x16x8xbf16> to vector<16x8xbf16>
    %79 = vector.extract_strided_slice %1 {offsets = [0, 91], sizes = [8, 309], strides = [1, 1]} : vector<8x400xbf16> to vector<8x309xbf16>
    %80 = vector.extract_strided_slice %1 {offsets = [0, 0], sizes = [8, 91], strides = [1, 1]} : vector<8x400xbf16> to vector<8x91xbf16>
    %81 = tpu.concatenate %79, %80 in 1 : vector<8x309xbf16>, vector<8x91xbf16> -> vector<8x400xbf16>
    %cst_51 = arith.constant dense<0.000000e+00> : vector<16x400xf32>
    %82 = tpu.matmul %78, %81, %cst_51 {dimension_numbers = #tpu.dot_dimension_numbers<[1], [0], [0], [1], [0, 0, 1, 1], [], []>} : vector<16x8xbf16>, vector<8x400xbf16>, vector<16x400xf32> -> vector<16x400xf32>
    %83 = arith.addf %76, %82 : vector<16x400xf32>
    %c0_52 = arith.constant 0 : index
    %c12 = arith.constant 12 : index
    %c0_53 = arith.constant 0 : index
    %c0_54 = arith.constant 0 : index
    %84 = vector.load %arg5[%c0_52, %c12, %c0_53, %c0_54] : memref<1x18x16x8xbf16, #tpu.memory_space<vmem>>, vector<1x1x16x8xbf16>
    %85 = vector.shape_cast %84 : vector<1x1x16x8xbf16> to vector<16x8xbf16>
    %86 = vector.extract_strided_slice %1 {offsets = [0, 99], sizes = [8, 301], strides = [1, 1]} : vector<8x400xbf16> to vector<8x301xbf16>
    %87 = vector.extract_strided_slice %1 {offsets = [0, 0], sizes = [8, 99], strides = [1, 1]} : vector<8x400xbf16> to vector<8x99xbf16>
    %88 = tpu.concatenate %86, %87 in 1 : vector<8x301xbf16>, vector<8x99xbf16> -> vector<8x400xbf16>
    %cst_55 = arith.constant dense<0.000000e+00> : vector<16x400xf32>
    %89 = tpu.matmul %85, %88, %cst_55 {dimension_numbers = #tpu.dot_dimension_numbers<[1], [0], [0], [1], [0, 0, 1, 1], [], []>} : vector<16x8xbf16>, vector<8x400xbf16>, vector<16x400xf32> -> vector<16x400xf32>
    %90 = arith.addf %83, %89 : vector<16x400xf32>
    %c0_56 = arith.constant 0 : index
    %c13 = arith.constant 13 : index
    %c0_57 = arith.constant 0 : index
    %c0_58 = arith.constant 0 : index
    %91 = vector.load %arg5[%c0_56, %c13, %c0_57, %c0_58] : memref<1x18x16x8xbf16, #tpu.memory_space<vmem>>, vector<1x1x16x8xbf16>
    %92 = vector.shape_cast %91 : vector<1x1x16x8xbf16> to vector<16x8xbf16>
    %93 = vector.extract_strided_slice %1 {offsets = [0, 100], sizes = [8, 300], strides = [1, 1]} : vector<8x400xbf16> to vector<8x300xbf16>
    %94 = vector.extract_strided_slice %1 {offsets = [0, 0], sizes = [8, 100], strides = [1, 1]} : vector<8x400xbf16> to vector<8x100xbf16>
    %95 = tpu.concatenate %93, %94 in 1 : vector<8x300xbf16>, vector<8x100xbf16> -> vector<8x400xbf16>
    %cst_59 = arith.constant dense<0.000000e+00> : vector<16x400xf32>
    %96 = tpu.matmul %92, %95, %cst_59 {dimension_numbers = #tpu.dot_dimension_numbers<[1], [0], [0], [1], [0, 0, 1, 1], [], []>} : vector<16x8xbf16>, vector<8x400xbf16>, vector<16x400xf32> -> vector<16x400xf32>
    %97 = arith.addf %90, %96 : vector<16x400xf32>
    %c0_60 = arith.constant 0 : index
    %c14 = arith.constant 14 : index
    %c0_61 = arith.constant 0 : index
    %c0_62 = arith.constant 0 : index
    %98 = vector.load %arg5[%c0_60, %c14, %c0_61, %c0_62] : memref<1x18x16x8xbf16, #tpu.memory_space<vmem>>, vector<1x1x16x8xbf16>
    %99 = vector.shape_cast %98 : vector<1x1x16x8xbf16> to vector<16x8xbf16>
    %100 = vector.extract_strided_slice %1 {offsets = [0, 101], sizes = [8, 299], strides = [1, 1]} : vector<8x400xbf16> to vector<8x299xbf16>
    %101 = vector.extract_strided_slice %1 {offsets = [0, 0], sizes = [8, 101], strides = [1, 1]} : vector<8x400xbf16> to vector<8x101xbf16>
    %102 = tpu.concatenate %100, %101 in 1 : vector<8x299xbf16>, vector<8x101xbf16> -> vector<8x400xbf16>
    %cst_63 = arith.constant dense<0.000000e+00> : vector<16x400xf32>
    %103 = tpu.matmul %99, %102, %cst_63 {dimension_numbers = #tpu.dot_dimension_numbers<[1], [0], [0], [1], [0, 0, 1, 1], [], []>} : vector<16x8xbf16>, vector<8x400xbf16>, vector<16x400xf32> -> vector<16x400xf32>
    %104 = arith.addf %97, %103 : vector<16x400xf32>
    %c0_64 = arith.constant 0 : index
    %c15 = arith.constant 15 : index
    %c0_65 = arith.constant 0 : index
    %c0_66 = arith.constant 0 : index
    %105 = vector.load %arg5[%c0_64, %c15, %c0_65, %c0_66] : memref<1x18x16x8xbf16, #tpu.memory_space<vmem>>, vector<1x1x16x8xbf16>
    %106 = vector.shape_cast %105 : vector<1x1x16x8xbf16> to vector<16x8xbf16>
    %107 = vector.extract_strided_slice %1 {offsets = [0, 109], sizes = [8, 291], strides = [1, 1]} : vector<8x400xbf16> to vector<8x291xbf16>
    %108 = vector.extract_strided_slice %1 {offsets = [0, 0], sizes = [8, 109], strides = [1, 1]} : vector<8x400xbf16> to vector<8x109xbf16>
    %109 = tpu.concatenate %107, %108 in 1 : vector<8x291xbf16>, vector<8x109xbf16> -> vector<8x400xbf16>
    %cst_67 = arith.constant dense<0.000000e+00> : vector<16x400xf32>
    %110 = tpu.matmul %106, %109, %cst_67 {dimension_numbers = #tpu.dot_dimension_numbers<[1], [0], [0], [1], [0, 0, 1, 1], [], []>} : vector<16x8xbf16>, vector<8x400xbf16>, vector<16x400xf32> -> vector<16x400xf32>
    %111 = arith.addf %104, %110 : vector<16x400xf32>
    %c0_68 = arith.constant 0 : index
    %c16 = arith.constant 16 : index
    %c0_69 = arith.constant 0 : index
    %c0_70 = arith.constant 0 : index
    %112 = vector.load %arg5[%c0_68, %c16, %c0_69, %c0_70] : memref<1x18x16x8xbf16, #tpu.memory_space<vmem>>, vector<1x1x16x8xbf16>
    %113 = vector.shape_cast %112 : vector<1x1x16x8xbf16> to vector<16x8xbf16>
    %114 = vector.extract_strided_slice %1 {offsets = [0, 110], sizes = [8, 290], strides = [1, 1]} : vector<8x400xbf16> to vector<8x290xbf16>
    %115 = vector.extract_strided_slice %1 {offsets = [0, 0], sizes = [8, 110], strides = [1, 1]} : vector<8x400xbf16> to vector<8x110xbf16>
    %116 = tpu.concatenate %114, %115 in 1 : vector<8x290xbf16>, vector<8x110xbf16> -> vector<8x400xbf16>
    %cst_71 = arith.constant dense<0.000000e+00> : vector<16x400xf32>
    %117 = tpu.matmul %113, %116, %cst_71 {dimension_numbers = #tpu.dot_dimension_numbers<[1], [0], [0], [1], [0, 0, 1, 1], [], []>} : vector<16x8xbf16>, vector<8x400xbf16>, vector<16x400xf32> -> vector<16x400xf32>
    %118 = arith.addf %111, %117 : vector<16x400xf32>
    %c0_72 = arith.constant 0 : index
    %c17 = arith.constant 17 : index
    %c0_73 = arith.constant 0 : index
    %c0_74 = arith.constant 0 : index
    %119 = vector.load %arg5[%c0_72, %c17, %c0_73, %c0_74] : memref<1x18x16x8xbf16, #tpu.memory_space<vmem>>, vector<1x1x16x8xbf16>
    %120 = vector.shape_cast %119 : vector<1x1x16x8xbf16> to vector<16x8xbf16>
    %121 = vector.extract_strided_slice %1 {offsets = [0, 111], sizes = [8, 289], strides = [1, 1]} : vector<8x400xbf16> to vector<8x289xbf16>
    %122 = vector.extract_strided_slice %1 {offsets = [0, 0], sizes = [8, 111], strides = [1, 1]} : vector<8x400xbf16> to vector<8x111xbf16>
    %123 = tpu.concatenate %121, %122 in 1 : vector<8x289xbf16>, vector<8x111xbf16> -> vector<8x400xbf16>
    %cst_75 = arith.constant dense<0.000000e+00> : vector<16x400xf32>
    %124 = tpu.matmul %120, %123, %cst_75 {dimension_numbers = #tpu.dot_dimension_numbers<[1], [0], [0], [1], [0, 0, 1, 1], [], []>} : vector<16x8xbf16>, vector<8x400xbf16>, vector<16x400xf32> -> vector<16x400xf32>
    %125 = arith.addf %118, %124 : vector<16x400xf32>
    %c0_76 = arith.constant 0 : index
    %c0_77 = arith.constant 0 : index
    %126 = vector.load %arg4[%c0_76, %c0_77] : memref<1x400xf32, #tpu.memory_space<vmem>>, vector<1x400xf32>
    %127 = arith.negf %125 : vector<16x400xf32>
    %128 = math.exp %127 : vector<16x400xf32>
    %cst_78 = arith.constant 1.000000e+00 : f32
    %129 = vector.broadcast %cst_78 : f32 to vector<16x400xf32>
    %130 = arith.addf %129, %128 : vector<16x400xf32>
    %131 = arith.divf %129, %130 : vector<16x400xf32>
    %132 = arith.mulf %125, %131 : vector<16x400xf32>
    %cst_79 = arith.constant 1.67785239 : f32
    %133 = vector.broadcast %cst_79 : f32 to vector<16x400xf32>
    %134 = arith.mulf %132, %133 : vector<16x400xf32>
    %135 = vector.broadcast %126 : vector<1x400xf32> to vector<16x400xf32>
    %136 = arith.mulf %135, %134 : vector<16x400xf32>
    %137 = arith.truncf %136 : vector<16x400xf32> to vector<16x400xbf16>
    %cst_80 = arith.constant 0.000000e+00 : f32
    %138 = vector.broadcast %cst_80 : f32 to vector<8x400xf32>
    %c0_81 = arith.constant 0 : index
    %c0_82 = arith.constant 0 : index
    %c0_83 = arith.constant 0 : index
    %139 = vector.load %arg6[%c0_81, %c0_82, %c0_83] : memref<18x8x16xbf16, #tpu.memory_space<vmem>>, vector<1x8x16xbf16>
    %140 = vector.shape_cast %139 : vector<1x8x16xbf16> to vector<8x16xbf16>
    %141 = vector.extract_strided_slice %137 {offsets = [0, 389], sizes = [16, 11], strides = [1, 1]} : vector<16x400xbf16> to vector<16x11xbf16>
    %142 = vector.extract_strided_slice %137 {offsets = [0, 0], sizes = [16, 389], strides = [1, 1]} : vector<16x400xbf16> to vector<16x389xbf16>
    %143 = tpu.concatenate %141, %142 in 1 : vector<16x11xbf16>, vector<16x389xbf16> -> vector<16x400xbf16>
    %cst_84 = arith.constant dense<0.000000e+00> : vector<8x400xf32>
    %144 = tpu.matmul %140, %143, %cst_84 {dimension_numbers = #tpu.dot_dimension_numbers<[1], [0], [0], [1], [0, 0, 1, 1], [], []>} : vector<8x16xbf16>, vector<16x400xbf16>, vector<8x400xf32> -> vector<8x400xf32>
    %145 = arith.addf %138, %144 : vector<8x400xf32>
    %c1_85 = arith.constant 1 : index
    %c0_86 = arith.constant 0 : index
    %c0_87 = arith.constant 0 : index
    %146 = vector.load %arg6[%c1_85, %c0_86, %c0_87] : memref<18x8x16xbf16, #tpu.memory_space<vmem>>, vector<1x8x16xbf16>
    %147 = vector.shape_cast %146 : vector<1x8x16xbf16> to vector<8x16xbf16>
    %148 = vector.extract_strided_slice %137 {offsets = [0, 390], sizes = [16, 10], strides = [1, 1]} : vector<16x400xbf16> to vector<16x10xbf16>
    %149 = vector.extract_strided_slice %137 {offsets = [0, 0], sizes = [16, 390], strides = [1, 1]} : vector<16x400xbf16> to vector<16x390xbf16>
    %150 = tpu.concatenate %148, %149 in 1 : vector<16x10xbf16>, vector<16x390xbf16> -> vector<16x400xbf16>
    %cst_88 = arith.constant dense<0.000000e+00> : vector<8x400xf32>
    %151 = tpu.matmul %147, %150, %cst_88 {dimension_numbers = #tpu.dot_dimension_numbers<[1], [0], [0], [1], [0, 0, 1, 1], [], []>} : vector<8x16xbf16>, vector<16x400xbf16>, vector<8x400xf32> -> vector<8x400xf32>
    %152 = arith.addf %145, %151 : vector<8x400xf32>
    %c2_89 = arith.constant 2 : index
    %c0_90 = arith.constant 0 : index
    %c0_91 = arith.constant 0 : index
    %153 = vector.load %arg6[%c2_89, %c0_90, %c0_91] : memref<18x8x16xbf16, #tpu.memory_space<vmem>>, vector<1x8x16xbf16>
    %154 = vector.shape_cast %153 : vector<1x8x16xbf16> to vector<8x16xbf16>
    %155 = vector.extract_strided_slice %137 {offsets = [0, 391], sizes = [16, 9], strides = [1, 1]} : vector<16x400xbf16> to vector<16x9xbf16>
    %156 = vector.extract_strided_slice %137 {offsets = [0, 0], sizes = [16, 391], strides = [1, 1]} : vector<16x400xbf16> to vector<16x391xbf16>
    %157 = tpu.concatenate %155, %156 in 1 : vector<16x9xbf16>, vector<16x391xbf16> -> vector<16x400xbf16>
    %cst_92 = arith.constant dense<0.000000e+00> : vector<8x400xf32>
    %158 = tpu.matmul %154, %157, %cst_92 {dimension_numbers = #tpu.dot_dimension_numbers<[1], [0], [0], [1], [0, 0, 1, 1], [], []>} : vector<8x16xbf16>, vector<16x400xbf16>, vector<8x400xf32> -> vector<8x400xf32>
    %159 = arith.addf %152, %158 : vector<8x400xf32>
    %c3_93 = arith.constant 3 : index
    %c0_94 = arith.constant 0 : index
    %c0_95 = arith.constant 0 : index
    %160 = vector.load %arg6[%c3_93, %c0_94, %c0_95] : memref<18x8x16xbf16, #tpu.memory_space<vmem>>, vector<1x8x16xbf16>
    %161 = vector.shape_cast %160 : vector<1x8x16xbf16> to vector<8x16xbf16>
    %162 = vector.extract_strided_slice %137 {offsets = [0, 399], sizes = [16, 1], strides = [1, 1]} : vector<16x400xbf16> to vector<16x1xbf16>
    %163 = vector.extract_strided_slice %137 {offsets = [0, 0], sizes = [16, 399], strides = [1, 1]} : vector<16x400xbf16> to vector<16x399xbf16>
    %164 = tpu.concatenate %162, %163 in 1 : vector<16x1xbf16>, vector<16x399xbf16> -> vector<16x400xbf16>
    %cst_96 = arith.constant dense<0.000000e+00> : vector<8x400xf32>
    %165 = tpu.matmul %161, %164, %cst_96 {dimension_numbers = #tpu.dot_dimension_numbers<[1], [0], [0], [1], [0, 0, 1, 1], [], []>} : vector<8x16xbf16>, vector<16x400xbf16>, vector<8x400xf32> -> vector<8x400xf32>
    %166 = arith.addf %159, %165 : vector<8x400xf32>
    %c4_97 = arith.constant 4 : index
    %c0_98 = arith.constant 0 : index
    %c0_99 = arith.constant 0 : index
    %167 = vector.load %arg6[%c4_97, %c0_98, %c0_99] : memref<18x8x16xbf16, #tpu.memory_space<vmem>>, vector<1x8x16xbf16>
    %168 = vector.shape_cast %167 : vector<1x8x16xbf16> to vector<8x16xbf16>
    %cst_100 = arith.constant dense<0.000000e+00> : vector<8x400xf32>
    %169 = tpu.matmul %168, %137, %cst_100 {dimension_numbers = #tpu.dot_dimension_numbers<[1], [0], [0], [1], [0, 0, 1, 1], [], []>} : vector<8x16xbf16>, vector<16x400xbf16>, vector<8x400xf32> -> vector<8x400xf32>
    %170 = arith.addf %166, %169 : vector<8x400xf32>
    %c5_101 = arith.constant 5 : index
    %c0_102 = arith.constant 0 : index
    %c0_103 = arith.constant 0 : index
    %171 = vector.load %arg6[%c5_101, %c0_102, %c0_103] : memref<18x8x16xbf16, #tpu.memory_space<vmem>>, vector<1x8x16xbf16>
    %172 = vector.shape_cast %171 : vector<1x8x16xbf16> to vector<8x16xbf16>
    %173 = vector.extract_strided_slice %137 {offsets = [0, 1], sizes = [16, 399], strides = [1, 1]} : vector<16x400xbf16> to vector<16x399xbf16>
    %174 = vector.extract_strided_slice %137 {offsets = [0, 0], sizes = [16, 1], strides = [1, 1]} : vector<16x400xbf16> to vector<16x1xbf16>
    %175 = tpu.concatenate %173, %174 in 1 : vector<16x399xbf16>, vector<16x1xbf16> -> vector<16x400xbf16>
    %cst_104 = arith.constant dense<0.000000e+00> : vector<8x400xf32>
    %176 = tpu.matmul %172, %175, %cst_104 {dimension_numbers = #tpu.dot_dimension_numbers<[1], [0], [0], [1], [0, 0, 1, 1], [], []>} : vector<8x16xbf16>, vector<16x400xbf16>, vector<8x400xf32> -> vector<8x400xf32>
    %177 = arith.addf %170, %176 : vector<8x400xf32>
    %c6_105 = arith.constant 6 : index
    %c0_106 = arith.constant 0 : index
    %c0_107 = arith.constant 0 : index
    %178 = vector.load %arg6[%c6_105, %c0_106, %c0_107] : memref<18x8x16xbf16, #tpu.memory_space<vmem>>, vector<1x8x16xbf16>
    %179 = vector.shape_cast %178 : vector<1x8x16xbf16> to vector<8x16xbf16>
    %180 = vector.extract_strided_slice %137 {offsets = [0, 9], sizes = [16, 391], strides = [1, 1]} : vector<16x400xbf16> to vector<16x391xbf16>
    %181 = vector.extract_strided_slice %137 {offsets = [0, 0], sizes = [16, 9], strides = [1, 1]} : vector<16x400xbf16> to vector<16x9xbf16>
    %182 = tpu.concatenate %180, %181 in 1 : vector<16x391xbf16>, vector<16x9xbf16> -> vector<16x400xbf16>
    %cst_108 = arith.constant dense<0.000000e+00> : vector<8x400xf32>
    %183 = tpu.matmul %179, %182, %cst_108 {dimension_numbers = #tpu.dot_dimension_numbers<[1], [0], [0], [1], [0, 0, 1, 1], [], []>} : vector<8x16xbf16>, vector<16x400xbf16>, vector<8x400xf32> -> vector<8x400xf32>
    %184 = arith.addf %177, %183 : vector<8x400xf32>
    %c7_109 = arith.constant 7 : index
    %c0_110 = arith.constant 0 : index
    %c0_111 = arith.constant 0 : index
    %185 = vector.load %arg6[%c7_109, %c0_110, %c0_111] : memref<18x8x16xbf16, #tpu.memory_space<vmem>>, vector<1x8x16xbf16>
    %186 = vector.shape_cast %185 : vector<1x8x16xbf16> to vector<8x16xbf16>
    %187 = vector.extract_strided_slice %137 {offsets = [0, 10], sizes = [16, 390], strides = [1, 1]} : vector<16x400xbf16> to vector<16x390xbf16>
    %188 = vector.extract_strided_slice %137 {offsets = [0, 0], sizes = [16, 10], strides = [1, 1]} : vector<16x400xbf16> to vector<16x10xbf16>
    %189 = tpu.concatenate %187, %188 in 1 : vector<16x390xbf16>, vector<16x10xbf16> -> vector<16x400xbf16>
    %cst_112 = arith.constant dense<0.000000e+00> : vector<8x400xf32>
    %190 = tpu.matmul %186, %189, %cst_112 {dimension_numbers = #tpu.dot_dimension_numbers<[1], [0], [0], [1], [0, 0, 1, 1], [], []>} : vector<8x16xbf16>, vector<16x400xbf16>, vector<8x400xf32> -> vector<8x400xf32>
    %191 = arith.addf %184, %190 : vector<8x400xf32>
    %c8_113 = arith.constant 8 : index
    %c0_114 = arith.constant 0 : index
    %c0_115 = arith.constant 0 : index
    %192 = vector.load %arg6[%c8_113, %c0_114, %c0_115] : memref<18x8x16xbf16, #tpu.memory_space<vmem>>, vector<1x8x16xbf16>
    %193 = vector.shape_cast %192 : vector<1x8x16xbf16> to vector<8x16xbf16>
    %194 = vector.extract_strided_slice %137 {offsets = [0, 11], sizes = [16, 389], strides = [1, 1]} : vector<16x400xbf16> to vector<16x389xbf16>
    %195 = vector.extract_strided_slice %137 {offsets = [0, 0], sizes = [16, 11], strides = [1, 1]} : vector<16x400xbf16> to vector<16x11xbf16>
    %196 = tpu.concatenate %194, %195 in 1 : vector<16x389xbf16>, vector<16x11xbf16> -> vector<16x400xbf16>
    %cst_116 = arith.constant dense<0.000000e+00> : vector<8x400xf32>
    %197 = tpu.matmul %193, %196, %cst_116 {dimension_numbers = #tpu.dot_dimension_numbers<[1], [0], [0], [1], [0, 0, 1, 1], [], []>} : vector<8x16xbf16>, vector<16x400xbf16>, vector<8x400xf32> -> vector<8x400xf32>
    %198 = arith.addf %191, %197 : vector<8x400xf32>
    %c9_117 = arith.constant 9 : index
    %c0_118 = arith.constant 0 : index
    %c0_119 = arith.constant 0 : index
    %199 = vector.load %arg6[%c9_117, %c0_118, %c0_119] : memref<18x8x16xbf16, #tpu.memory_space<vmem>>, vector<1x8x16xbf16>
    %200 = vector.shape_cast %199 : vector<1x8x16xbf16> to vector<8x16xbf16>
    %201 = vector.extract_strided_slice %137 {offsets = [0, 89], sizes = [16, 311], strides = [1, 1]} : vector<16x400xbf16> to vector<16x311xbf16>
    %202 = vector.extract_strided_slice %137 {offsets = [0, 0], sizes = [16, 89], strides = [1, 1]} : vector<16x400xbf16> to vector<16x89xbf16>
    %203 = tpu.concatenate %201, %202 in 1 : vector<16x311xbf16>, vector<16x89xbf16> -> vector<16x400xbf16>
    %cst_120 = arith.constant dense<0.000000e+00> : vector<8x400xf32>
    %204 = tpu.matmul %200, %203, %cst_120 {dimension_numbers = #tpu.dot_dimension_numbers<[1], [0], [0], [1], [0, 0, 1, 1], [], []>} : vector<8x16xbf16>, vector<16x400xbf16>, vector<8x400xf32> -> vector<8x400xf32>
    %205 = arith.addf %198, %204 : vector<8x400xf32>
    %c10_121 = arith.constant 10 : index
    %c0_122 = arith.constant 0 : index
    %c0_123 = arith.constant 0 : index
    %206 = vector.load %arg6[%c10_121, %c0_122, %c0_123] : memref<18x8x16xbf16, #tpu.memory_space<vmem>>, vector<1x8x16xbf16>
    %207 = vector.shape_cast %206 : vector<1x8x16xbf16> to vector<8x16xbf16>
    %208 = vector.extract_strided_slice %137 {offsets = [0, 90], sizes = [16, 310], strides = [1, 1]} : vector<16x400xbf16> to vector<16x310xbf16>
    %209 = vector.extract_strided_slice %137 {offsets = [0, 0], sizes = [16, 90], strides = [1, 1]} : vector<16x400xbf16> to vector<16x90xbf16>
    %210 = tpu.concatenate %208, %209 in 1 : vector<16x310xbf16>, vector<16x90xbf16> -> vector<16x400xbf16>
    %cst_124 = arith.constant dense<0.000000e+00> : vector<8x400xf32>
    %211 = tpu.matmul %207, %210, %cst_124 {dimension_numbers = #tpu.dot_dimension_numbers<[1], [0], [0], [1], [0, 0, 1, 1], [], []>} : vector<8x16xbf16>, vector<16x400xbf16>, vector<8x400xf32> -> vector<8x400xf32>
    %212 = arith.addf %205, %211 : vector<8x400xf32>
    %c11_125 = arith.constant 11 : index
    %c0_126 = arith.constant 0 : index
    %c0_127 = arith.constant 0 : index
    %213 = vector.load %arg6[%c11_125, %c0_126, %c0_127] : memref<18x8x16xbf16, #tpu.memory_space<vmem>>, vector<1x8x16xbf16>
    %214 = vector.shape_cast %213 : vector<1x8x16xbf16> to vector<8x16xbf16>
    %215 = vector.extract_strided_slice %137 {offsets = [0, 91], sizes = [16, 309], strides = [1, 1]} : vector<16x400xbf16> to vector<16x309xbf16>
    %216 = vector.extract_strided_slice %137 {offsets = [0, 0], sizes = [16, 91], strides = [1, 1]} : vector<16x400xbf16> to vector<16x91xbf16>
    %217 = tpu.concatenate %215, %216 in 1 : vector<16x309xbf16>, vector<16x91xbf16> -> vector<16x400xbf16>
    %cst_128 = arith.constant dense<0.000000e+00> : vector<8x400xf32>
    %218 = tpu.matmul %214, %217, %cst_128 {dimension_numbers = #tpu.dot_dimension_numbers<[1], [0], [0], [1], [0, 0, 1, 1], [], []>} : vector<8x16xbf16>, vector<16x400xbf16>, vector<8x400xf32> -> vector<8x400xf32>
    %219 = arith.addf %212, %218 : vector<8x400xf32>
    %c12_129 = arith.constant 12 : index
    %c0_130 = arith.constant 0 : index
    %c0_131 = arith.constant 0 : index
    %220 = vector.load %arg6[%c12_129, %c0_130, %c0_131] : memref<18x8x16xbf16, #tpu.memory_space<vmem>>, vector<1x8x16xbf16>
    %221 = vector.shape_cast %220 : vector<1x8x16xbf16> to vector<8x16xbf16>
    %222 = vector.extract_strided_slice %137 {offsets = [0, 99], sizes = [16, 301], strides = [1, 1]} : vector<16x400xbf16> to vector<16x301xbf16>
    %223 = vector.extract_strided_slice %137 {offsets = [0, 0], sizes = [16, 99], strides = [1, 1]} : vector<16x400xbf16> to vector<16x99xbf16>
    %224 = tpu.concatenate %222, %223 in 1 : vector<16x301xbf16>, vector<16x99xbf16> -> vector<16x400xbf16>
    %cst_132 = arith.constant dense<0.000000e+00> : vector<8x400xf32>
    %225 = tpu.matmul %221, %224, %cst_132 {dimension_numbers = #tpu.dot_dimension_numbers<[1], [0], [0], [1], [0, 0, 1, 1], [], []>} : vector<8x16xbf16>, vector<16x400xbf16>, vector<8x400xf32> -> vector<8x400xf32>
    %226 = arith.addf %219, %225 : vector<8x400xf32>
    %c13_133 = arith.constant 13 : index
    %c0_134 = arith.constant 0 : index
    %c0_135 = arith.constant 0 : index
    %227 = vector.load %arg6[%c13_133, %c0_134, %c0_135] : memref<18x8x16xbf16, #tpu.memory_space<vmem>>, vector<1x8x16xbf16>
    %228 = vector.shape_cast %227 : vector<1x8x16xbf16> to vector<8x16xbf16>
    %229 = vector.extract_strided_slice %137 {offsets = [0, 100], sizes = [16, 300], strides = [1, 1]} : vector<16x400xbf16> to vector<16x300xbf16>
    %230 = vector.extract_strided_slice %137 {offsets = [0, 0], sizes = [16, 100], strides = [1, 1]} : vector<16x400xbf16> to vector<16x100xbf16>
    %231 = tpu.concatenate %229, %230 in 1 : vector<16x300xbf16>, vector<16x100xbf16> -> vector<16x400xbf16>
    %cst_136 = arith.constant dense<0.000000e+00> : vector<8x400xf32>
    %232 = tpu.matmul %228, %231, %cst_136 {dimension_numbers = #tpu.dot_dimension_numbers<[1], [0], [0], [1], [0, 0, 1, 1], [], []>} : vector<8x16xbf16>, vector<16x400xbf16>, vector<8x400xf32> -> vector<8x400xf32>
    %233 = arith.addf %226, %232 : vector<8x400xf32>
    %c14_137 = arith.constant 14 : index
    %c0_138 = arith.constant 0 : index
    %c0_139 = arith.constant 0 : index
    %234 = vector.load %arg6[%c14_137, %c0_138, %c0_139] : memref<18x8x16xbf16, #tpu.memory_space<vmem>>, vector<1x8x16xbf16>
    %235 = vector.shape_cast %234 : vector<1x8x16xbf16> to vector<8x16xbf16>
    %236 = vector.extract_strided_slice %137 {offsets = [0, 101], sizes = [16, 299], strides = [1, 1]} : vector<16x400xbf16> to vector<16x299xbf16>
    %237 = vector.extract_strided_slice %137 {offsets = [0, 0], sizes = [16, 101], strides = [1, 1]} : vector<16x400xbf16> to vector<16x101xbf16>
    %238 = tpu.concatenate %236, %237 in 1 : vector<16x299xbf16>, vector<16x101xbf16> -> vector<16x400xbf16>
    %cst_140 = arith.constant dense<0.000000e+00> : vector<8x400xf32>
    %239 = tpu.matmul %235, %238, %cst_140 {dimension_numbers = #tpu.dot_dimension_numbers<[1], [0], [0], [1], [0, 0, 1, 1], [], []>} : vector<8x16xbf16>, vector<16x400xbf16>, vector<8x400xf32> -> vector<8x400xf32>
    %240 = arith.addf %233, %239 : vector<8x400xf32>
    %c15_141 = arith.constant 15 : index
    %c0_142 = arith.constant 0 : index
    %c0_143 = arith.constant 0 : index
    %241 = vector.load %arg6[%c15_141, %c0_142, %c0_143] : memref<18x8x16xbf16, #tpu.memory_space<vmem>>, vector<1x8x16xbf16>
    %242 = vector.shape_cast %241 : vector<1x8x16xbf16> to vector<8x16xbf16>
    %243 = vector.extract_strided_slice %137 {offsets = [0, 109], sizes = [16, 291], strides = [1, 1]} : vector<16x400xbf16> to vector<16x291xbf16>
    %244 = vector.extract_strided_slice %137 {offsets = [0, 0], sizes = [16, 109], strides = [1, 1]} : vector<16x400xbf16> to vector<16x109xbf16>
    %245 = tpu.concatenate %243, %244 in 1 : vector<16x291xbf16>, vector<16x109xbf16> -> vector<16x400xbf16>
    %cst_144 = arith.constant dense<0.000000e+00> : vector<8x400xf32>
    %246 = tpu.matmul %242, %245, %cst_144 {dimension_numbers = #tpu.dot_dimension_numbers<[1], [0], [0], [1], [0, 0, 1, 1], [], []>} : vector<8x16xbf16>, vector<16x400xbf16>, vector<8x400xf32> -> vector<8x400xf32>
    %247 = arith.addf %240, %246 : vector<8x400xf32>
    %c16_145 = arith.constant 16 : index
    %c0_146 = arith.constant 0 : index
    %c0_147 = arith.constant 0 : index
    %248 = vector.load %arg6[%c16_145, %c0_146, %c0_147] : memref<18x8x16xbf16, #tpu.memory_space<vmem>>, vector<1x8x16xbf16>
    %249 = vector.shape_cast %248 : vector<1x8x16xbf16> to vector<8x16xbf16>
    %250 = vector.extract_strided_slice %137 {offsets = [0, 110], sizes = [16, 290], strides = [1, 1]} : vector<16x400xbf16> to vector<16x290xbf16>
    %251 = vector.extract_strided_slice %137 {offsets = [0, 0], sizes = [16, 110], strides = [1, 1]} : vector<16x400xbf16> to vector<16x110xbf16>
    %252 = tpu.concatenate %250, %251 in 1 : vector<16x290xbf16>, vector<16x110xbf16> -> vector<16x400xbf16>
    %cst_148 = arith.constant dense<0.000000e+00> : vector<8x400xf32>
    %253 = tpu.matmul %249, %252, %cst_148 {dimension_numbers = #tpu.dot_dimension_numbers<[1], [0], [0], [1], [0, 0, 1, 1], [], []>} : vector<8x16xbf16>, vector<16x400xbf16>, vector<8x400xf32> -> vector<8x400xf32>
    %254 = arith.addf %247, %253 : vector<8x400xf32>
    %c17_149 = arith.constant 17 : index
    %c0_150 = arith.constant 0 : index
    %c0_151 = arith.constant 0 : index
    %255 = vector.load %arg6[%c17_149, %c0_150, %c0_151] : memref<18x8x16xbf16, #tpu.memory_space<vmem>>, vector<1x8x16xbf16>
    %256 = vector.shape_cast %255 : vector<1x8x16xbf16> to vector<8x16xbf16>
    %257 = vector.extract_strided_slice %137 {offsets = [0, 111], sizes = [16, 289], strides = [1, 1]} : vector<16x400xbf16> to vector<16x289xbf16>
    %258 = vector.extract_strided_slice %137 {offsets = [0, 0], sizes = [16, 111], strides = [1, 1]} : vector<16x400xbf16> to vector<16x111xbf16>
    %259 = tpu.concatenate %257, %258 in 1 : vector<16x289xbf16>, vector<16x111xbf16> -> vector<16x400xbf16>
    %cst_152 = arith.constant dense<0.000000e+00> : vector<8x400xf32>
    %260 = tpu.matmul %256, %259, %cst_152 {dimension_numbers = #tpu.dot_dimension_numbers<[1], [0], [0], [1], [0, 0, 1, 1], [], []>} : vector<8x16xbf16>, vector<16x400xbf16>, vector<8x400xf32> -> vector<8x400xf32>
    %261 = arith.addf %254, %260 : vector<8x400xf32>
    %c0_153 = arith.constant 0 : index
    %c0_154 = arith.constant 0 : index
    %c0_155 = arith.constant 0 : index
    %c0_156 = arith.constant 0 : index
    %262 = vector.load %arg3[%c0_153, %c0_154, %c0_155, %c0_156] : memref<1x1x8x400xf32, #tpu.memory_space<vmem>>, vector<1x1x8x400xf32>
    %263 = vector.shape_cast %262 : vector<1x1x8x400xf32> to vector<8x400xf32>
    %cst_157 = arith.constant 0.707106769 : f32
    %264 = vector.broadcast %cst_157 : f32 to vector<8x400xf32>
    %265 = arith.mulf %264, %263 : vector<8x400xf32>
    %cst_158 = arith.constant 0.707106769 : f32
    %266 = vector.broadcast %cst_158 : f32 to vector<8x400xf32>
    %267 = arith.mulf %266, %261 : vector<8x400xf32>
    %268 = arith.addf %265, %267 : vector<8x400xf32>
    %cst_159 = arith.constant -2.560000e+02 : f32
    %cst_160 = arith.constant 2.560000e+02 : f32
    %269 = vector.broadcast %cst_159 : f32 to vector<8x400xf32>
    %270 = arith.maximumf %269, %268 : vector<8x400xf32>
    %271 = vector.broadcast %cst_160 : f32 to vector<8x400xf32>
    %272 = arith.minimumf %271, %270 : vector<8x400xf32>
    %c0_161 = arith.constant 0 : index
    %c0_162 = arith.constant 0 : index
    %c0_163 = arith.constant 0 : index
    %c0_164 = arith.constant 0 : index
    %273 = vector.load %arg7[%c0_161, %c0_162, %c0_163, %c0_164] : memref<1x1x8x400xf32, #tpu.memory_space<vmem>>, vector<1x1x8x400xf32>
    %274 = vector.shape_cast %273 : vector<1x1x8x400xf32> to vector<8x400xf32>
    %275 = vector.shape_cast %272 : vector<8x400xf32> to vector<1x1x8x400xf32>
    tpu.vector_store %arg7[%c0_161, %c0_162, %c0_163, %c0_164], %275 {strides = array<i32>} : memref<1x1x8x400xf32, #tpu.memory_space<vmem>>, vector<1x1x8x400xf32>,
    return
  }
  func.func @transform_0(%arg0: i32, %arg1: i32) -> (i32, i32, i32, i32) {
    %c0_i32 = arith.constant 0 : i32
    %c0_i32_0 = arith.constant 0 : i32
    %c0_i32_1 = arith.constant 0 : i32
    return %arg0, %arg1, %c0_i32, %c0_i32_0 : i32, i32, i32, i32
  }
  func.func @transform_1(%arg0: i32, %arg1: i32) -> (i32, i32, i32, i32) {
    %c0_i32 = arith.constant 0 : i32
    %c0_i32_0 = arith.constant 0 : i32
    %c0_i32_1 = arith.constant 0 : i32
    return %arg0, %arg1, %c0_i32, %c0_i32_0 : i32, i32, i32, i32
  }
  func.func @transform_2(%arg0: i32, %arg1: i32) -> (i32, i32) {
    %c0_i32 = arith.constant 0 : i32
    %c0_i32_0 = arith.constant 0 : i32
    %c0_i32_1 = arith.constant 0 : i32
    return %c0_i32, %c0_i32_0 : i32, i32
  }
  func.func @transform_3(%arg0: i32, %arg1: i32) -> (i32, i32, i32, i32) {
    %c0_i32 = arith.constant 0 : i32
    %c0_i32_0 = arith.constant 0 : i32
    %c0_i32_1 = arith.constant 0 : i32
    %c0_i32_2 = arith.constant 0 : i32
    return %arg0, %c0_i32, %c0_i32_0, %c0_i32_1 : i32, i32, i32, i32
  }
  func.func @transform_4(%arg0: i32, %arg1: i32) -> (i32, i32, i32) {
    %c0_i32 = arith.constant 0 : i32
    %c0_i32_0 = arith.constant 0 : i32
    %c0_i32_1 = arith.constant 0 : i32
    %c0_i32_2 = arith.constant 0 : i32
    return %c0_i32, %c0_i32_0, %c0_i32_1 : i32, i32, i32
  }
  func.func @transform_5(%arg0: i32, %arg1: i32) -> (i32, i32, i32, i32) {
    %c0_i32 = arith.constant 0 : i32
    %c0_i32_0 = arith.constant 0 : i32
    %c0_i32_1 = arith.constant 0 : i32
    return %arg0, %arg1, %c0_i32, %c0_i32_0 : i32, i32, i32, i32
  }
}

</mosaic_0001>

<llo_original>
// kernel: block_forward_pallas.1
$region0: #{block_forward_pallas.1}
  #allocation0 [shape = 'u32[]', space=smem, size = 0x4, offset = 0x4, fixed_abs, tag = 'smem constant byte address 0x4 - core index']
  #allocation1 [shape = 'u32[144,128]{1,0:T(1,128)}', space=vmem, size = 0x12000, scoped, tag = 'internal scratch']
  %s0 = inlined_call_operand.vmem [shape: bf16[2,2,8,400], index: 0, kind: input, shape index: {}]
  %s1 = inlined_call_operand.vmem [shape: f32[2,2,8,400], index: 1, kind: input, shape index: {}]
  %s2 = inlined_call_operand.vmem [shape: f32[1,400], index: 2, kind: input, shape index: {}]
  %s3 = inlined_call_operand.vmem [shape: bf16[2,18,16,8], index: 3, kind: input, shape index: {}]
  %s4 = inlined_call_operand.vmem [shape: bf16[18,8,16], index: 4, kind: input, shape index: {}]
  %s5 = inlined_call_operand.vmem [shape: f32[2,2,8,400], index: 5, kind: output, shape index: {}]
  %s6 = sld [smem:[#allocation0]]
  $region53: #{block_forward_pallas.1} parent=0
    _
  %s8 = ssub.s32 1, %s6
  %s9 = scalar_select 0, %s8, %s6
  loop: start=0, step=1, limit=6
  $region2: #{block_forward_pallas.1} parent=0 // loop_pre_header
    _
  $region3: #{block_forward_pallas.1} parent=0 // loop_header
    %s11 = sphi 0, %s15
    %p12 = scmp.ge.s32.totalorder %s11, 6
    %s18 = sphi 0, %s30
    %s19 = sphi 0, %s26
    %s20 = sphi 0, %s18
    %s21 = sphi 0, %s19
    %s22 = sphi 0, %s20
    %s23 = sphi 0, %s21
    %s35 = sphi 0, %s37
    %s38 = sphi 0, %s35
    %s39 = sphi 0, %s38
    %s55 = sphi 0, %s39
    %s63 = sphi 0, %s65
    %s66 = sphi 0, %s63
    %s67 = sphi 0, %s66
    %s83 = sphi 0, %s67
    %s87 = sphi 0, %s87
    %s89 = sphi 0, %s87
    %s90 = sphi 0, %s89
    %s104 = sphi 0, %s90
    %s110 = sphi 0, %s112
    %s113 = sphi 0, %s110
    %s114 = sphi 0, %s113
    %s130 = sphi 0, %s114
    %s134 = sphi 0, %s134
    %s136 = sphi 0, %s134
    %s137 = sphi 0, %s136
    %s151 = sphi 0, %s137
    %s159 = sphi 0, %s161
    %s162 = sphi 0, %s159
    %s163 = sphi 0, %s162
    %s179 = sphi 0, %s163
  $region4: #{block_forward_pallas.1} parent=0 // loop_header_branch
    %14 = sbr.rel (%p12) target = $region8
  $region5: #{block_forward_pallas.1} parent=0 // loop_body
    %s16 = ssub.s32 %s11, 1
    %s17 = ssub.s32 %s11, 2
    %s24 = sadd.s32 1, %s19
    %p25 = scmp.ge.s32.totalorder %s24, 2
    %s26 = scalar_select %p25, 0, %s24
    %s27 = sadd.s32 1, %s18
    %s28 = scalar_select %p25, %s27, %s18
    %p29 = scmp.ge.s32.totalorder %s28, 2
    %s30 = scalar_select %p29, 0, %s28
    %s31 = ssub.s32 %s18, %s30
    %s32 = ssub.s32 %s19, %s26
    %s33 = sor.u32 %s31, %s32
    %p34 = scmp.eq.s32.totalorder %s33, 0
    %s36 = sadd.s32 %s35, 1
    %s37 = scalar_select %p34, %s35, %s36
    %p40 = pneg %p34
    %p41 = scmp.eq.s32.totalorder %s11, 3
    %p42 = por %p40, %p41
    %p43 = scmp.ne.s32.totalorder %s35, %s38
    %p44 = scmp.eq.s32.totalorder %s11, 0
    %p45 = por %p43, %p44
    %p46 = scmp.ne.s32.totalorder %s35, %s38
    %p47 = scmp.eq.s32.totalorder %s16, 3
    %p48 = por %p46, %p47
    %p49 = scmp.ne.s32.totalorder %s38, %s39
    %p50 = scmp.eq.s32.totalorder %s16, 0
    %p51 = por %p49, %p50
    %p52 = scmp.ne.s32.totalorder %s38, %s39
    %p53 = scmp.eq.s32.totalorder %s17, 3
    %p54 = por %p52, %p53
    %p56 = scmp.ne.s32.totalorder %s39, %s55
    %p57 = scmp.eq.s32.totalorder %s17, 0
    %p58 = por %p56, %p57
    %s59 = ssub.s32 %s18, %s30
    %s60 = ssub.s32 %s19, %s26
    %s61 = sor.u32 %s59, %s60
    %p62 = scmp.eq.s32.totalorder %s61, 0
    %s64 = sadd.s32 %s63, 1
    %s65 = scalar_select %p62, %s63, %s64
    %p68 = pneg %p62
    %p69 = scmp.eq.s32.totalorder %s11, 3
    %p70 = por %p68, %p69
    %p71 = scmp.ne.s32.totalorder %s63, %s66
    %p72 = scmp.eq.s32.totalorder %s11, 0
    %p73 = por %p71, %p72
    %p74 = scmp.ne.s32.totalorder %s63, %s66
    %p75 = scmp.eq.s32.totalorder %s16, 3
    %p76 = por %p74, %p75
    %p77 = scmp.ne.s32.totalorder %s66, %s67
    %p78 = scmp.eq.s32.totalorder %s16, 0
    %p79 = por %p77, %p78
    %p80 = scmp.ne.s32.totalorder %s66, %s67
    %p81 = scmp.eq.s32.totalorder %s17, 3
    %p82 = por %p80, %p81
    %p84 = scmp.ne.s32.totalorder %s67, %s83
    %p85 = scmp.eq.s32.totalorder %s17, 0
    %p86 = por %p84, %p85
    %s88 = sadd.s32 %s87, 1
    %p91 = scmp.eq.s32.totalorder %s11, 3
    %p92 = scmp.ne.s32.totalorder %s87, %s89
    %p93 = scmp.eq.s32.totalorder %s11, 0
    %p94 = por %p92, %p93
    %p95 = scmp.ne.s32.totalorder %s87, %s89
    %p96 = scmp.eq.s32.totalorder %s16, 3
    %p97 = por %p95, %p96
    %p98 = scmp.ne.s32.totalorder %s89, %s90
    %p99 = scmp.eq.s32.totalorder %s16, 0
    %p100 = por %p98, %p99
    %p101 = scmp.ne.s32.totalorder %s89, %s90
    %p102 = scmp.eq.s32.totalorder %s17, 3
    %p103 = por %p101, %p102
    %p105 = scmp.ne.s32.totalorder %s90, %s104
    %p106 = scmp.eq.s32.totalorder %s17, 0
    %p107 = por %p105, %p106
    %s108 = ssub.s32 %s18, %s30
    %p109 = scmp.eq.s32.totalorder %s108, 0
    %s111 = sadd.s32 %s110, 1
    %s112 = scalar_select %p109, %s110, %s111
    %p115 = pneg %p109
    %p116 = scmp.eq.s32.totalorder %s11, 3
    %p117 = por %p115, %p116
    %p118 = scmp.ne.s32.totalorder %s110, %s113
    %p119 = scmp.eq.s32.totalorder %s11, 0
    %p120 = por %p118, %p119
    %p121 = scmp.ne.s32.totalorder %s110, %s113
    %p122 = scmp.eq.s32.totalorder %s16, 3
    %p123 = por %p121, %p122
    %p124 = scmp.ne.s32.totalorder %s113, %s114
    %p125 = scmp.eq.s32.totalorder %s16, 0
    %p126 = por %p124, %p125
    %p127 = scmp.ne.s32.totalorder %s113, %s114
    %p128 = scmp.eq.s32.totalorder %s17, 3
    %p129 = por %p127, %p128
    %p131 = scmp.ne.s32.totalorder %s114, %s130
    %p132 = scmp.eq.s32.totalorder %s17, 0
    %p133 = por %p131, %p132
    %s135 = sadd.s32 %s134, 1
    %p138 = scmp.eq.s32.totalorder %s11, 3
    %p139 = scmp.ne.s32.totalorder %s134, %s136
    %p140 = scmp.eq.s32.totalorder %s11, 0
    %p141 = por %p139, %p140
    %p142 = scmp.ne.s32.totalorder %s134, %s136
    %p143 = scmp.eq.s32.totalorder %s16, 3
    %p144 = por %p142, %p143
    %p145 = scmp.ne.s32.totalorder %s136, %s137
    %p146 = scmp.eq.s32.totalorder %s16, 0
    %p147 = por %p145, %p146
    %p148 = scmp.ne.s32.totalorder %s136, %s137
    %p149 = scmp.eq.s32.totalorder %s17, 3
    %p150 = por %p148, %p149
    %p152 = scmp.ne.s32.totalorder %s137, %s151
    %p153 = scmp.eq.s32.totalorder %s17, 0
    %p154 = por %p152, %p153
    %s155 = ssub.s32 %s18, %s30
    %s156 = ssub.s32 %s19, %s26
    %s157 = sor.u32 %s155, %s156
    %p158 = scmp.eq.s32.totalorder %s157, 0
    %s160 = sadd.s32 %s159, 1
    %s161 = scalar_select %p158, %s159, %s160
    %p164 = pneg %p158
    %p165 = scmp.eq.s32.totalorder %s11, 3
    %p166 = por %p164, %p165
    %p167 = scmp.ne.s32.totalorder %s159, %s162
    %p168 = scmp.eq.s32.totalorder %s11, 0
    %p169 = por %p167, %p168
    %p170 = scmp.ne.s32.totalorder %s159, %s162
    %p171 = scmp.eq.s32.totalorder %s16, 3
    %p172 = por %p170, %p171
    %p173 = scmp.ne.s32.totalorder %s162, %s163
    %p174 = scmp.eq.s32.totalorder %s16, 0
    %p175 = por %p173, %p174
    %p176 = scmp.ne.s32.totalorder %s162, %s163
    %p177 = scmp.eq.s32.totalorder %s17, 3
    %p178 = por %p176, %p177
    %p180 = scmp.ne.s32.totalorder %s163, %s179
    %p181 = scmp.eq.s32.totalorder %s17, 0
    %p182 = por %p180, %p181
    %p183 = scmp.le.s32.totalorder 1, %s11
    %p184 = scmp.lt.s32.totalorder %s11, 5
    %p185 = pnand %p183, %p184
    %p186 = pneg %p185
    // Predicated region
    $region9: #{block_forward_pallas.1} parent=5 // pred_check
      _
    $region10: #{block_forward_pallas.1} parent=5 // pred_check_branch
      %188 = sbr.rel (%p185) target = $region12
    $region11: #{block_forward_pallas.1} parent=5 // pred_region
      %s189 = ssub.s32 %s11, 1
      // Predicated region
      $region13: #{block_forward_pallas.1} parent=11 // pred_check
        %p190 = pneg %p100
      $region14: #{block_forward_pallas.1} parent=11 // pred_check_branch
        %192 = sbr.rel (%p190) target = $region16
      $region15: #{block_forward_pallas.1} parent=11 // pred_region
        _
      $region16: #{block_forward_pallas.1} parent=11 // pred_fallthru
        _
      // Predicated region
      $region17: #{block_forward_pallas.1} parent=11 // pred_check
        %p193 = pneg %p147
      $region18: #{block_forward_pallas.1} parent=11 // pred_check_branch
        %195 = sbr.rel (%p193) target = $region20
      $region19: #{block_forward_pallas.1} parent=11 // pred_region
        _
      $region20: #{block_forward_pallas.1} parent=11 // pred_fallthru
        _
    $region12: #{block_forward_pallas.1} parent=5 // pred_fallthru
      _
    %p196 = scmp.lt.s32.totalorder %s11, 4
    // Predicated region
    $region21: #{block_forward_pallas.1} parent=5 // pred_check
      %p197 = pneg %p196
    $region22: #{block_forward_pallas.1} parent=5 // pred_check_branch
      %199 = sbr.rel (%p197) target = $region24
    $region23: #{block_forward_pallas.1} parent=5 // pred_region
      // Predicated region
      $region25: #{block_forward_pallas.1} parent=23 // pred_check
        %p200 = pneg %p45
      $region26: #{block_forward_pallas.1} parent=23 // pred_check_branch
        %202 = sbr.rel (%p200) target = $region28
      $region27: #{block_forward_pallas.1} parent=23 // pred_region
        %p203 = scmp.lt.s32.totalorder %s18, 1
        %s204 = scalar_select %p203, %s18, 1
        %p205 = scmp.lt.s32.totalorder %s19, 1
        %s206 = scalar_select %p205, %s19, 1
        %s207 = smul.addr %s206, 4
        %s208 = smul.addr %s204, 8
        %s209 = sadd.s32 %s207, %s208
        %s210 = smul.addr %s209, 4
        %s211 = scalar_lea.vmem %s0, %s210
      $region28: #{block_forward_pallas.1} parent=23 // pred_fallthru
        _
      // Predicated region
      $region29: #{block_forward_pallas.1} parent=23 // pred_check
        %p212 = pneg %p73
      $region30: #{block_forward_pallas.1} parent=23 // pred_check_branch
        %214 = sbr.rel (%p212) target = $region32
      $region31: #{block_forward_pallas.1} parent=23 // pred_region
        %p215 = scmp.lt.s32.totalorder %s18, 1
        %s216 = scalar_select %p215, %s18, 1
        %p217 = scmp.lt.s32.totalorder %s19, 1
        %s218 = scalar_select %p217, %s19, 1
        %s219 = smul.addr %s218, 4
        %s220 = smul.addr %s216, 8
        %s221 = sadd.s32 %s219, %s220
        %s222 = smul.addr %s221, 8
        %s223 = scalar_lea.vmem %s1, %s222
      $region32: #{block_forward_pallas.1} parent=23 // pred_fallthru
        _
      // Predicated region
      $region33: #{block_forward_pallas.1} parent=23 // pred_check
        %p224 = pneg %p120
      $region34: #{block_forward_pallas.1} parent=23 // pred_check_branch
        %226 = sbr.rel (%p224) target = $region36
      $region35: #{block_forward_pallas.1} parent=23 // pred_region
        %p227 = scmp.lt.s32.totalorder %s18, 1
        %s228 = scalar_select %p227, %s18, 1
        %s229 = smul.addr %s228, 36
        %s230 = smul.addr %s229, 4
        %s231 = scalar_lea.vmem %s3, %s230
      $region36: #{block_forward_pallas.1} parent=23 // pred_fallthru
        _
    $region24: #{block_forward_pallas.1} parent=5 // pred_fallthru
      _
    %p232 = scmp.le.s32.totalorder 1, %s11
    %p233 = scmp.lt.s32.totalorder %s11, 5
    %p234 = pnand %p232, %p233
    %p235 = pneg %p234
    // Predicated region
    $region37: #{block_forward_pallas.1} parent=5 // pred_check
      _
    $region38: #{block_forward_pallas.1} parent=5 // pred_check_branch
      %237 = sbr.rel (%p234) target = $region40
    $region39: #{block_forward_pallas.1} parent=5 // pred_region
      %s238 = ssub.s32 %s11, 1
      %p239 = scmp.lt.s32.totalorder %s20, 1
      %s240 = scalar_select %p239, %s20, 1
      %p241 = scmp.lt.s32.totalorder %s21, 1
      %s242 = scalar_select %p241, %s21, 1
      %s243 = smul.addr %s242, 4
      %s244 = smul.addr %s240, 8
      %s245 = sadd.s32 %s243, %s244
      %s246 = smul.addr %s245, 4
      %s247 = scalar_lea.vmem %s0, %s246
      %p248 = pneg %p51
      %p249 = pneg %p48
      %p250 = scmp.lt.s32.totalorder %s20, 1
      %s251 = scalar_select %p250, %s20, 1
      %p252 = scmp.lt.s32.totalorder %s21, 1
      %s253 = scalar_select %p252, %s21, 1
      %s254 = smul.addr %s253, 4
      %s255 = smul.addr %s251, 8
      %s256 = sadd.s32 %s254, %s255
      %s257 = smul.addr %s256, 8
      %s258 = scalar_lea.vmem %s1, %s257
      %p259 = pneg %p79
      %p260 = pneg %p76
      %p261 = pneg %p100
      %p262 = pneg %p97
      %p263 = scmp.lt.s32.totalorder %s20, 1
      %s264 = scalar_select %p263, %s20, 1
      %s265 = smul.addr %s264, 36
      %s266 = smul.addr %s265, 4
      %s267 = scalar_lea.vmem %s3, %s266
      %p268 = pneg %p126
      %p269 = pneg %p123
      %p270 = pneg %p147
      %p271 = pneg %p144
      %p272 = pneg %p175
      %p273 = pneg %p172
      %p274 = scmp.lt.s32.totalorder %s20, 1
      %s275 = scalar_select %p274, %s20, 1
      %p276 = scmp.lt.s32.totalorder %s21, 1
      %s277 = scalar_select %p276, %s21, 1
      %s278 = smul.addr %s277, 4
      %s279 = smul.addr %s275, 8
      %s280 = sadd.s32 %s278, %s279
      %s281 = smul.addr %s280, 8
      %s282 = scalar_lea.vmem %s5, %s281
      %p283 = scmp.lt.s32.totalorder %s20, 1
      %s284 = scalar_select %p283, %s20, 1
      %p285 = scmp.lt.s32.totalorder %s21, 1
      %s286 = scalar_select %p285, %s21, 1
      %s287 = smul.addr %s286, 4
      %s288 = smul.addr %s284, 8
      %s289 = sadd.s32 %s287, %s288
      %s290 = smul.addr %s289, 4
      %s291 = scalar_lea.vmem %s0, %s290
      %p292 = scmp.lt.s32.totalorder %s20, 1
      %s293 = scalar_select %p292, %s20, 1
      %p294 = scmp.lt.s32.totalorder %s21, 1
      %s295 = scalar_select %p294, %s21, 1
      %s296 = smul.addr %s295, 4
      %s297 = smul.addr %s293, 8
      %s298 = sadd.s32 %s296, %s297
      %s299 = smul.addr %s298, 8
      %s300 = scalar_lea.vmem %s1, %s299
      %p301 = scmp.lt.s32.totalorder %s20, 1
      %s302 = scalar_select %p301, %s20, 1
      %s303 = smul.addr %s302, 36
      %s304 = smul.addr %s303, 4
      %s305 = scalar_lea.vmem %s3, %s304
      %p306 = scmp.lt.s32.totalorder %s20, 1
      %s307 = scalar_select %p306, %s20, 1
      %p308 = scmp.lt.s32.totalorder %s21, 1
      %s309 = scalar_select %p308, %s21, 1
      %s310 = smul.addr %s309, 4
      %s311 = smul.addr %s307, 8
      %s312 = sadd.s32 %s310, %s311
      %s313 = smul.addr %s312, 8
      %s314 = scalar_lea.vmem %s5, %s313
      %v316 = vld [vmem:[%s291] sm:$0xff]
      %v317 = vld [vmem:[%s291 + $0x8] sm:$0xff]
      %v318 = vld [vmem:[%s305] sm:$0xf]
      %v319 = vld [vmem:[%s305 + $0x4] sm:$0xf]
      %v321 = vunpack.c.h.b16 %v317
      %v322 = vpack.c.b16 %v321, %v321
      %323 = vrot.lane.b32.xlu0 %v322, 123
      %v324 = vpop.permute.xlu0 %323
      %v326 = vunpack.c.l.b16 %v316
      %v327 = vunpack.c.h.b16 %v316
      %v328 = vunpack.c.l.b16 %v317
      %v329 = vpack.c.b16 %v326, %v326
      %v330 = vpack.c.b16 %v327, %v327
      %v331 = vpack.c.b16 %v328, %v328
      %332 = vrot.lane.b32.xlu0 %v329, 11
      %v333 = vpop.permute.xlu0 %332
      %334 = vrot.lane.b32.xlu0 %v330, 11
      %v335 = vpop.permute.xlu0 %334
      %336 = vrot.lane.b32.xlu0 %v331, 11
      %v337 = vpop.permute.xlu0 %336
      %338 = vrot.lane.b32.xlu0 %v322, 11
      %v339 = vpop.permute.xlu0 %338
      %vm340 = vcmask 89088
      %v341 = vsel %vm340, %v333, %v335
      %v342 = vsel %vm340, %v335, %v337
      %v343 = vsel %vm340, %v337, %v339
      %vm344 = vcmask 89088
      %v347 = vsel %vm344, %v324, %v333
      %s348 = scalar_lea.vmem %s305, 8
      %v349 = vld [vmem:[%s348] sm:$0xf]
      %v350 = vld [vmem:[%s348 + $0x4] sm:$0xf]
      %351 = vrot.lane.b32.xlu0 %v322, 122
      %v352 = vpop.permute.xlu0 %351
      %353 = vrot.lane.b32.xlu0 %v329, 10
      %v354 = vpop.permute.xlu0 %353
      %355 = vrot.lane.b32.xlu0 %v330, 10
      %v356 = vpop.permute.xlu0 %355
      %357 = vrot.lane.b32.xlu0 %v331, 10
      %v358 = vpop.permute.xlu0 %357
      %359 = vrot.lane.b32.xlu0 %v322, 10
      %v360 = vpop.permute.xlu0 %359
      %vm361 = vcmask 80896
      %v362 = vsel %vm361, %v354, %v356
      %v363 = vsel %vm361, %v356, %v358
      %v364 = vsel %vm361, %v358, %v360
      %vm365 = vcmask 80896
      %v368 = vsel %vm365, %v352, %v354
      %v371 = vunpack.c.l.b16 %v349
      %v372 = vunpack.c.l.b16 %v350
      %v373 = vpack.c.b16 %v372, %v371
      %vm374 = vcmask 64512
      %v376 = vsel %vm374, %v373, 0
      %vm378 = vcmask 1043456
      %v379 = vsel %vm378, %v368, 0
      %v382 = vsel %vm378, %v362, 0
      %v385 = vsel %vm378, %v363, 0
      %v388 = vsel %vm378, %v364, 0
      %390 = vmatprep.subr.bf16.mxu0 0
      %391 = vmatpush1.bf16.msra.mxu0 0
      %392 = vmatprep.subr.bf16.mxu0 0
      %393 = vmatpush1.bf16.msra.mxu0 0
      %394 = vmatprep.subr.bf16.mxu0 0
      %395 = vmatpush1.bf16.msra.mxu0 0
      %396 = vmatprep.subr.bf16.mxu0 0
      %397 = vmatpush1.bf16.msra.mxu0 0
      %398 = vmatprep.subr.bf16.mxu0 0
      %399 = vmatpush1.bf16.msra.mxu0 0
      %400 = vmatprep.subr.bf16.mxu0 0
      %401 = vmatpush1.bf16.msra.mxu0 0
      %402 = vmatprep.subr.bf16.mxu0 0
      %403 = vmatpush1.bf16.msra.mxu0 0
      %404 = vmatprep.subr.bf16.mxu0 %v382
      %405 = vmatpush1.bf16.msra.mxu0 %v379
      %406 = vmatprep.subr.bf16.mxu0 0
      %407 = vmatpush2.bf16.msra.mxu0 0
      %408 = vmatprep.subr.bf16.mxu0 0
      %409 = vmatpush2.bf16.msra.mxu0 0
      %410 = vmatprep.subr.bf16.mxu0 0
      %411 = vmatpush2.bf16.msra.mxu0 0
      %412 = vmatprep.subr.bf16.mxu0 0
      %413 = vmatpush2.bf16.msra.mxu0 0
      %414 = vmatprep.subr.bf16.mxu0 0
      %415 = vmatpush2.bf16.msra.mxu0 0
      %416 = vmatprep.subr.bf16.mxu0 0
      %417 = vmatpush2.bf16.msra.mxu0 0
      %418 = vmatprep.subr.bf16.mxu0 0
      %419 = vmatpush2.bf16.msra.mxu0 0
      %420 = vmatprep.subr.bf16.mxu0 0
      %421 = vmatpush2.bf16.msra.mxu0 0
      %422 = vmatprep.mubr.bf16.mxu0 0
      %423 = vmatmul.mubr.bf16.gmra.mxu0 %v376
      %v424 = vpop.f32.mrf.mxu0
      %v425 = vadd.f32 0.0, %v424
      %v426 = vpop.f32.mrf.mxu0
      %v427 = vadd.f32 0.0, %v426
      %v428 = vpop.f32.mrf.mxu0
      %v429 = vadd.f32 0.0, %v428
      %v430 = vpop.f32.mrf.mxu0
      %v431 = vadd.f32 0.0, %v430
      %432 = vdwg.mxu0
      %433 = vmatprep.subr.bf16.mxu0 0
      %434 = vmatpush1.bf16.msra.mxu0 0
      %435 = vmatprep.subr.bf16.mxu0 0
      %436 = vmatpush1.bf16.msra.mxu0 0
      %437 = vmatprep.subr.bf16.mxu0 0
      %438 = vmatpush1.bf16.msra.mxu0 0
      %439 = vmatprep.subr.bf16.mxu0 0
      %440 = vmatpush1.bf16.msra.mxu0 0
      %441 = vmatprep.subr.bf16.mxu0 0
      %442 = vmatpush1.bf16.msra.mxu0 0
      %443 = vmatprep.subr.bf16.mxu0 0
      %444 = vmatpush1.bf16.msra.mxu0 0
      %445 = vmatprep.subr.bf16.mxu0 0
      %446 = vmatpush1.bf16.msra.mxu0 0
      %447 = vmatprep.subr.bf16.mxu0 %v388
      %448 = vmatpush1.bf16.msra.mxu0 %v385
      %449 = vmatprep.subr.bf16.mxu0 0
      %450 = vmatpush2.bf16.msra.mxu0 0
      %451 = vmatprep.subr.bf16.mxu0 0
      %452 = vmatpush2.bf16.msra.mxu0 0
      %453 = vmatprep.subr.bf16.mxu0 0
      %454 = vmatpush2.bf16.msra.mxu0 0
      %455 = vmatprep.subr.bf16.mxu0 0
      %456 = vmatpush2.bf16.msra.mxu0 0
      %457 = vmatprep.subr.bf16.mxu0 0
      %458 = vmatpush2.bf16.msra.mxu0 0
      %459 = vmatprep.subr.bf16.mxu0 0
      %460 = vmatpush2.bf16.msra.mxu0 0
      %461 = vmatprep.subr.bf16.mxu0 0
      %462 = vmatpush2.bf16.msra.mxu0 0
      %463 = vmatprep.subr.bf16.mxu0 0
      %464 = vmatpush2.bf16.msra.mxu0 0
      %465 = vmatprep.mubr.bf16.mxu0 0
      %466 = vmatmul.mubr.bf16.gmra.mxu0 %v376
      %v467 = vpop.f32.mrf.mxu0
      %v468 = vadd.f32 0.0, %v467
      %v469 = vpop.f32.mrf.mxu0
      %v470 = vadd.f32 0.0, %v469
      %v471 = vpop.f32.mrf.mxu0
      %v472 = vadd.f32 0.0, %v471
      %v473 = vpop.f32.mrf.mxu0
      %v474 = vadd.f32 0.0, %v473
      %475 = vdwg.mxu0
      %v478 = vunpack.c.l.b16 %v318
      %v479 = vunpack.c.l.b16 %v319
      %v480 = vpack.c.b16 %v479, %v478
      %v482 = vsel %vm374, %v480, 0
      %v484 = vsel %vm378, %v347, 0
      %v487 = vsel %vm378, %v341, 0
      %v490 = vsel %vm378, %v342, 0
      %v493 = vsel %vm378, %v343, 0
      %495 = vmatprep.subr.bf16.mxu0 0
      %496 = vmatpush1.bf16.msra.mxu0 0
      %497 = vmatprep.subr.bf16.mxu0 0
      %498 = vmatpush1.bf16.msra.mxu0 0
      %499 = vmatprep.subr.bf16.mxu0 0
      %500 = vmatpush1.bf16.msra.mxu0 0
      %501 = vmatprep.subr.bf16.mxu0 0
      %502 = vmatpush1.bf16.msra.mxu0 0
      %503 = vmatprep.subr.bf16.mxu0 0
      %504 = vmatpush1.bf16.msra.mxu0 0
      %505 = vmatprep.subr.bf16.mxu0 0
      %506 = vmatpush1.bf16.msra.mxu0 0
      %507 = vmatprep.subr.bf16.mxu0 0
      %508 = vmatpush1.bf16.msra.mxu0 0
      %509 = vmatprep.subr.bf16.mxu0 %v487
      %510 = vmatpush1.bf16.msra.mxu0 %v484
      %511 = vmatprep.subr.bf16.mxu0 0
      %512 = vmatpush2.bf16.msra.mxu0 0
      %513 = vmatprep.subr.bf16.mxu0 0
      %514 = vmatpush2.bf16.msra.mxu0 0
      %515 = vmatprep.subr.bf16.mxu0 0
      %516 = vmatpush2.bf16.msra.mxu0 0
      %517 = vmatprep.subr.bf16.mxu0 0
      %518 = vmatpush2.bf16.msra.mxu0 0
      %519 = vmatprep.subr.bf16.mxu0 0
      %520 = vmatpush2.bf16.msra.mxu0 0
      %521 = vmatprep.subr.bf16.mxu0 0
      %522 = vmatpush2.bf16.msra.mxu0 0
      %523 = vmatprep.subr.bf16.mxu0 0
      %524 = vmatpush2.bf16.msra.mxu0 0
      %525 = vmatprep.subr.bf16.mxu0 0
      %526 = vmatpush2.bf16.msra.mxu0 0
      %527 = vmatprep.mubr.bf16.mxu0 0
      %528 = vmatmul.mubr.bf16.gmra.mxu0 %v482
      %v529 = vpop.f32.mrf.mxu0
      %v530 = vadd.f32 %v425, %v529
      %v531 = vpop.f32.mrf.mxu0
      %v532 = vadd.f32 %v427, %v531
      %v533 = vpop.f32.mrf.mxu0
      %v534 = vadd.f32 %v429, %v533
      %v535 = vpop.f32.mrf.mxu0
      %v536 = vadd.f32 %v431, %v535
      %537 = vdwg.mxu0
      %538 = vmatprep.subr.bf16.mxu0 0
      %539 = vmatpush1.bf16.msra.mxu0 0
      %540 = vmatprep.subr.bf16.mxu0 0
      %541 = vmatpush1.bf16.msra.mxu0 0
      %542 = vmatprep.subr.bf16.mxu0 0
      %543 = vmatpush1.bf16.msra.mxu0 0
      %544 = vmatprep.subr.bf16.mxu0 0
      %545 = vmatpush1.bf16.msra.mxu0 0
      %546 = vmatprep.subr.bf16.mxu0 0
      %547 = vmatpush1.bf16.msra.mxu0 0
      %548 = vmatprep.subr.bf16.mxu0 0
      %549 = vmatpush1.bf16.msra.mxu0 0
      %550 = vmatprep.subr.bf16.mxu0 0
      %551 = vmatpush1.bf16.msra.mxu0 0
      %552 = vmatprep.subr.bf16.mxu0 %v493
      %553 = vmatpush1.bf16.msra.mxu0 %v490
      %554 = vmatprep.subr.bf16.mxu0 0
      %555 = vmatpush2.bf16.msra.mxu0 0
      %556 = vmatprep.subr.bf16.mxu0 0
      %557 = vmatpush2.bf16.msra.mxu0 0
      %558 = vmatprep.subr.bf16.mxu0 0
      %559 = vmatpush2.bf16.msra.mxu0 0
      %560 = vmatprep.subr.bf16.mxu0 0
      %561 = vmatpush2.bf16.msra.mxu0 0
      %562 = vmatprep.subr.bf16.mxu0 0
      %563 = vmatpush2.bf16.msra.mxu0 0
      %564 = vmatprep.subr.bf16.mxu0 0
      %565 = vmatpush2.bf16.msra.mxu0 0
      %566 = vmatprep.subr.bf16.mxu0 0
      %567 = vmatpush2.bf16.msra.mxu0 0
      %568 = vmatprep.subr.bf16.mxu0 0
      %569 = vmatpush2.bf16.msra.mxu0 0
      %570 = vmatprep.mubr.bf16.mxu0 0
      %571 = vmatmul.mubr.bf16.gmra.mxu0 %v482
      %v572 = vpop.f32.mrf.mxu0
      %v573 = vadd.f32 %v468, %v572
      %v574 = vpop.f32.mrf.mxu0
      %v575 = vadd.f32 %v470, %v574
      %v576 = vpop.f32.mrf.mxu0
      %v577 = vadd.f32 %v472, %v576
      %v578 = vpop.f32.mrf.mxu0
      %v579 = vadd.f32 %v474, %v578
      %580 = vdwg.mxu0
      %s581 = scalar_lea.vmem %s305, 16
      %v582 = vld [vmem:[%s581] sm:$0xf]
      %v583 = vld [vmem:[%s581 + $0x4] sm:$0xf]
      %584 = vrot.lane.b32.xlu0 %v322, 121
      %v585 = vpop.permute.xlu0 %584
      %586 = vrot.lane.b32.xlu0 %v329, 9
      %v587 = vpop.permute.xlu0 %586
      %588 = vrot.lane.b32.xlu0 %v330, 9
      %v589 = vpop.permute.xlu0 %588
      %590 = vrot.lane.b32.xlu0 %v331, 9
      %v591 = vpop.permute.xlu0 %590
      %592 = vrot.lane.b32.xlu0 %v322, 9
      %v593 = vpop.permute.xlu0 %592
      %vm594 = vcmask 72704
      %v595 = vsel %vm594, %v587, %v589
      %v596 = vsel %vm594, %v589, %v591
      %v597 = vsel %vm594, %v591, %v593
      %vm598 = vcmask 72704
      %v601 = vsel %vm598, %v585, %v587
      %v604 = vunpack.c.l.b16 %v582
      %v605 = vunpack.c.l.b16 %v583
      %v606 = vpack.c.b16 %v605, %v604
      %v608 = vsel %vm374, %v606, 0
      %v610 = vsel %vm378, %v601, 0
      %v613 = vsel %vm378, %v595, 0
      %v616 = vsel %vm378, %v596, 0
      %v619 = vsel %vm378, %v597, 0
      %621 = vmatprep.subr.bf16.mxu0 0
      %622 = vmatpush1.bf16.msra.mxu0 0
      %623 = vmatprep.subr.bf16.mxu0 0
      %624 = vmatpush1.bf16.msra.mxu0 0
      %625 = vmatprep.subr.bf16.mxu0 0
      %626 = vmatpush1.bf16.msra.mxu0 0
      %627 = vmatprep.subr.bf16.mxu0 0
      %628 = vmatpush1.bf16.msra.mxu0 0
      %629 = vmatprep.subr.bf16.mxu0 0
      %630 = vmatpush1.bf16.msra.mxu0 0
      %631 = vmatprep.subr.bf16.mxu0 0
      %632 = vmatpush1.bf16.msra.mxu0 0
      %633 = vmatprep.subr.bf16.mxu0 0
      %634 = vmatpush1.bf16.msra.mxu0 0
      %635 = vmatprep.subr.bf16.mxu0 %v613
      %636 = vmatpush1.bf16.msra.mxu0 %v610
      %637 = vmatprep.subr.bf16.mxu0 0
      %638 = vmatpush2.bf16.msra.mxu0 0
      %639 = vmatprep.subr.bf16.mxu0 0
      %640 = vmatpush2.bf16.msra.mxu0 0
      %641 = vmatprep.subr.bf16.mxu0 0
      %642 = vmatpush2.bf16.msra.mxu0 0
      %643 = vmatprep.subr.bf16.mxu0 0
      %644 = vmatpush2.bf16.msra.mxu0 0
      %645 = vmatprep.subr.bf16.mxu0 0
      %646 = vmatpush2.bf16.msra.mxu0 0
      %647 = vmatprep.subr.bf16.mxu0 0
      %648 = vmatpush2.bf16.msra.mxu0 0
      %649 = vmatprep.subr.bf16.mxu0 0
      %650 = vmatpush2.bf16.msra.mxu0 0
      %651 = vmatprep.subr.bf16.mxu0 0
      %652 = vmatpush2.bf16.msra.mxu0 0
      %653 = vmatprep.mubr.bf16.mxu0 0
      %654 = vmatmul.mubr.bf16.gmra.mxu0 %v608
      %v655 = vpop.f32.mrf.mxu0
      %v656 = vadd.f32 0.0, %v655
      %v657 = vpop.f32.mrf.mxu0
      %v658 = vadd.f32 0.0, %v657
      %v659 = vpop.f32.mrf.mxu0
      %v660 = vadd.f32 0.0, %v659
      %v661 = vpop.f32.mrf.mxu0
      %v662 = vadd.f32 0.0, %v661
      %663 = vdwg.mxu0
      %664 = vmatprep.subr.bf16.mxu0 0
      %665 = vmatpush1.bf16.msra.mxu0 0
      %666 = vmatprep.subr.bf16.mxu0 0
      %667 = vmatpush1.bf16.msra.mxu0 0
      %668 = vmatprep.subr.bf16.mxu0 0
      %669 = vmatpush1.bf16.msra.mxu0 0
      %670 = vmatprep.subr.bf16.mxu0 0
      %671 = vmatpush1.bf16.msra.mxu0 0
      %672 = vmatprep.subr.bf16.mxu0 0
      %673 = vmatpush1.bf16.msra.mxu0 0
      %674 = vmatprep.subr.bf16.mxu0 0
      %675 = vmatpush1.bf16.msra.mxu0 0
      %676 = vmatprep.subr.bf16.mxu0 0
      %677 = vmatpush1.bf16.msra.mxu0 0
      %678 = vmatprep.subr.bf16.mxu0 %v619
      %679 = vmatpush1.bf16.msra.mxu0 %v616
      %680 = vmatprep.subr.bf16.mxu0 0
      %681 = vmatpush2.bf16.msra.mxu0 0
      %682 = vmatprep.subr.bf16.mxu0 0
      %683 = vmatpush2.bf16.msra.mxu0 0
      %684 = vmatprep.subr.bf16.mxu0 0
      %685 = vmatpush2.bf16.msra.mxu0 0
      %686 = vmatprep.subr.bf16.mxu0 0
      %687 = vmatpush2.bf16.msra.mxu0 0
      %688 = vmatprep.subr.bf16.mxu0 0
      %689 = vmatpush2.bf16.msra.mxu0 0
      %690 = vmatprep.subr.bf16.mxu0 0
      %691 = vmatpush2.bf16.msra.mxu0 0
      %692 = vmatprep.subr.bf16.mxu0 0
      %693 = vmatpush2.bf16.msra.mxu0 0
      %694 = vmatprep.subr.bf16.mxu0 0
      %695 = vmatpush2.bf16.msra.mxu0 0
      %696 = vmatprep.mubr.bf16.mxu0 0
      %697 = vmatmul.mubr.bf16.gmra.mxu0 %v608
      %v698 = vpop.f32.mrf.mxu0
      %v699 = vadd.f32 0.0, %v698
      %v700 = vpop.f32.mrf.mxu0
      %v701 = vadd.f32 0.0, %v700
      %v702 = vpop.f32.mrf.mxu0
      %v703 = vadd.f32 0.0, %v702
      %v704 = vpop.f32.mrf.mxu0
      %v705 = vadd.f32 0.0, %v704
      %706 = vdwg.mxu0
      %v707 = vadd.f32 %v530, %v656
      %v708 = vadd.f32 %v532, %v658
      %v709 = vadd.f32 %v573, %v699
      %v710 = vadd.f32 %v575, %v701
      %v711 = vadd.f32 %v534, %v660
      %v712 = vadd.f32 %v536, %v662
      %v713 = vadd.f32 %v577, %v703
      %v714 = vadd.f32 %v579, %v705
      %s715 = scalar_lea.vmem %s305, 24
      %v716 = vld [vmem:[%s715] sm:$0xf]
      %v717 = vld [vmem:[%s715 + $0x4] sm:$0xf]
      %718 = vrot.lane.b32.xlu0 %v322, 113
      %v719 = vpop.permute.xlu0 %718
      %720 = vrot.lane.b32.xlu0 %v329, 1
      %v721 = vpop.permute.xlu0 %720
      %722 = vrot.lane.b32.xlu0 %v330, 1
      %v723 = vpop.permute.xlu0 %722
      %724 = vrot.lane.b32.xlu0 %v331, 1
      %v725 = vpop.permute.xlu0 %724
      %726 = vrot.lane.b32.xlu0 %v322, 1
      %v727 = vpop.permute.xlu0 %726
      %vm728 = vcmask 7168
      %v729 = vsel %vm728, %v721, %v723
      %v730 = vsel %vm728, %v723, %v725
      %v731 = vsel %vm728, %v725, %v727
      %vm732 = vcmask 7168
      %v735 = vsel %vm732, %v719, %v721
      %v738 = vunpack.c.l.b16 %v716
      %v739 = vunpack.c.l.b16 %v717
      %v740 = vpack.c.b16 %v739, %v738
      %v742 = vsel %vm374, %v740, 0
      %v744 = vsel %vm378, %v735, 0
      %v747 = vsel %vm378, %v729, 0
      %v750 = vsel %vm378, %v730, 0
      %v753 = vsel %vm378, %v731, 0
      %755 = vmatprep.subr.bf16.mxu0 0
      %756 = vmatpush1.bf16.msra.mxu0 0
      %757 = vmatprep.subr.bf16.mxu0 0
      %758 = vmatpush1.bf16.msra.mxu0 0
      %759 = vmatprep.subr.bf16.mxu0 0
      %760 = vmatpush1.bf16.msra.mxu0 0
      %761 = vmatprep.subr.bf16.mxu0 0
      %762 = vmatpush1.bf16.msra.mxu0 0
      %763 = vmatprep.subr.bf16.mxu0 0
      %764 = vmatpush1.bf16.msra.mxu0 0
      %765 = vmatprep.subr.bf16.mxu0 0
      %766 = vmatpush1.bf16.msra.mxu0 0
      %767 = vmatprep.subr.bf16.mxu0 0
      %768 = vmatpush1.bf16.msra.mxu0 0
      %769 = vmatprep.subr.bf16.mxu0 %v747
      %770 = vmatpush1.bf16.msra.mxu0 %v744
      %771 = vmatprep.subr.bf16.mxu0 0
      %772 = vmatpush2.bf16.msra.mxu0 0
      %773 = vmatprep.subr.bf16.mxu0 0
      %774 = vmatpush2.bf16.msra.mxu0 0
      %775 = vmatprep.subr.bf16.mxu0 0
      %776 = vmatpush2.bf16.msra.mxu0 0
      %777 = vmatprep.subr.bf16.mxu0 0
      %778 = vmatpush2.bf16.msra.mxu0 0
      %779 = vmatprep.subr.bf16.mxu0 0
      %780 = vmatpush2.bf16.msra.mxu0 0
      %781 = vmatprep.subr.bf16.mxu0 0
      %782 = vmatpush2.bf16.msra.mxu0 0
      %783 = vmatprep.subr.bf16.mxu0 0
      %784 = vmatpush2.bf16.msra.mxu0 0
      %785 = vmatprep.subr.bf16.mxu0 0
      %786 = vmatpush2.bf16.msra.mxu0 0
      %787 = vmatprep.mubr.bf16.mxu0 0
      %788 = vmatmul.mubr.bf16.gmra.mxu0 %v742
      %v789 = vpop.f32.mrf.mxu0
      %v790 = vadd.f32 0.0, %v789
      %v791 = vpop.f32.mrf.mxu0
      %v792 = vadd.f32 0.0, %v791
      %v793 = vpop.f32.mrf.mxu0
      %v794 = vadd.f32 0.0, %v793
      %v795 = vpop.f32.mrf.mxu0
      %v796 = vadd.f32 0.0, %v795
      %797 = vdwg.mxu0
      %798 = vmatprep.subr.bf16.mxu0 0
      %799 = vmatpush1.bf16.msra.mxu0 0
      %800 = vmatprep.subr.bf16.mxu0 0
      %801 = vmatpush1.bf16.msra.mxu0 0
      %802 = vmatprep.subr.bf16.mxu0 0
      %803 = vmatpush1.bf16.msra.mxu0 0
      %804 = vmatprep.subr.bf16.mxu0 0
      %805 = vmatpush1.bf16.msra.mxu0 0
      %806 = vmatprep.subr.bf16.mxu0 0
      %807 = vmatpush1.bf16.msra.mxu0 0
      %808 = vmatprep.subr.bf16.mxu0 0
      %809 = vmatpush1.bf16.msra.mxu0 0
      %810 = vmatprep.subr.bf16.mxu0 0
      %811 = vmatpush1.bf16.msra.mxu0 0
      %812 = vmatprep.subr.bf16.mxu0 %v753
      %813 = vmatpush1.bf16.msra.mxu0 %v750
      %814 = vmatprep.subr.bf16.mxu0 0
      %815 = vmatpush2.bf16.msra.mxu0 0
      %816 = vmatprep.subr.bf16.mxu0 0
      %817 = vmatpush2.bf16.msra.mxu0 0
      %818 = vmatprep.subr.bf16.mxu0 0
      %819 = vmatpush2.bf16.msra.mxu0 0
      %820 = vmatprep.subr.bf16.mxu0 0
      %821 = vmatpush2.bf16.msra.mxu0 0
      %822 = vmatprep.subr.bf16.mxu0 0
      %823 = vmatpush2.bf16.msra.mxu0 0
      %824 = vmatprep.subr.bf16.mxu0 0
      %825 = vmatpush2.bf16.msra.mxu0 0
      %826 = vmatprep.subr.bf16.mxu0 0
      %827 = vmatpush2.bf16.msra.mxu0 0
      %828 = vmatprep.subr.bf16.mxu0 0
      %829 = vmatpush2.bf16.msra.mxu0 0
      %830 = vmatprep.mubr.bf16.mxu0 0
      %831 = vmatmul.mubr.bf16.gmra.mxu0 %v742
      %v832 = vpop.f32.mrf.mxu0
      %v833 = vadd.f32 0.0, %v832
      %v834 = vpop.f32.mrf.mxu0
      %v835 = vadd.f32 0.0, %v834
      %v836 = vpop.f32.mrf.mxu0
      %v837 = vadd.f32 0.0, %v836
      %v838 = vpop.f32.mrf.mxu0
      %v839 = vadd.f32 0.0, %v838
      %840 = vdwg.mxu0
      %v841 = vadd.f32 %v707, %v790
      %v842 = vadd.f32 %v708, %v792
      %v843 = vadd.f32 %v709, %v833
      %v844 = vadd.f32 %v710, %v835
      %v845 = vadd.f32 %v711, %v794
      %v846 = vadd.f32 %v712, %v796
      %v847 = vadd.f32 %v713, %v837
      %v848 = vadd.f32 %v714, %v839
      %s849 = scalar_lea.vmem %s305, 32
      %v850 = vld [vmem:[%s849] sm:$0xf]
      %v851 = vld [vmem:[%s849 + $0x4] sm:$0xf]
      %v854 = vunpack.c.l.b16 %v850
      %v855 = vunpack.c.l.b16 %v851
      %v856 = vpack.c.b16 %v855, %v854
      %v858 = vsel %vm374, %v856, 0
      %v861 = vsel %vm378, %v329, 0
      %v864 = vsel %vm378, %v330, 0
      %v867 = vsel %vm378, %v331, 0
      %v870 = vsel %vm378, %v322, 0
      %872 = vmatprep.subr.bf16.mxu0 0
      %873 = vmatpush1.bf16.msra.mxu0 0
      %874 = vmatprep.subr.bf16.mxu0 0
      %875 = vmatpush1.bf16.msra.mxu0 0
      %876 = vmatprep.subr.bf16.mxu0 0
      %877 = vmatpush1.bf16.msra.mxu0 0
      %878 = vmatprep.subr.bf16.mxu0 0
      %879 = vmatpush1.bf16.msra.mxu0 0
      %880 = vmatprep.subr.bf16.mxu0 0
      %881 = vmatpush1.bf16.msra.mxu0 0
      %882 = vmatprep.subr.bf16.mxu0 0
      %883 = vmatpush1.bf16.msra.mxu0 0
      %884 = vmatprep.subr.bf16.mxu0 0
      %885 = vmatpush1.bf16.msra.mxu0 0
      %886 = vmatprep.subr.bf16.mxu0 %v864
      %887 = vmatpush1.bf16.msra.mxu0 %v861
      %888 = vmatprep.subr.bf16.mxu0 0
      %889 = vmatpush2.bf16.msra.mxu0 0
      %890 = vmatprep.subr.bf16.mxu0 0
      %891 = vmatpush2.bf16.msra.mxu0 0
      %892 = vmatprep.subr.bf16.mxu0 0
      %893 = vmatpush2.bf16.msra.mxu0 0
      %894 = vmatprep.subr.bf16.mxu0 0
      %895 = vmatpush2.bf16.msra.mxu0 0
      %896 = vmatprep.subr.bf16.mxu0 0
      %897 = vmatpush2.bf16.msra.mxu0 0
      %898 = vmatprep.subr.bf16.mxu0 0
      %899 = vmatpush2.bf16.msra.mxu0 0
      %900 = vmatprep.subr.bf16.mxu0 0
      %901 = vmatpush2.bf16.msra.mxu0 0
      %902 = vmatprep.subr.bf16.mxu0 0
      %903 = vmatpush2.bf16.msra.mxu0 0
      %904 = vmatprep.mubr.bf16.mxu0 0
      %905 = vmatmul.mubr.bf16.gmra.mxu0 %v858
      %v906 = vpop.f32.mrf.mxu0
      %v907 = vadd.f32 0.0, %v906
      %v908 = vpop.f32.mrf.mxu0
      %v909 = vadd.f32 0.0, %v908
      %v910 = vpop.f32.mrf.mxu0
      %v911 = vadd.f32 0.0, %v910
      %v912 = vpop.f32.mrf.mxu0
      %v913 = vadd.f32 0.0, %v912
      %914 = vdwg.mxu0
      %915 = vmatprep.subr.bf16.mxu0 0
      %916 = vmatpush1.bf16.msra.mxu0 0
      %917 = vmatprep.subr.bf16.mxu0 0
      %918 = vmatpush1.bf16.msra.mxu0 0
      %919 = vmatprep.subr.bf16.mxu0 0
      %920 = vmatpush1.bf16.msra.mxu0 0
      %921 = vmatprep.subr.bf16.mxu0 0
      %922 = vmatpush1.bf16.msra.mxu0 0
      %923 = vmatprep.subr.bf16.mxu0 0
      %924 = vmatpush1.bf16.msra.mxu0 0
      %925 = vmatprep.subr.bf16.mxu0 0
      %926 = vmatpush1.bf16.msra.mxu0 0
      %927 = vmatprep.subr.bf16.mxu0 0
      %928 = vmatpush1.bf16.msra.mxu0 0
      %929 = vmatprep.subr.bf16.mxu0 %v870
      %930 = vmatpush1.bf16.msra.mxu0 %v867
      %931 = vmatprep.subr.bf16.mxu0 0
      %932 = vmatpush2.bf16.msra.mxu0 0
      %933 = vmatprep.subr.bf16.mxu0 0
      %934 = vmatpush2.bf16.msra.mxu0 0
      %935 = vmatprep.subr.bf16.mxu0 0
      %936 = vmatpush2.bf16.msra.mxu0 0
      %937 = vmatprep.subr.bf16.mxu0 0
      %938 = vmatpush2.bf16.msra.mxu0 0
      %939 = vmatprep.subr.bf16.mxu0 0
      %940 = vmatpush2.bf16.msra.mxu0 0
      %941 = vmatprep.subr.bf16.mxu0 0
      %942 = vmatpush2.bf16.msra.mxu0 0
      %943 = vmatprep.subr.bf16.mxu0 0
      %944 = vmatpush2.bf16.msra.mxu0 0
      %945 = vmatprep.subr.bf16.mxu0 0
      %946 = vmatpush2.bf16.msra.mxu0 0
      %947 = vmatprep.mubr.bf16.mxu0 0
      %948 = vmatmul.mubr.bf16.gmra.mxu0 %v858
      %v949 = vpop.f32.mrf.mxu0
      %v950 = vadd.f32 0.0, %v949
      %v951 = vpop.f32.mrf.mxu0
      %v952 = vadd.f32 0.0, %v951
      %v953 = vpop.f32.mrf.mxu0
      %v954 = vadd.f32 0.0, %v953
      %v955 = vpop.f32.mrf.mxu0
      %v956 = vadd.f32 0.0, %v955
      %957 = vdwg.mxu0
      %v958 = vadd.f32 %v841, %v907
      %v959 = vadd.f32 %v842, %v909
      %v960 = vadd.f32 %v843, %v950
      %v961 = vadd.f32 %v844, %v952
      %v962 = vadd.f32 %v845, %v911
      %v963 = vadd.f32 %v846, %v913
      %v964 = vadd.f32 %v847, %v954
      %v965 = vadd.f32 %v848, %v956
      %s966 = scalar_lea.vmem %s305, 40
      %v967 = vld [vmem:[%s966] sm:$0xf]
      %v968 = vld [vmem:[%s966 + $0x4] sm:$0xf]
      %969 = vrot.lane.b32.xlu0 %v329, 127
      %v970 = vpop.permute.xlu0 %969
      %971 = vrot.lane.b32.xlu0 %v330, 127
      %v972 = vpop.permute.xlu0 %971
      %973 = vrot.lane.b32.xlu0 %v331, 127
      %v974 = vpop.permute.xlu0 %973
      %975 = vrot.lane.b32.xlu0 %v322, 127
      %v976 = vpop.permute.xlu0 %975
      %vm977 = vcmask 1039360
      %v978 = vsel %vm977, %v970, %v972
      %v979 = vsel %vm977, %v972, %v974
      %v980 = vsel %vm977, %v974, %v976
      %981 = vrot.lane.b32.xlu0 %v329, 15
      %v982 = vpop.permute.xlu0 %981
      %vm983 = vcmask 121856
      %v986 = vsel %vm983, %v976, %v982
      %v989 = vunpack.c.l.b16 %v967
      %v990 = vunpack.c.l.b16 %v968
      %v991 = vpack.c.b16 %v990, %v989
      %v993 = vsel %vm374, %v991, 0
      %v996 = vsel %vm378, %v978, 0
      %v999 = vsel %vm378, %v979, 0
      %v1002 = vsel %vm378, %v980, 0
      %v1004 = vsel %vm378, %v986, 0
      %1006 = vmatprep.subr.bf16.mxu0 0
      %1007 = vmatpush1.bf16.msra.mxu0 0
      %1008 = vmatprep.subr.bf16.mxu0 0
      %1009 = vmatpush1.bf16.msra.mxu0 0
      %1010 = vmatprep.subr.bf16.mxu0 0
      %1011 = vmatpush1.bf16.msra.mxu0 0
      %1012 = vmatprep.subr.bf16.mxu0 0
      %1013 = vmatpush1.bf16.msra.mxu0 0
      %1014 = vmatprep.subr.bf16.mxu0 0
      %1015 = vmatpush1.bf16.msra.mxu0 0
      %1016 = vmatprep.subr.bf16.mxu0 0
      %1017 = vmatpush1.bf16.msra.mxu0 0
      %1018 = vmatprep.subr.bf16.mxu0 0
      %1019 = vmatpush1.bf16.msra.mxu0 0
      %1020 = vmatprep.subr.bf16.mxu0 %v999
      %1021 = vmatpush1.bf16.msra.mxu0 %v996
      %1022 = vmatprep.subr.bf16.mxu0 0
      %1023 = vmatpush2.bf16.msra.mxu0 0
      %1024 = vmatprep.subr.bf16.mxu0 0
      %1025 = vmatpush2.bf16.msra.mxu0 0
      %1026 = vmatprep.subr.bf16.mxu0 0
      %1027 = vmatpush2.bf16.msra.mxu0 0
      %1028 = vmatprep.subr.bf16.mxu0 0
      %1029 = vmatpush2.bf16.msra.mxu0 0
      %1030 = vmatprep.subr.bf16.mxu0 0
      %1031 = vmatpush2.bf16.msra.mxu0 0
      %1032 = vmatprep.subr.bf16.mxu0 0
      %1033 = vmatpush2.bf16.msra.mxu0 0
      %1034 = vmatprep.subr.bf16.mxu0 0
      %1035 = vmatpush2.bf16.msra.mxu0 0
      %1036 = vmatprep.subr.bf16.mxu0 0
      %1037 = vmatpush2.bf16.msra.mxu0 0
      %1038 = vmatprep.mubr.bf16.mxu0 0
      %1039 = vmatmul.mubr.bf16.gmra.mxu0 %v993
      %v1040 = vpop.f32.mrf.mxu0
      %v1041 = vadd.f32 0.0, %v1040
      %v1042 = vpop.f32.mrf.mxu0
      %v1043 = vadd.f32 0.0, %v1042
      %v1044 = vpop.f32.mrf.mxu0
      %v1045 = vadd.f32 0.0, %v1044
      %v1046 = vpop.f32.mrf.mxu0
      %v1047 = vadd.f32 0.0, %v1046
      %1048 = vdwg.mxu0
      %1049 = vmatprep.subr.bf16.mxu0 0
      %1050 = vmatpush1.bf16.msra.mxu0 0
      %1051 = vmatprep.subr.bf16.mxu0 0
      %1052 = vmatpush1.bf16.msra.mxu0 0
      %1053 = vmatprep.subr.bf16.mxu0 0
      %1054 = vmatpush1.bf16.msra.mxu0 0
      %1055 = vmatprep.subr.bf16.mxu0 0
      %1056 = vmatpush1.bf16.msra.mxu0 0
      %1057 = vmatprep.subr.bf16.mxu0 0
      %1058 = vmatpush1.bf16.msra.mxu0 0
      %1059 = vmatprep.subr.bf16.mxu0 0
      %1060 = vmatpush1.bf16.msra.mxu0 0
      %1061 = vmatprep.subr.bf16.mxu0 0
      %1062 = vmatpush1.bf16.msra.mxu0 0
      %1063 = vmatprep.subr.bf16.mxu0 %v1004
      %1064 = vmatpush1.bf16.msra.mxu0 %v1002
      %1065 = vmatprep.subr.bf16.mxu0 0
      %1066 = vmatpush2.bf16.msra.mxu0 0
      %1067 = vmatprep.subr.bf16.mxu0 0
      %1068 = vmatpush2.bf16.msra.mxu0 0
      %1069 = vmatprep.subr.bf16.mxu0 0
      %1070 = vmatpush2.bf16.msra.mxu0 0
      %1071 = vmatprep.subr.bf16.mxu0 0
      %1072 = vmatpush2.bf16.msra.mxu0 0
      %1073 = vmatprep.subr.bf16.mxu0 0
      %1074 = vmatpush2.bf16.msra.mxu0 0
      %1075 = vmatprep.subr.bf16.mxu0 0
      %1076 = vmatpush2.bf16.msra.mxu0 0
      %1077 = vmatprep.subr.bf16.mxu0 0
      %1078 = vmatpush2.bf16.msra.mxu0 0
      %1079 = vmatprep.subr.bf16.mxu0 0
      %1080 = vmatpush2.bf16.msra.mxu0 0
      %1081 = vmatprep.mubr.bf16.mxu0 0
      %1082 = vmatmul.mubr.bf16.gmra.mxu0 %v993
      %v1083 = vpop.f32.mrf.mxu0
      %v1084 = vadd.f32 0.0, %v1083
      %v1085 = vpop.f32.mrf.mxu0
      %v1086 = vadd.f32 0.0, %v1085
      %v1087 = vpop.f32.mrf.mxu0
      %v1088 = vadd.f32 0.0, %v1087
      %v1089 = vpop.f32.mrf.mxu0
      %v1090 = vadd.f32 0.0, %v1089
      %1091 = vdwg.mxu0
      %v1092 = vadd.f32 %v958, %v1041
      %v1093 = vadd.f32 %v959, %v1043
      %v1094 = vadd.f32 %v960, %v1084
      %v1095 = vadd.f32 %v961, %v1086
      %v1096 = vadd.f32 %v962, %v1045
      %v1097 = vadd.f32 %v963, %v1047
      %v1098 = vadd.f32 %v964, %v1088
      %v1099 = vadd.f32 %v965, %v1090
      %s1100 = scalar_lea.vmem %s305, 48
      %v1101 = vld [vmem:[%s1100] sm:$0xf]
      %v1102 = vld [vmem:[%s1100 + $0x4] sm:$0xf]
      %1103 = vrot.lane.b32.xlu0 %v329, 119
      %v1104 = vpop.permute.xlu0 %1103
      %1105 = vrot.lane.b32.xlu0 %v330, 119
      %v1106 = vpop.permute.xlu0 %1105
      %1107 = vrot.lane.b32.xlu0 %v331, 119
      %v1108 = vpop.permute.xlu0 %1107
      %1109 = vrot.lane.b32.xlu0 %v322, 119
      %v1110 = vpop.permute.xlu0 %1109
      %vm1111 = vcmask 973824
      %v1112 = vsel %vm1111, %v1104, %v1106
      %v1113 = vsel %vm1111, %v1106, %v1108
      %v1114 = vsel %vm1111, %v1108, %v1110
      %1115 = vrot.lane.b32.xlu0 %v329, 7
      %v1116 = vpop.permute.xlu0 %1115
      %vm1117 = vcmask 56320
      %v1120 = vsel %vm1117, %v1110, %v1116
      %v1123 = vunpack.c.l.b16 %v1101
      %v1124 = vunpack.c.l.b16 %v1102
      %v1125 = vpack.c.b16 %v1124, %v1123
      %v1127 = vsel %vm374, %v1125, 0
      %v1130 = vsel %vm378, %v1112, 0
      %v1133 = vsel %vm378, %v1113, 0
      %v1136 = vsel %vm378, %v1114, 0
      %v1138 = vsel %vm378, %v1120, 0
      %1140 = vmatprep.subr.bf16.mxu0 0
      %1141 = vmatpush1.bf16.msra.mxu0 0
      %1142 = vmatprep.subr.bf16.mxu0 0
      %1143 = vmatpush1.bf16.msra.mxu0 0
      %1144 = vmatprep.subr.bf16.mxu0 0
      %1145 = vmatpush1.bf16.msra.mxu0 0
      %1146 = vmatprep.subr.bf16.mxu0 0
      %1147 = vmatpush1.bf16.msra.mxu0 0
      %1148 = vmatprep.subr.bf16.mxu0 0
      %1149 = vmatpush1.bf16.msra.mxu0 0
      %1150 = vmatprep.subr.bf16.mxu0 0
      %1151 = vmatpush1.bf16.msra.mxu0 0
      %1152 = vmatprep.subr.bf16.mxu0 0
      %1153 = vmatpush1.bf16.msra.mxu0 0
      %1154 = vmatprep.subr.bf16.mxu0 %v1133
      %1155 = vmatpush1.bf16.msra.mxu0 %v1130
      %1156 = vmatprep.subr.bf16.mxu0 0
      %1157 = vmatpush2.bf16.msra.mxu0 0
      %1158 = vmatprep.subr.bf16.mxu0 0
      %1159 = vmatpush2.bf16.msra.mxu0 0
      %1160 = vmatprep.subr.bf16.mxu0 0
      %1161 = vmatpush2.bf16.msra.mxu0 0
      %1162 = vmatprep.subr.bf16.mxu0 0
      %1163 = vmatpush2.bf16.msra.mxu0 0
      %1164 = vmatprep.subr.bf16.mxu0 0
      %1165 = vmatpush2.bf16.msra.mxu0 0
      %1166 = vmatprep.subr.bf16.mxu0 0
      %1167 = vmatpush2.bf16.msra.mxu0 0
      %1168 = vmatprep.subr.bf16.mxu0 0
      %1169 = vmatpush2.bf16.msra.mxu0 0
      %1170 = vmatprep.subr.bf16.mxu0 0
      %1171 = vmatpush2.bf16.msra.mxu0 0
      %1172 = vmatprep.mubr.bf16.mxu0 0
      %1173 = vmatmul.mubr.bf16.gmra.mxu0 %v1127
      %v1174 = vpop.f32.mrf.mxu0
      %v1175 = vadd.f32 0.0, %v1174
      %v1176 = vpop.f32.mrf.mxu0
      %v1177 = vadd.f32 0.0, %v1176
      %v1178 = vpop.f32.mrf.mxu0
      %v1179 = vadd.f32 0.0, %v1178
      %v1180 = vpop.f32.mrf.mxu0
      %v1181 = vadd.f32 0.0, %v1180
      %1182 = vdwg.mxu0
      %1183 = vmatprep.subr.bf16.mxu0 0
      %1184 = vmatpush1.bf16.msra.mxu0 0
      %1185 = vmatprep.subr.bf16.mxu0 0
      %1186 = vmatpush1.bf16.msra.mxu0 0
      %1187 = vmatprep.subr.bf16.mxu0 0
      %1188 = vmatpush1.bf16.msra.mxu0 0
      %1189 = vmatprep.subr.bf16.mxu0 0
      %1190 = vmatpush1.bf16.msra.mxu0 0
      %1191 = vmatprep.subr.bf16.mxu0 0
      %1192 = vmatpush1.bf16.msra.mxu0 0
      %1193 = vmatprep.subr.bf16.mxu0 0
      %1194 = vmatpush1.bf16.msra.mxu0 0
      %1195 = vmatprep.subr.bf16.mxu0 0
      %1196 = vmatpush1.bf16.msra.mxu0 0
      %1197 = vmatprep.subr.bf16.mxu0 %v1138
      %1198 = vmatpush1.bf16.msra.mxu0 %v1136
      %1199 = vmatprep.subr.bf16.mxu0 0
      %1200 = vmatpush2.bf16.msra.mxu0 0
      %1201 = vmatprep.subr.bf16.mxu0 0
      %1202 = vmatpush2.bf16.msra.mxu0 0
      %1203 = vmatprep.subr.bf16.mxu0 0
      %1204 = vmatpush2.bf16.msra.mxu0 0
      %1205 = vmatprep.subr.bf16.mxu0 0
      %1206 = vmatpush2.bf16.msra.mxu0 0
      %1207 = vmatprep.subr.bf16.mxu0 0
      %1208 = vmatpush2.bf16.msra.mxu0 0
      %1209 = vmatprep.subr.bf16.mxu0 0
      %1210 = vmatpush2.bf16.msra.mxu0 0
      %1211 = vmatprep.subr.bf16.mxu0 0
      %1212 = vmatpush2.bf16.msra.mxu0 0
      %1213 = vmatprep.subr.bf16.mxu0 0
      %1214 = vmatpush2.bf16.msra.mxu0 0
      %1215 = vmatprep.mubr.bf16.mxu0 0
      %1216 = vmatmul.mubr.bf16.gmra.mxu0 %v1127
      %v1217 = vpop.f32.mrf.mxu0
      %v1218 = vadd.f32 0.0, %v1217
      %v1219 = vpop.f32.mrf.mxu0
      %v1220 = vadd.f32 0.0, %v1219
      %v1221 = vpop.f32.mrf.mxu0
      %v1222 = vadd.f32 0.0, %v1221
      %v1223 = vpop.f32.mrf.mxu0
      %v1224 = vadd.f32 0.0, %v1223
      %1225 = vdwg.mxu0
      %v1226 = vadd.f32 %v1092, %v1175
      %v1227 = vadd.f32 %v1093, %v1177
      %v1228 = vadd.f32 %v1094, %v1218
      %v1229 = vadd.f32 %v1095, %v1220
      %v1230 = vadd.f32 %v1096, %v1179
      %v1231 = vadd.f32 %v1097, %v1181
      %v1232 = vadd.f32 %v1098, %v1222
      %v1233 = vadd.f32 %v1099, %v1224
      %s1234 = scalar_lea.vmem %s305, 56
      %v1235 = vld [vmem:[%s1234] sm:$0xf]
      %v1236 = vld [vmem:[%s1234 + $0x4] sm:$0xf]
      %1237 = vrot.lane.b32.xlu0 %v329, 118
      %v1238 = vpop.permute.xlu0 %1237
      %1239 = vrot.lane.b32.xlu0 %v330, 118
      %v1240 = vpop.permute.xlu0 %1239
      %1241 = vrot.lane.b32.xlu0 %v331, 118
      %v1242 = vpop.permute.xlu0 %1241
      %1243 = vrot.lane.b32.xlu0 %v322, 118
      %v1244 = vpop.permute.xlu0 %1243
      %vm1245 = vcmask 965632
      %v1246 = vsel %vm1245, %v1238, %v1240
      %v1247 = vsel %vm1245, %v1240, %v1242
      %v1248 = vsel %vm1245, %v1242, %v1244
      %1249 = vrot.lane.b32.xlu0 %v329, 6
      %v1250 = vpop.permute.xlu0 %1249
      %vm1251 = vcmask 48128
      %v1254 = vsel %vm1251, %v1244, %v1250
      %v1257 = vunpack.c.l.b16 %v1235
      %v1258 = vunpack.c.l.b16 %v1236
      %v1259 = vpack.c.b16 %v1258, %v1257
      %v1261 = vsel %vm374, %v1259, 0
      %v1264 = vsel %vm378, %v1246, 0
      %v1267 = vsel %vm378, %v1247, 0
      %v1270 = vsel %vm378, %v1248, 0
      %v1272 = vsel %vm378, %v1254, 0
      %1274 = vmatprep.subr.bf16.mxu0 0
      %1275 = vmatpush1.bf16.msra.mxu0 0
      %1276 = vmatprep.subr.bf16.mxu0 0
      %1277 = vmatpush1.bf16.msra.mxu0 0
      %1278 = vmatprep.subr.bf16.mxu0 0
      %1279 = vmatpush1.bf16.msra.mxu0 0
      %1280 = vmatprep.subr.bf16.mxu0 0
      %1281 = vmatpush1.bf16.msra.mxu0 0
      %1282 = vmatprep.subr.bf16.mxu0 0
      %1283 = vmatpush1.bf16.msra.mxu0 0
      %1284 = vmatprep.subr.bf16.mxu0 0
      %1285 = vmatpush1.bf16.msra.mxu0 0
      %1286 = vmatprep.subr.bf16.mxu0 0
      %1287 = vmatpush1.bf16.msra.mxu0 0
      %1288 = vmatprep.subr.bf16.mxu0 %v1267
      %1289 = vmatpush1.bf16.msra.mxu0 %v1264
      %1290 = vmatprep.subr.bf16.mxu0 0
      %1291 = vmatpush2.bf16.msra.mxu0 0
      %1292 = vmatprep.subr.bf16.mxu0 0
      %1293 = vmatpush2.bf16.msra.mxu0 0
      %1294 = vmatprep.subr.bf16.mxu0 0
      %1295 = vmatpush2.bf16.msra.mxu0 0
      %1296 = vmatprep.subr.bf16.mxu0 0
      %1297 = vmatpush2.bf16.msra.mxu0 0
      %1298 = vmatprep.subr.bf16.mxu0 0
      %1299 = vmatpush2.bf16.msra.mxu0 0
      %1300 = vmatprep.subr.bf16.mxu0 0
      %1301 = vmatpush2.bf16.msra.mxu0 0
      %1302 = vmatprep.subr.bf16.mxu0 0
      %1303 = vmatpush2.bf16.msra.mxu0 0
      %1304 = vmatprep.subr.bf16.mxu0 0
      %1305 = vmatpush2.bf16.msra.mxu0 0
      %1306 = vmatprep.mubr.bf16.mxu0 0
      %1307 = vmatmul.mubr.bf16.gmra.mxu0 %v1261
      %v1308 = vpop.f32.mrf.mxu0
      %v1309 = vadd.f32 0.0, %v1308
      %v1310 = vpop.f32.mrf.mxu0
      %v1311 = vadd.f32 0.0, %v1310
      %v1312 = vpop.f32.mrf.mxu0
      %v1313 = vadd.f32 0.0, %v1312
      %v1314 = vpop.f32.mrf.mxu0
      %v1315 = vadd.f32 0.0, %v1314
      %1316 = vdwg.mxu0
      %1317 = vmatprep.subr.bf16.mxu0 0
      %1318 = vmatpush1.bf16.msra.mxu0 0
      %1319 = vmatprep.subr.bf16.mxu0 0
      %1320 = vmatpush1.bf16.msra.mxu0 0
      %1321 = vmatprep.subr.bf16.mxu0 0
      %1322 = vmatpush1.bf16.msra.mxu0 0
      %1323 = vmatprep.subr.bf16.mxu0 0
      %1324 = vmatpush1.bf16.msra.mxu0 0
      %1325 = vmatprep.subr.bf16.mxu0 0
      %1326 = vmatpush1.bf16.msra.mxu0 0
      %1327 = vmatprep.subr.bf16.mxu0 0
      %1328 = vmatpush1.bf16.msra.mxu0 0
      %1329 = vmatprep.subr.bf16.mxu0 0
      %1330 = vmatpush1.bf16.msra.mxu0 0
      %1331 = vmatprep.subr.bf16.mxu0 %v1272
      %1332 = vmatpush1.bf16.msra.mxu0 %v1270
      %1333 = vmatprep.subr.bf16.mxu0 0
      %1334 = vmatpush2.bf16.msra.mxu0 0
      %1335 = vmatprep.subr.bf16.mxu0 0
      %1336 = vmatpush2.bf16.msra.mxu0 0
      %1337 = vmatprep.subr.bf16.mxu0 0
      %1338 = vmatpush2.bf16.msra.mxu0 0
      %1339 = vmatprep.subr.bf16.mxu0 0
      %1340 = vmatpush2.bf16.msra.mxu0 0
      %1341 = vmatprep.subr.bf16.mxu0 0
      %1342 = vmatpush2.bf16.msra.mxu0 0
      %1343 = vmatprep.subr.bf16.mxu0 0
      %1344 = vmatpush2.bf16.msra.mxu0 0
      %1345 = vmatprep.subr.bf16.mxu0 0
      %1346 = vmatpush2.bf16.msra.mxu0 0
      %1347 = vmatprep.subr.bf16.mxu0 0
      %1348 = vmatpush2.bf16.msra.mxu0 0
      %1349 = vmatprep.mubr.bf16.mxu0 0
      %1350 = vmatmul.mubr.bf16.gmra.mxu0 %v1261
      %v1351 = vpop.f32.mrf.mxu0
      %v1352 = vadd.f32 0.0, %v1351
      %v1353 = vpop.f32.mrf.mxu0
      %v1354 = vadd.f32 0.0, %v1353
      %v1355 = vpop.f32.mrf.mxu0
      %v1356 = vadd.f32 0.0, %v1355
      %v1357 = vpop.f32.mrf.mxu0
      %v1358 = vadd.f32 0.0, %v1357
      %1359 = vdwg.mxu0
      %v1360 = vadd.f32 %v1226, %v1309
      %v1361 = vadd.f32 %v1227, %v1311
      %v1362 = vadd.f32 %v1228, %v1352
      %v1363 = vadd.f32 %v1229, %v1354
      %v1364 = vadd.f32 %v1230, %v1313
      %v1365 = vadd.f32 %v1231, %v1315
      %v1366 = vadd.f32 %v1232, %v1356
      %v1367 = vadd.f32 %v1233, %v1358
      %s1368 = scalar_lea.vmem %s305, 64
      %v1369 = vld [vmem:[%s1368] sm:$0xf]
      %v1370 = vld [vmem:[%s1368 + $0x4] sm:$0xf]
      %1371 = vrot.lane.b32.xlu0 %v329, 117
      %v1372 = vpop.permute.xlu0 %1371
      %1373 = vrot.lane.b32.xlu0 %v330, 117
      %v1374 = vpop.permute.xlu0 %1373
      %1375 = vrot.lane.b32.xlu0 %v331, 117
      %v1376 = vpop.permute.xlu0 %1375
      %1377 = vrot.lane.b32.xlu0 %v322, 117
      %v1378 = vpop.permute.xlu0 %1377
      %vm1379 = vcmask 957440
      %v1380 = vsel %vm1379, %v1372, %v1374
      %v1381 = vsel %vm1379, %v1374, %v1376
      %v1382 = vsel %vm1379, %v1376, %v1378
      %1383 = vrot.lane.b32.xlu0 %v329, 5
      %v1384 = vpop.permute.xlu0 %1383
      %vm1385 = vcmask 39936
      %v1388 = vsel %vm1385, %v1378, %v1384
      %v1391 = vunpack.c.l.b16 %v1369
      %v1392 = vunpack.c.l.b16 %v1370
      %v1393 = vpack.c.b16 %v1392, %v1391
      %v1395 = vsel %vm374, %v1393, 0
      %v1398 = vsel %vm378, %v1380, 0
      %v1401 = vsel %vm378, %v1381, 0
      %v1404 = vsel %vm378, %v1382, 0
      %v1406 = vsel %vm378, %v1388, 0
      %1408 = vmatprep.subr.bf16.mxu0 0
      %1409 = vmatpush1.bf16.msra.mxu0 0
      %1410 = vmatprep.subr.bf16.mxu0 0
      %1411 = vmatpush1.bf16.msra.mxu0 0
      %1412 = vmatprep.subr.bf16.mxu0 0
      %1413 = vmatpush1.bf16.msra.mxu0 0
      %1414 = vmatprep.subr.bf16.mxu0 0
      %1415 = vmatpush1.bf16.msra.mxu0 0
      %1416 = vmatprep.subr.bf16.mxu0 0
      %1417 = vmatpush1.bf16.msra.mxu0 0
      %1418 = vmatprep.subr.bf16.mxu0 0
      %1419 = vmatpush1.bf16.msra.mxu0 0
      %1420 = vmatprep.subr.bf16.mxu0 0
      %1421 = vmatpush1.bf16.msra.mxu0 0
      %1422 = vmatprep.subr.bf16.mxu0 %v1401
      %1423 = vmatpush1.bf16.msra.mxu0 %v1398
      %1424 = vmatprep.subr.bf16.mxu0 0
      %1425 = vmatpush2.bf16.msra.mxu0 0
      %1426 = vmatprep.subr.bf16.mxu0 0
      %1427 = vmatpush2.bf16.msra.mxu0 0
      %1428 = vmatprep.subr.bf16.mxu0 0
      %1429 = vmatpush2.bf16.msra.mxu0 0
      %1430 = vmatprep.subr.bf16.mxu0 0
      %1431 = vmatpush2.bf16.msra.mxu0 0
      %1432 = vmatprep.subr.bf16.mxu0 0
      %1433 = vmatpush2.bf16.msra.mxu0 0
      %1434 = vmatprep.subr.bf16.mxu0 0
      %1435 = vmatpush2.bf16.msra.mxu0 0
      %1436 = vmatprep.subr.bf16.mxu0 0
      %1437 = vmatpush2.bf16.msra.mxu0 0
      %1438 = vmatprep.subr.bf16.mxu0 0
      %1439 = vmatpush2.bf16.msra.mxu0 0
      %1440 = vmatprep.mubr.bf16.mxu0 0
      %1441 = vmatmul.mubr.bf16.gmra.mxu0 %v1395
      %v1442 = vpop.f32.mrf.mxu0
      %v1443 = vadd.f32 0.0, %v1442
      %v1444 = vpop.f32.mrf.mxu0
      %v1445 = vadd.f32 0.0, %v1444
      %v1446 = vpop.f32.mrf.mxu0
      %v1447 = vadd.f32 0.0, %v1446
      %v1448 = vpop.f32.mrf.mxu0
      %v1449 = vadd.f32 0.0, %v1448
      %1450 = vdwg.mxu0
      %1451 = vmatprep.subr.bf16.mxu0 0
      %1452 = vmatpush1.bf16.msra.mxu0 0
      %1453 = vmatprep.subr.bf16.mxu0 0
      %1454 = vmatpush1.bf16.msra.mxu0 0
      %1455 = vmatprep.subr.bf16.mxu0 0
      %1456 = vmatpush1.bf16.msra.mxu0 0
      %1457 = vmatprep.subr.bf16.mxu0 0
      %1458 = vmatpush1.bf16.msra.mxu0 0
      %1459 = vmatprep.subr.bf16.mxu0 0
      %1460 = vmatpush1.bf16.msra.mxu0 0
      %1461 = vmatprep.subr.bf16.mxu0 0
      %1462 = vmatpush1.bf16.msra.mxu0 0
      %1463 = vmatprep.subr.bf16.mxu0 0
      %1464 = vmatpush1.bf16.msra.mxu0 0
      %1465 = vmatprep.subr.bf16.mxu0 %v1406
      %1466 = vmatpush1.bf16.msra.mxu0 %v1404
      %1467 = vmatprep.subr.bf16.mxu0 0
      %1468 = vmatpush2.bf16.msra.mxu0 0
      %1469 = vmatprep.subr.bf16.mxu0 0
      %1470 = vmatpush2.bf16.msra.mxu0 0
      %1471 = vmatprep.subr.bf16.mxu0 0
      %1472 = vmatpush2.bf16.msra.mxu0 0
      %1473 = vmatprep.subr.bf16.mxu0 0
      %1474 = vmatpush2.bf16.msra.mxu0 0
      %1475 = vmatprep.subr.bf16.mxu0 0
      %1476 = vmatpush2.bf16.msra.mxu0 0
      %1477 = vmatprep.subr.bf16.mxu0 0
      %1478 = vmatpush2.bf16.msra.mxu0 0
      %1479 = vmatprep.subr.bf16.mxu0 0
      %1480 = vmatpush2.bf16.msra.mxu0 0
      %1481 = vmatprep.subr.bf16.mxu0 0
      %1482 = vmatpush2.bf16.msra.mxu0 0
      %1483 = vmatprep.mubr.bf16.mxu0 0
      %1484 = vmatmul.mubr.bf16.gmra.mxu0 %v1395
      %v1485 = vpop.f32.mrf.mxu0
      %v1486 = vadd.f32 0.0, %v1485
      %v1487 = vpop.f32.mrf.mxu0
      %v1488 = vadd.f32 0.0, %v1487
      %v1489 = vpop.f32.mrf.mxu0
      %v1490 = vadd.f32 0.0, %v1489
      %v1491 = vpop.f32.mrf.mxu0
      %v1492 = vadd.f32 0.0, %v1491
      %1493 = vdwg.mxu0
      %v1494 = vadd.f32 %v1360, %v1443
      %v1495 = vadd.f32 %v1361, %v1445
      %v1496 = vadd.f32 %v1362, %v1486
      %v1497 = vadd.f32 %v1363, %v1488
      %v1498 = vadd.f32 %v1364, %v1447
      %v1499 = vadd.f32 %v1365, %v1449
      %v1500 = vadd.f32 %v1366, %v1490
      %v1501 = vadd.f32 %v1367, %v1492
      %s1502 = scalar_lea.vmem %s305, 72
      %v1503 = vld [vmem:[%s1502] sm:$0xf]
      %v1504 = vld [vmem:[%s1502 + $0x4] sm:$0xf]
      %1505 = vrot.lane.b32.xlu0 %v329, 39
      %v1506 = vpop.permute.xlu0 %1505
      %1507 = vrot.lane.b32.xlu0 %v330, 39
      %v1508 = vpop.permute.xlu0 %1507
      %1509 = vrot.lane.b32.xlu0 %v331, 39
      %v1510 = vpop.permute.xlu0 %1509
      %1511 = vrot.lane.b32.xlu0 %v322, 39
      %v1512 = vpop.permute.xlu0 %1511
      %vm1513 = vcmask 318464
      %v1514 = vsel %vm1513, %v1506, %v1508
      %v1515 = vsel %vm1513, %v1508, %v1510
      %v1516 = vsel %vm1513, %v1510, %v1512
      %1517 = vrot.lane.b32.xlu0 %v329, 55
      %v1518 = vpop.permute.xlu0 %1517
      %vm1519 = vcmask 449536
      %v1522 = vsel %vm1519, %v1516, %v1518
      %v1525 = vunpack.c.l.b16 %v1503
      %v1526 = vunpack.c.l.b16 %v1504
      %v1527 = vpack.c.b16 %v1526, %v1525
      %v1529 = vsel %vm374, %v1527, 0
      %v1532 = vsel %vm378, %v1514, 0
      %v1535 = vsel %vm378, %v1515, 0
      %v1537 = vsel %vm378, %v1522, 0
      %v1539 = vsel %vm378, %v1518, 0
      %1541 = vmatprep.subr.bf16.mxu0 0
      %1542 = vmatpush1.bf16.msra.mxu0 0
      %1543 = vmatprep.subr.bf16.mxu0 0
      %1544 = vmatpush1.bf16.msra.mxu0 0
      %1545 = vmatprep.subr.bf16.mxu0 0
      %1546 = vmatpush1.bf16.msra.mxu0 0
      %1547 = vmatprep.subr.bf16.mxu0 0
      %1548 = vmatpush1.bf16.msra.mxu0 0
      %1549 = vmatprep.subr.bf16.mxu0 0
      %1550 = vmatpush1.bf16.msra.mxu0 0
      %1551 = vmatprep.subr.bf16.mxu0 0
      %1552 = vmatpush1.bf16.msra.mxu0 0
      %1553 = vmatprep.subr.bf16.mxu0 0
      %1554 = vmatpush1.bf16.msra.mxu0 0
      %1555 = vmatprep.subr.bf16.mxu0 %v1535
      %1556 = vmatpush1.bf16.msra.mxu0 %v1532
      %1557 = vmatprep.subr.bf16.mxu0 0
      %1558 = vmatpush2.bf16.msra.mxu0 0
      %1559 = vmatprep.subr.bf16.mxu0 0
      %1560 = vmatpush2.bf16.msra.mxu0 0
      %1561 = vmatprep.subr.bf16.mxu0 0
      %1562 = vmatpush2.bf16.msra.mxu0 0
      %1563 = vmatprep.subr.bf16.mxu0 0
      %1564 = vmatpush2.bf16.msra.mxu0 0
      %1565 = vmatprep.subr.bf16.mxu0 0
      %1566 = vmatpush2.bf16.msra.mxu0 0
      %1567 = vmatprep.subr.bf16.mxu0 0
      %1568 = vmatpush2.bf16.msra.mxu0 0
      %1569 = vmatprep.subr.bf16.mxu0 0
      %1570 = vmatpush2.bf16.msra.mxu0 0
      %1571 = vmatprep.subr.bf16.mxu0 0
      %1572 = vmatpush2.bf16.msra.mxu0 0
      %1573 = vmatprep.mubr.bf16.mxu0 0
      %1574 = vmatmul.mubr.bf16.gmra.mxu0 %v1529
      %v1575 = vpop.f32.mrf.mxu0
      %v1576 = vadd.f32 0.0, %v1575
      %v1577 = vpop.f32.mrf.mxu0
      %v1578 = vadd.f32 0.0, %v1577
      %v1579 = vpop.f32.mrf.mxu0
      %v1580 = vadd.f32 0.0, %v1579
      %v1581 = vpop.f32.mrf.mxu0
      %v1582 = vadd.f32 0.0, %v1581
      %1583 = vdwg.mxu0
      %1584 = vmatprep.subr.bf16.mxu0 0
      %1585 = vmatpush1.bf16.msra.mxu0 0
      %1586 = vmatprep.subr.bf16.mxu0 0
      %1587 = vmatpush1.bf16.msra.mxu0 0
      %1588 = vmatprep.subr.bf16.mxu0 0
      %1589 = vmatpush1.bf16.msra.mxu0 0
      %1590 = vmatprep.subr.bf16.mxu0 0
      %1591 = vmatpush1.bf16.msra.mxu0 0
      %1592 = vmatprep.subr.bf16.mxu0 0
      %1593 = vmatpush1.bf16.msra.mxu0 0
      %1594 = vmatprep.subr.bf16.mxu0 0
      %1595 = vmatpush1.bf16.msra.mxu0 0
      %1596 = vmatprep.subr.bf16.mxu0 0
      %1597 = vmatpush1.bf16.msra.mxu0 0
      %1598 = vmatprep.subr.bf16.mxu0 %v1539
      %1599 = vmatpush1.bf16.msra.mxu0 %v1537
      %1600 = vmatprep.subr.bf16.mxu0 0
      %1601 = vmatpush2.bf16.msra.mxu0 0
      %1602 = vmatprep.subr.bf16.mxu0 0
      %1603 = vmatpush2.bf16.msra.mxu0 0
      %1604 = vmatprep.subr.bf16.mxu0 0
      %1605 = vmatpush2.bf16.msra.mxu0 0
      %1606 = vmatprep.subr.bf16.mxu0 0
      %1607 = vmatpush2.bf16.msra.mxu0 0
      %1608 = vmatprep.subr.bf16.mxu0 0
      %1609 = vmatpush2.bf16.msra.mxu0 0
      %1610 = vmatprep.subr.bf16.mxu0 0
      %1611 = vmatpush2.bf16.msra.mxu0 0
      %1612 = vmatprep.subr.bf16.mxu0 0
      %1613 = vmatpush2.bf16.msra.mxu0 0
      %1614 = vmatprep.subr.bf16.mxu0 0
      %1615 = vmatpush2.bf16.msra.mxu0 0
      %1616 = vmatprep.mubr.bf16.mxu0 0
      %1617 = vmatmul.mubr.bf16.gmra.mxu0 %v1529
      %v1618 = vpop.f32.mrf.mxu0
      %v1619 = vadd.f32 0.0, %v1618
      %v1620 = vpop.f32.mrf.mxu0
      %v1621 = vadd.f32 0.0, %v1620
      %v1622 = vpop.f32.mrf.mxu0
      %v1623 = vadd.f32 0.0, %v1622
      %v1624 = vpop.f32.mrf.mxu0
      %v1625 = vadd.f32 0.0, %v1624
      %1626 = vdwg.mxu0
      %v1627 = vadd.f32 %v1494, %v1576
      %v1628 = vadd.f32 %v1495, %v1578
      %v1629 = vadd.f32 %v1496, %v1619
      %v1630 = vadd.f32 %v1497, %v1621
      %v1631 = vadd.f32 %v1498, %v1580
      %v1632 = vadd.f32 %v1499, %v1582
      %v1633 = vadd.f32 %v1500, %v1623
      %v1634 = vadd.f32 %v1501, %v1625
      %s1635 = scalar_lea.vmem %s305, 80
      %v1636 = vld [vmem:[%s1635] sm:$0xf]
      %v1637 = vld [vmem:[%s1635 + $0x4] sm:$0xf]
      %1638 = vrot.lane.b32.xlu0 %v329, 38
      %v1639 = vpop.permute.xlu0 %1638
      %1640 = vrot.lane.b32.xlu0 %v330, 38
      %v1641 = vpop.permute.xlu0 %1640
      %1642 = vrot.lane.b32.xlu0 %v331, 38
      %v1643 = vpop.permute.xlu0 %1642
      %1644 = vrot.lane.b32.xlu0 %v322, 38
      %v1645 = vpop.permute.xlu0 %1644
      %vm1646 = vcmask 310272
      %v1647 = vsel %vm1646, %v1639, %v1641
      %v1648 = vsel %vm1646, %v1641, %v1643
      %v1649 = vsel %vm1646, %v1643, %v1645
      %1650 = vrot.lane.b32.xlu0 %v329, 54
      %v1651 = vpop.permute.xlu0 %1650
      %vm1652 = vcmask 441344
      %v1655 = vsel %vm1652, %v1649, %v1651
      %v1658 = vunpack.c.l.b16 %v1636
      %v1659 = vunpack.c.l.b16 %v1637
      %v1660 = vpack.c.b16 %v1659, %v1658
      %v1662 = vsel %vm374, %v1660, 0
      %v1665 = vsel %vm378, %v1647, 0
      %v1668 = vsel %vm378, %v1648, 0
      %v1670 = vsel %vm378, %v1655, 0
      %v1672 = vsel %vm378, %v1651, 0
      %1674 = vmatprep.subr.bf16.mxu0 0
      %1675 = vmatpush1.bf16.msra.mxu0 0
      %1676 = vmatprep.subr.bf16.mxu0 0
      %1677 = vmatpush1.bf16.msra.mxu0 0
      %1678 = vmatprep.subr.bf16.mxu0 0
      %1679 = vmatpush1.bf16.msra.mxu0 0
      %1680 = vmatprep.subr.bf16.mxu0 0
      %1681 = vmatpush1.bf16.msra.mxu0 0
      %1682 = vmatprep.subr.bf16.mxu0 0
      %1683 = vmatpush1.bf16.msra.mxu0 0
      %1684 = vmatprep.subr.bf16.mxu0 0
      %1685 = vmatpush1.bf16.msra.mxu0 0
      %1686 = vmatprep.subr.bf16.mxu0 0
      %1687 = vmatpush1.bf16.msra.mxu0 0
      %1688 = vmatprep.subr.bf16.mxu0 %v1668
      %1689 = vmatpush1.bf16.msra.mxu0 %v1665
      %1690 = vmatprep.subr.bf16.mxu0 0
      %1691 = vmatpush2.bf16.msra.mxu0 0
      %1692 = vmatprep.subr.bf16.mxu0 0
      %1693 = vmatpush2.bf16.msra.mxu0 0
      %1694 = vmatprep.subr.bf16.mxu0 0
      %1695 = vmatpush2.bf16.msra.mxu0 0
      %1696 = vmatprep.subr.bf16.mxu0 0
      %1697 = vmatpush2.bf16.msra.mxu0 0
      %1698 = vmatprep.subr.bf16.mxu0 0
      %1699 = vmatpush2.bf16.msra.mxu0 0
      %1700 = vmatprep.subr.bf16.mxu0 0
      %1701 = vmatpush2.bf16.msra.mxu0 0
      %1702 = vmatprep.subr.bf16.mxu0 0
      %1703 = vmatpush2.bf16.msra.mxu0 0
      %1704 = vmatprep.subr.bf16.mxu0 0
      %1705 = vmatpush2.bf16.msra.mxu0 0
      %1706 = vmatprep.mubr.bf16.mxu0 0
      %1707 = vmatmul.mubr.bf16.gmra.mxu0 %v1662
      %v1708 = vpop.f32.mrf.mxu0
      %v1709 = vadd.f32 0.0, %v1708
      %v1710 = vpop.f32.mrf.mxu0
      %v1711 = vadd.f32 0.0, %v1710
      %v1712 = vpop.f32.mrf.mxu0
      %v1713 = vadd.f32 0.0, %v1712
      %v1714 = vpop.f32.mrf.mxu0
      %v1715 = vadd.f32 0.0, %v1714
      %1716 = vdwg.mxu0
      %1717 = vmatprep.subr.bf16.mxu0 0
      %1718 = vmatpush1.bf16.msra.mxu0 0
      %1719 = vmatprep.subr.bf16.mxu0 0
      %1720 = vmatpush1.bf16.msra.mxu0 0
      %1721 = vmatprep.subr.bf16.mxu0 0
      %1722 = vmatpush1.bf16.msra.mxu0 0
      %1723 = vmatprep.subr.bf16.mxu0 0
      %1724 = vmatpush1.bf16.msra.mxu0 0
      %1725 = vmatprep.subr.bf16.mxu0 0
      %1726 = vmatpush1.bf16.msra.mxu0 0
      %1727 = vmatprep.subr.bf16.mxu0 0
      %1728 = vmatpush1.bf16.msra.mxu0 0
      %1729 = vmatprep.subr.bf16.mxu0 0
      %1730 = vmatpush1.bf16.msra.mxu0 0
      %1731 = vmatprep.subr.bf16.mxu0 %v1672
      %1732 = vmatpush1.bf16.msra.mxu0 %v1670
      %1733 = vmatprep.subr.bf16.mxu0 0
      %1734 = vmatpush2.bf16.msra.mxu0 0
      %1735 = vmatprep.subr.bf16.mxu0 0
      %1736 = vmatpush2.bf16.msra.mxu0 0
      %1737 = vmatprep.subr.bf16.mxu0 0
      %1738 = vmatpush2.bf16.msra.mxu0 0
      %1739 = vmatprep.subr.bf16.mxu0 0
      %1740 = vmatpush2.bf16.msra.mxu0 0
      %1741 = vmatprep.subr.bf16.mxu0 0
      %1742 = vmatpush2.bf16.msra.mxu0 0
      %1743 = vmatprep.subr.bf16.mxu0 0
      %1744 = vmatpush2.bf16.msra.mxu0 0
      %1745 = vmatprep.subr.bf16.mxu0 0
      %1746 = vmatpush2.bf16.msra.mxu0 0
      %1747 = vmatprep.subr.bf16.mxu0 0
      %1748 = vmatpush2.bf16.msra.mxu0 0
      %1749 = vmatprep.mubr.bf16.mxu0 0
      %1750 = vmatmul.mubr.bf16.gmra.mxu0 %v1662
      %v1751 = vpop.f32.mrf.mxu0
      %v1752 = vadd.f32 0.0, %v1751
      %v1753 = vpop.f32.mrf.mxu0
      %v1754 = vadd.f32 0.0, %v1753
      %v1755 = vpop.f32.mrf.mxu0
      %v1756 = vadd.f32 0.0, %v1755
      %v1757 = vpop.f32.mrf.mxu0
      %v1758 = vadd.f32 0.0, %v1757
      %1759 = vdwg.mxu0
      %v1760 = vadd.f32 %v1627, %v1709
      %v1761 = vadd.f32 %v1628, %v1711
      %v1762 = vadd.f32 %v1629, %v1752
      %v1763 = vadd.f32 %v1630, %v1754
      %v1764 = vadd.f32 %v1631, %v1713
      %v1765 = vadd.f32 %v1632, %v1715
      %v1766 = vadd.f32 %v1633, %v1756
      %v1767 = vadd.f32 %v1634, %v1758
      %s1768 = scalar_lea.vmem %s305, 88
      %v1769 = vld [vmem:[%s1768] sm:$0xf]
      %v1770 = vld [vmem:[%s1768 + $0x4] sm:$0xf]
      %1771 = vrot.lane.b32.xlu0 %v329, 37
      %v1772 = vpop.permute.xlu0 %1771
      %1773 = vrot.lane.b32.xlu0 %v330, 37
      %v1774 = vpop.permute.xlu0 %1773
      %1775 = vrot.lane.b32.xlu0 %v331, 37
      %v1776 = vpop.permute.xlu0 %1775
      %1777 = vrot.lane.b32.xlu0 %v322, 37
      %v1778 = vpop.permute.xlu0 %1777
      %vm1779 = vcmask 302080
      %v1780 = vsel %vm1779, %v1772, %v1774
      %v1781 = vsel %vm1779, %v1774, %v1776
      %v1782 = vsel %vm1779, %v1776, %v1778
      %1783 = vrot.lane.b32.xlu0 %v329, 53
      %v1784 = vpop.permute.xlu0 %1783
      %vm1785 = vcmask 433152
      %v1788 = vsel %vm1785, %v1782, %v1784
      %v1791 = vunpack.c.l.b16 %v1769
      %v1792 = vunpack.c.l.b16 %v1770
      %v1793 = vpack.c.b16 %v1792, %v1791
      %v1795 = vsel %vm374, %v1793, 0
      %v1798 = vsel %vm378, %v1780, 0
      %v1801 = vsel %vm378, %v1781, 0
      %v1803 = vsel %vm378, %v1788, 0
      %v1805 = vsel %vm378, %v1784, 0
      %1807 = vmatprep.subr.bf16.mxu0 0
      %1808 = vmatpush1.bf16.msra.mxu0 0
      %1809 = vmatprep.subr.bf16.mxu0 0
      %1810 = vmatpush1.bf16.msra.mxu0 0
      %1811 = vmatprep.subr.bf16.mxu0 0
      %1812 = vmatpush1.bf16.msra.mxu0 0
      %1813 = vmatprep.subr.bf16.mxu0 0
      %1814 = vmatpush1.bf16.msra.mxu0 0
      %1815 = vmatprep.subr.bf16.mxu0 0
      %1816 = vmatpush1.bf16.msra.mxu0 0
      %1817 = vmatprep.subr.bf16.mxu0 0
      %1818 = vmatpush1.bf16.msra.mxu0 0
      %1819 = vmatprep.subr.bf16.mxu0 0
      %1820 = vmatpush1.bf16.msra.mxu0 0
      %1821 = vmatprep.subr.bf16.mxu0 %v1801
      %1822 = vmatpush1.bf16.msra.mxu0 %v1798
      %1823 = vmatprep.subr.bf16.mxu0 0
      %1824 = vmatpush2.bf16.msra.mxu0 0
      %1825 = vmatprep.subr.bf16.mxu0 0
      %1826 = vmatpush2.bf16.msra.mxu0 0
      %1827 = vmatprep.subr.bf16.mxu0 0
      %1828 = vmatpush2.bf16.msra.mxu0 0
      %1829 = vmatprep.subr.bf16.mxu0 0
      %1830 = vmatpush2.bf16.msra.mxu0 0
      %1831 = vmatprep.subr.bf16.mxu0 0
      %1832 = vmatpush2.bf16.msra.mxu0 0
      %1833 = vmatprep.subr.bf16.mxu0 0
      %1834 = vmatpush2.bf16.msra.mxu0 0
      %1835 = vmatprep.subr.bf16.mxu0 0
      %1836 = vmatpush2.bf16.msra.mxu0 0
      %1837 = vmatprep.subr.bf16.mxu0 0
      %1838 = vmatpush2.bf16.msra.mxu0 0
      %1839 = vmatprep.mubr.bf16.mxu0 0
      %1840 = vmatmul.mubr.bf16.gmra.mxu0 %v1795
      %v1841 = vpop.f32.mrf.mxu0
      %v1842 = vadd.f32 0.0, %v1841
      %v1843 = vpop.f32.mrf.mxu0
      %v1844 = vadd.f32 0.0, %v1843
      %v1845 = vpop.f32.mrf.mxu0
      %v1846 = vadd.f32 0.0, %v1845
      %v1847 = vpop.f32.mrf.mxu0
      %v1848 = vadd.f32 0.0, %v1847
      %1849 = vdwg.mxu0
      %1850 = vmatprep.subr.bf16.mxu0 0
      %1851 = vmatpush1.bf16.msra.mxu0 0
      %1852 = vmatprep.subr.bf16.mxu0 0
      %1853 = vmatpush1.bf16.msra.mxu0 0
      %1854 = vmatprep.subr.bf16.mxu0 0
      %1855 = vmatpush1.bf16.msra.mxu0 0
      %1856 = vmatprep.subr.bf16.mxu0 0
      %1857 = vmatpush1.bf16.msra.mxu0 0
      %1858 = vmatprep.subr.bf16.mxu0 0
      %1859 = vmatpush1.bf16.msra.mxu0 0
      %1860 = vmatprep.subr.bf16.mxu0 0
      %1861 = vmatpush1.bf16.msra.mxu0 0
      %1862 = vmatprep.subr.bf16.mxu0 0
      %1863 = vmatpush1.bf16.msra.mxu0 0
      %1864 = vmatprep.subr.bf16.mxu0 %v1805
      %1865 = vmatpush1.bf16.msra.mxu0 %v1803
      %1866 = vmatprep.subr.bf16.mxu0 0
      %1867 = vmatpush2.bf16.msra.mxu0 0
      %1868 = vmatprep.subr.bf16.mxu0 0
      %1869 = vmatpush2.bf16.msra.mxu0 0
      %1870 = vmatprep.subr.bf16.mxu0 0
      %1871 = vmatpush2.bf16.msra.mxu0 0
      %1872 = vmatprep.subr.bf16.mxu0 0
      %1873 = vmatpush2.bf16.msra.mxu0 0
      %1874 = vmatprep.subr.bf16.mxu0 0
      %1875 = vmatpush2.bf16.msra.mxu0 0
      %1876 = vmatprep.subr.bf16.mxu0 0
      %1877 = vmatpush2.bf16.msra.mxu0 0
      %1878 = vmatprep.subr.bf16.mxu0 0
      %1879 = vmatpush2.bf16.msra.mxu0 0
      %1880 = vmatprep.subr.bf16.mxu0 0
      %1881 = vmatpush2.bf16.msra.mxu0 0
      %1882 = vmatprep.mubr.bf16.mxu0 0
      %1883 = vmatmul.mubr.bf16.gmra.mxu0 %v1795
      %v1884 = vpop.f32.mrf.mxu0
      %v1885 = vadd.f32 0.0, %v1884
      %v1886 = vpop.f32.mrf.mxu0
      %v1887 = vadd.f32 0.0, %v1886
      %v1888 = vpop.f32.mrf.mxu0
      %v1889 = vadd.f32 0.0, %v1888
      %v1890 = vpop.f32.mrf.mxu0
      %v1891 = vadd.f32 0.0, %v1890
      %1892 = vdwg.mxu0
      %v1893 = vadd.f32 %v1760, %v1842
      %v1894 = vadd.f32 %v1761, %v1844
      %v1895 = vadd.f32 %v1762, %v1885
      %v1896 = vadd.f32 %v1763, %v1887
      %v1897 = vadd.f32 %v1764, %v1846
      %v1898 = vadd.f32 %v1765, %v1848
      %v1899 = vadd.f32 %v1766, %v1889
      %v1900 = vadd.f32 %v1767, %v1891
      %s1901 = scalar_lea.vmem %s305, 96
      %v1902 = vld [vmem:[%s1901] sm:$0xf]
      %v1903 = vld [vmem:[%s1901 + $0x4] sm:$0xf]
      %1904 = vrot.lane.b32.xlu0 %v329, 29
      %v1905 = vpop.permute.xlu0 %1904
      %1906 = vrot.lane.b32.xlu0 %v330, 29
      %v1907 = vpop.permute.xlu0 %1906
      %1908 = vrot.lane.b32.xlu0 %v331, 29
      %v1909 = vpop.permute.xlu0 %1908
      %1910 = vrot.lane.b32.xlu0 %v322, 29
      %v1911 = vpop.permute.xlu0 %1910
      %vm1912 = vcmask 236544
      %v1913 = vsel %vm1912, %v1905, %v1907
      %v1914 = vsel %vm1912, %v1907, %v1909
      %v1915 = vsel %vm1912, %v1909, %v1911
      %1916 = vrot.lane.b32.xlu0 %v329, 45
      %v1917 = vpop.permute.xlu0 %1916
      %vm1918 = vcmask 367616
      %v1921 = vsel %vm1918, %v1915, %v1917
      %v1924 = vunpack.c.l.b16 %v1902
      %v1925 = vunpack.c.l.b16 %v1903
      %v1926 = vpack.c.b16 %v1925, %v1924
      %v1928 = vsel %vm374, %v1926, 0
      %v1931 = vsel %vm378, %v1913, 0
      %v1934 = vsel %vm378, %v1914, 0
      %v1936 = vsel %vm378, %v1921, 0
      %v1938 = vsel %vm378, %v1917, 0
      %1940 = vmatprep.subr.bf16.mxu0 0
      %1941 = vmatpush1.bf16.msra.mxu0 0
      %1942 = vmatprep.subr.bf16.mxu0 0
      %1943 = vmatpush1.bf16.msra.mxu0 0
      %1944 = vmatprep.subr.bf16.mxu0 0
      %1945 = vmatpush1.bf16.msra.mxu0 0
      %1946 = vmatprep.subr.bf16.mxu0 0
      %1947 = vmatpush1.bf16.msra.mxu0 0
      %1948 = vmatprep.subr.bf16.mxu0 0
      %1949 = vmatpush1.bf16.msra.mxu0 0
      %1950 = vmatprep.subr.bf16.mxu0 0
      %1951 = vmatpush1.bf16.msra.mxu0 0
      %1952 = vmatprep.subr.bf16.mxu0 0
      %1953 = vmatpush1.bf16.msra.mxu0 0
      %1954 = vmatprep.subr.bf16.mxu0 %v1934
      %1955 = vmatpush1.bf16.msra.mxu0 %v1931
      %1956 = vmatprep.subr.bf16.mxu0 0
      %1957 = vmatpush2.bf16.msra.mxu0 0
      %1958 = vmatprep.subr.bf16.mxu0 0
      %1959 = vmatpush2.bf16.msra.mxu0 0
      %1960 = vmatprep.subr.bf16.mxu0 0
      %1961 = vmatpush2.bf16.msra.mxu0 0
      %1962 = vmatprep.subr.bf16.mxu0 0
      %1963 = vmatpush2.bf16.msra.mxu0 0
      %1964 = vmatprep.subr.bf16.mxu0 0
      %1965 = vmatpush2.bf16.msra.mxu0 0
      %1966 = vmatprep.subr.bf16.mxu0 0
      %1967 = vmatpush2.bf16.msra.mxu0 0
      %1968 = vmatprep.subr.bf16.mxu0 0
      %1969 = vmatpush2.bf16.msra.mxu0 0
      %1970 = vmatprep.subr.bf16.mxu0 0
      %1971 = vmatpush2.bf16.msra.mxu0 0
      %1972 = vmatprep.mubr.bf16.mxu0 0
      %1973 = vmatmul.mubr.bf16.gmra.mxu0 %v1928
      %v1974 = vpop.f32.mrf.mxu0
      %v1975 = vadd.f32 0.0, %v1974
      %v1976 = vpop.f32.mrf.mxu0
      %v1977 = vadd.f32 0.0, %v1976
      %v1978 = vpop.f32.mrf.mxu0
      %v1979 = vadd.f32 0.0, %v1978
      %v1980 = vpop.f32.mrf.mxu0
      %v1981 = vadd.f32 0.0, %v1980
      %1982 = vdwg.mxu0
      %1983 = vmatprep.subr.bf16.mxu0 0
      %1984 = vmatpush1.bf16.msra.mxu0 0
      %1985 = vmatprep.subr.bf16.mxu0 0
      %1986 = vmatpush1.bf16.msra.mxu0 0
      %1987 = vmatprep.subr.bf16.mxu0 0
      %1988 = vmatpush1.bf16.msra.mxu0 0
      %1989 = vmatprep.subr.bf16.mxu0 0
      %1990 = vmatpush1.bf16.msra.mxu0 0
      %1991 = vmatprep.subr.bf16.mxu0 0
      %1992 = vmatpush1.bf16.msra.mxu0 0
      %1993 = vmatprep.subr.bf16.mxu0 0
      %1994 = vmatpush1.bf16.msra.mxu0 0
      %1995 = vmatprep.subr.bf16.mxu0 0
      %1996 = vmatpush1.bf16.msra.mxu0 0
      %1997 = vmatprep.subr.bf16.mxu0 %v1938
      %1998 = vmatpush1.bf16.msra.mxu0 %v1936
      %1999 = vmatprep.subr.bf16.mxu0 0
      %2000 = vmatpush2.bf16.msra.mxu0 0
      %2001 = vmatprep.subr.bf16.mxu0 0
      %2002 = vmatpush2.bf16.msra.mxu0 0
      %2003 = vmatprep.subr.bf16.mxu0 0
      %2004 = vmatpush2.bf16.msra.mxu0 0
      %2005 = vmatprep.subr.bf16.mxu0 0
      %2006 = vmatpush2.bf16.msra.mxu0 0
      %2007 = vmatprep.subr.bf16.mxu0 0
      %2008 = vmatpush2.bf16.msra.mxu0 0
      %2009 = vmatprep.subr.bf16.mxu0 0
      %2010 = vmatpush2.bf16.msra.mxu0 0
      %2011 = vmatprep.subr.bf16.mxu0 0
      %2012 = vmatpush2.bf16.msra.mxu0 0
      %2013 = vmatprep.subr.bf16.mxu0 0
      %2014 = vmatpush2.bf16.msra.mxu0 0
      %2015 = vmatprep.mubr.bf16.mxu0 0
      %2016 = vmatmul.mubr.bf16.gmra.mxu0 %v1928
      %v2017 = vpop.f32.mrf.mxu0
      %v2018 = vadd.f32 0.0, %v2017
      %v2019 = vpop.f32.mrf.mxu0
      %v2020 = vadd.f32 0.0, %v2019
      %v2021 = vpop.f32.mrf.mxu0
      %v2022 = vadd.f32 0.0, %v2021
      %v2023 = vpop.f32.mrf.mxu0
      %v2024 = vadd.f32 0.0, %v2023
      %2025 = vdwg.mxu0
      %v2026 = vadd.f32 %v1893, %v1975
      %v2027 = vadd.f32 %v1894, %v1977
      %v2028 = vadd.f32 %v1895, %v2018
      %v2029 = vadd.f32 %v1896, %v2020
      %v2030 = vadd.f32 %v1897, %v1979
      %v2031 = vadd.f32 %v1898, %v1981
      %v2032 = vadd.f32 %v1899, %v2022
      %v2033 = vadd.f32 %v1900, %v2024
      %s2034 = scalar_lea.vmem %s305, 104
      %v2035 = vld [vmem:[%s2034] sm:$0xf]
      %v2036 = vld [vmem:[%s2034 + $0x4] sm:$0xf]
      %2037 = vrot.lane.b32.xlu0 %v329, 28
      %v2038 = vpop.permute.xlu0 %2037
      %2039 = vrot.lane.b32.xlu0 %v330, 28
      %v2040 = vpop.permute.xlu0 %2039
      %2041 = vrot.lane.b32.xlu0 %v331, 28
      %v2042 = vpop.permute.xlu0 %2041
      %2043 = vrot.lane.b32.xlu0 %v322, 28
      %v2044 = vpop.permute.xlu0 %2043
      %vm2045 = vcmask 228352
      %v2046 = vsel %vm2045, %v2038, %v2040
      %v2047 = vsel %vm2045, %v2040, %v2042
      %v2048 = vsel %vm2045, %v2042, %v2044
      %2049 = vrot.lane.b32.xlu0 %v329, 44
      %v2050 = vpop.permute.xlu0 %2049
      %vm2051 = vcmask 359424
      %v2054 = vsel %vm2051, %v2048, %v2050
      %v2057 = vunpack.c.l.b16 %v2035
      %v2058 = vunpack.c.l.b16 %v2036
      %v2059 = vpack.c.b16 %v2058, %v2057
      %v2061 = vsel %vm374, %v2059, 0
      %v2064 = vsel %vm378, %v2046, 0
      %v2067 = vsel %vm378, %v2047, 0
      %v2069 = vsel %vm378, %v2054, 0
      %v2071 = vsel %vm378, %v2050, 0
      %2073 = vmatprep.subr.bf16.mxu0 0
      %2074 = vmatpush1.bf16.msra.mxu0 0
      %2075 = vmatprep.subr.bf16.mxu0 0
      %2076 = vmatpush1.bf16.msra.mxu0 0
      %2077 = vmatprep.subr.bf16.mxu0 0
      %2078 = vmatpush1.bf16.msra.mxu0 0
      %2079 = vmatprep.subr.bf16.mxu0 0
      %2080 = vmatpush1.bf16.msra.mxu0 0
      %2081 = vmatprep.subr.bf16.mxu0 0
      %2082 = vmatpush1.bf16.msra.mxu0 0
      %2083 = vmatprep.subr.bf16.mxu0 0
      %2084 = vmatpush1.bf16.msra.mxu0 0
      %2085 = vmatprep.subr.bf16.mxu0 0
      %2086 = vmatpush1.bf16.msra.mxu0 0
      %2087 = vmatprep.subr.bf16.mxu0 %v2067
      %2088 = vmatpush1.bf16.msra.mxu0 %v2064
      %2089 = vmatprep.subr.bf16.mxu0 0
      %2090 = vmatpush2.bf16.msra.mxu0 0
      %2091 = vmatprep.subr.bf16.mxu0 0
      %2092 = vmatpush2.bf16.msra.mxu0 0
      %2093 = vmatprep.subr.bf16.mxu0 0
      %2094 = vmatpush2.bf16.msra.mxu0 0
      %2095 = vmatprep.subr.bf16.mxu0 0
      %2096 = vmatpush2.bf16.msra.mxu0 0
      %2097 = vmatprep.subr.bf16.mxu0 0
      %2098 = vmatpush2.bf16.msra.mxu0 0
      %2099 = vmatprep.subr.bf16.mxu0 0
      %2100 = vmatpush2.bf16.msra.mxu0 0
      %2101 = vmatprep.subr.bf16.mxu0 0
      %2102 = vmatpush2.bf16.msra.mxu0 0
      %2103 = vmatprep.subr.bf16.mxu0 0
      %2104 = vmatpush2.bf16.msra.mxu0 0
      %2105 = vmatprep.mubr.bf16.mxu0 0
      %2106 = vmatmul.mubr.bf16.gmra.mxu0 %v2061
      %v2107 = vpop.f32.mrf.mxu0
      %v2108 = vadd.f32 0.0, %v2107
      %v2109 = vpop.f32.mrf.mxu0
      %v2110 = vadd.f32 0.0, %v2109
      %v2111 = vpop.f32.mrf.mxu0
      %v2112 = vadd.f32 0.0, %v2111
      %v2113 = vpop.f32.mrf.mxu0
      %v2114 = vadd.f32 0.0, %v2113
      %2115 = vdwg.mxu0
      %2116 = vmatprep.subr.bf16.mxu0 0
      %2117 = vmatpush1.bf16.msra.mxu0 0
      %2118 = vmatprep.subr.bf16.mxu0 0
      %2119 = vmatpush1.bf16.msra.mxu0 0
      %2120 = vmatprep.subr.bf16.mxu0 0
      %2121 = vmatpush1.bf16.msra.mxu0 0
      %2122 = vmatprep.subr.bf16.mxu0 0
      %2123 = vmatpush1.bf16.msra.mxu0 0
      %2124 = vmatprep.subr.bf16.mxu0 0
      %2125 = vmatpush1.bf16.msra.mxu0 0
      %2126 = vmatprep.subr.bf16.mxu0 0
      %2127 = vmatpush1.bf16.msra.mxu0 0
      %2128 = vmatprep.subr.bf16.mxu0 0
      %2129 = vmatpush1.bf16.msra.mxu0 0
      %2130 = vmatprep.subr.bf16.mxu0 %v2071
      %2131 = vmatpush1.bf16.msra.mxu0 %v2069
      %2132 = vmatprep.subr.bf16.mxu0 0
      %2133 = vmatpush2.bf16.msra.mxu0 0
      %2134 = vmatprep.subr.bf16.mxu0 0
      %2135 = vmatpush2.bf16.msra.mxu0 0
      %2136 = vmatprep.subr.bf16.mxu0 0
      %2137 = vmatpush2.bf16.msra.mxu0 0
      %2138 = vmatprep.subr.bf16.mxu0 0
      %2139 = vmatpush2.bf16.msra.mxu0 0
      %2140 = vmatprep.subr.bf16.mxu0 0
      %2141 = vmatpush2.bf16.msra.mxu0 0
      %2142 = vmatprep.subr.bf16.mxu0 0
      %2143 = vmatpush2.bf16.msra.mxu0 0
      %2144 = vmatprep.subr.bf16.mxu0 0
      %2145 = vmatpush2.bf16.msra.mxu0 0
      %2146 = vmatprep.subr.bf16.mxu0 0
      %2147 = vmatpush2.bf16.msra.mxu0 0
      %2148 = vmatprep.mubr.bf16.mxu0 0
      %2149 = vmatmul.mubr.bf16.gmra.mxu0 %v2061
      %v2150 = vpop.f32.mrf.mxu0
      %v2151 = vadd.f32 0.0, %v2150
      %v2152 = vpop.f32.mrf.mxu0
      %v2153 = vadd.f32 0.0, %v2152
      %v2154 = vpop.f32.mrf.mxu0
      %v2155 = vadd.f32 0.0, %v2154
      %v2156 = vpop.f32.mrf.mxu0
      %v2157 = vadd.f32 0.0, %v2156
      %2158 = vdwg.mxu0
      %v2159 = vadd.f32 %v2026, %v2108
      %v2160 = vadd.f32 %v2027, %v2110
      %v2161 = vadd.f32 %v2028, %v2151
      %v2162 = vadd.f32 %v2029, %v2153
      %v2163 = vadd.f32 %v2030, %v2112
      %v2164 = vadd.f32 %v2031, %v2114
      %v2165 = vadd.f32 %v2032, %v2155
      %v2166 = vadd.f32 %v2033, %v2157
      %s2167 = scalar_lea.vmem %s305, 112
      %v2168 = vld [vmem:[%s2167] sm:$0xf]
      %v2169 = vld [vmem:[%s2167 + $0x4] sm:$0xf]
      %2170 = vrot.lane.b32.xlu0 %v329, 27
      %v2171 = vpop.permute.xlu0 %2170
      %2172 = vrot.lane.b32.xlu0 %v330, 27
      %v2173 = vpop.permute.xlu0 %2172
      %2174 = vrot.lane.b32.xlu0 %v331, 27
      %v2175 = vpop.permute.xlu0 %2174
      %2176 = vrot.lane.b32.xlu0 %v322, 27
      %v2177 = vpop.permute.xlu0 %2176
      %vm2178 = vcmask 220160
      %v2179 = vsel %vm2178, %v2171, %v2173
      %v2180 = vsel %vm2178, %v2173, %v2175
      %v2181 = vsel %vm2178, %v2175, %v2177
      %2182 = vrot.lane.b32.xlu0 %v329, 43
      %v2183 = vpop.permute.xlu0 %2182
      %vm2184 = vcmask 351232
      %v2187 = vsel %vm2184, %v2181, %v2183
      %v2190 = vunpack.c.l.b16 %v2168
      %v2191 = vunpack.c.l.b16 %v2169
      %v2192 = vpack.c.b16 %v2191, %v2190
      %v2194 = vsel %vm374, %v2192, 0
      %v2197 = vsel %vm378, %v2179, 0
      %v2200 = vsel %vm378, %v2180, 0
      %v2202 = vsel %vm378, %v2187, 0
      %v2204 = vsel %vm378, %v2183, 0
      %2206 = vmatprep.subr.bf16.mxu0 0
      %2207 = vmatpush1.bf16.msra.mxu0 0
      %2208 = vmatprep.subr.bf16.mxu0 0
      %2209 = vmatpush1.bf16.msra.mxu0 0
      %2210 = vmatprep.subr.bf16.mxu0 0
      %2211 = vmatpush1.bf16.msra.mxu0 0
      %2212 = vmatprep.subr.bf16.mxu0 0
      %2213 = vmatpush1.bf16.msra.mxu0 0
      %2214 = vmatprep.subr.bf16.mxu0 0
      %2215 = vmatpush1.bf16.msra.mxu0 0
      %2216 = vmatprep.subr.bf16.mxu0 0
      %2217 = vmatpush1.bf16.msra.mxu0 0
      %2218 = vmatprep.subr.bf16.mxu0 0
      %2219 = vmatpush1.bf16.msra.mxu0 0
      %2220 = vmatprep.subr.bf16.mxu0 %v2200
      %2221 = vmatpush1.bf16.msra.mxu0 %v2197
      %2222 = vmatprep.subr.bf16.mxu0 0
      %2223 = vmatpush2.bf16.msra.mxu0 0
      %2224 = vmatprep.subr.bf16.mxu0 0
      %2225 = vmatpush2.bf16.msra.mxu0 0
      %2226 = vmatprep.subr.bf16.mxu0 0
      %2227 = vmatpush2.bf16.msra.mxu0 0
      %2228 = vmatprep.subr.bf16.mxu0 0
      %2229 = vmatpush2.bf16.msra.mxu0 0
      %2230 = vmatprep.subr.bf16.mxu0 0
      %2231 = vmatpush2.bf16.msra.mxu0 0
      %2232 = vmatprep.subr.bf16.mxu0 0
      %2233 = vmatpush2.bf16.msra.mxu0 0
      %2234 = vmatprep.subr.bf16.mxu0 0
      %2235 = vmatpush2.bf16.msra.mxu0 0
      %2236 = vmatprep.subr.bf16.mxu0 0
      %2237 = vmatpush2.bf16.msra.mxu0 0
      %2238 = vmatprep.mubr.bf16.mxu0 0
      %2239 = vmatmul.mubr.bf16.gmra.mxu0 %v2194
      %v2240 = vpop.f32.mrf.mxu0
      %v2241 = vadd.f32 0.0, %v2240
      %v2242 = vpop.f32.mrf.mxu0
      %v2243 = vadd.f32 0.0, %v2242
      %v2244 = vpop.f32.mrf.mxu0
      %v2245 = vadd.f32 0.0, %v2244
      %v2246 = vpop.f32.mrf.mxu0
      %v2247 = vadd.f32 0.0, %v2246
      %2248 = vdwg.mxu0
      %2249 = vmatprep.subr.bf16.mxu0 0
      %2250 = vmatpush1.bf16.msra.mxu0 0
      %2251 = vmatprep.subr.bf16.mxu0 0
      %2252 = vmatpush1.bf16.msra.mxu0 0
      %2253 = vmatprep.subr.bf16.mxu0 0
      %2254 = vmatpush1.bf16.msra.mxu0 0
      %2255 = vmatprep.subr.bf16.mxu0 0
      %2256 = vmatpush1.bf16.msra.mxu0 0
      %2257 = vmatprep.subr.bf16.mxu0 0
      %2258 = vmatpush1.bf16.msra.mxu0 0
      %2259 = vmatprep.subr.bf16.mxu0 0
      %2260 = vmatpush1.bf16.msra.mxu0 0
      %2261 = vmatprep.subr.bf16.mxu0 0
      %2262 = vmatpush1.bf16.msra.mxu0 0
      %2263 = vmatprep.subr.bf16.mxu0 %v2204
      %2264 = vmatpush1.bf16.msra.mxu0 %v2202
      %2265 = vmatprep.subr.bf16.mxu0 0
      %2266 = vmatpush2.bf16.msra.mxu0 0
      %2267 = vmatprep.subr.bf16.mxu0 0
      %2268 = vmatpush2.bf16.msra.mxu0 0
      %2269 = vmatprep.subr.bf16.mxu0 0
      %2270 = vmatpush2.bf16.msra.mxu0 0
      %2271 = vmatprep.subr.bf16.mxu0 0
      %2272 = vmatpush2.bf16.msra.mxu0 0
      %2273 = vmatprep.subr.bf16.mxu0 0
      %2274 = vmatpush2.bf16.msra.mxu0 0
      %2275 = vmatprep.subr.bf16.mxu0 0
      %2276 = vmatpush2.bf16.msra.mxu0 0
      %2277 = vmatprep.subr.bf16.mxu0 0
      %2278 = vmatpush2.bf16.msra.mxu0 0
      %2279 = vmatprep.subr.bf16.mxu0 0
      %2280 = vmatpush2.bf16.msra.mxu0 0
      %2281 = vmatprep.mubr.bf16.mxu0 0
      %2282 = vmatmul.mubr.bf16.gmra.mxu0 %v2194
      %v2283 = vpop.f32.mrf.mxu0
      %v2284 = vadd.f32 0.0, %v2283
      %v2285 = vpop.f32.mrf.mxu0
      %v2286 = vadd.f32 0.0, %v2285
      %v2287 = vpop.f32.mrf.mxu0
      %v2288 = vadd.f32 0.0, %v2287
      %v2289 = vpop.f32.mrf.mxu0
      %v2290 = vadd.f32 0.0, %v2289
      %2291 = vdwg.mxu0
      %v2292 = vadd.f32 %v2159, %v2241
      %v2293 = vadd.f32 %v2160, %v2243
      %v2294 = vadd.f32 %v2161, %v2284
      %v2295 = vadd.f32 %v2162, %v2286
      %v2296 = vadd.f32 %v2163, %v2245
      %v2297 = vadd.f32 %v2164, %v2247
      %v2298 = vadd.f32 %v2165, %v2288
      %v2299 = vadd.f32 %v2166, %v2290
      %s2300 = scalar_lea.vmem %s305, 120
      %v2301 = vld [vmem:[%s2300] sm:$0xf]
      %v2302 = vld [vmem:[%s2300 + $0x4] sm:$0xf]
      %2303 = vrot.lane.b32.xlu0 %v329, 19
      %v2304 = vpop.permute.xlu0 %2303
      %2305 = vrot.lane.b32.xlu0 %v330, 19
      %v2306 = vpop.permute.xlu0 %2305
      %2307 = vrot.lane.b32.xlu0 %v331, 19
      %v2308 = vpop.permute.xlu0 %2307
      %2309 = vrot.lane.b32.xlu0 %v322, 19
      %v2310 = vpop.permute.xlu0 %2309
      %vm2311 = vcmask 154624
      %v2312 = vsel %vm2311, %v2304, %v2306
      %v2313 = vsel %vm2311, %v2306, %v2308
      %v2314 = vsel %vm2311, %v2308, %v2310
      %2315 = vrot.lane.b32.xlu0 %v329, 35
      %v2316 = vpop.permute.xlu0 %2315
      %vm2317 = vcmask 285696
      %v2320 = vsel %vm2317, %v2314, %v2316
      %v2323 = vunpack.c.l.b16 %v2301
      %v2324 = vunpack.c.l.b16 %v2302
      %v2325 = vpack.c.b16 %v2324, %v2323
      %v2327 = vsel %vm374, %v2325, 0
      %v2330 = vsel %vm378, %v2312, 0
      %v2333 = vsel %vm378, %v2313, 0
      %v2335 = vsel %vm378, %v2320, 0
      %v2337 = vsel %vm378, %v2316, 0
      %2339 = vmatprep.subr.bf16.mxu0 0
      %2340 = vmatpush1.bf16.msra.mxu0 0
      %2341 = vmatprep.subr.bf16.mxu0 0
      %2342 = vmatpush1.bf16.msra.mxu0 0
      %2343 = vmatprep.subr.bf16.mxu0 0
      %2344 = vmatpush1.bf16.msra.mxu0 0
      %2345 = vmatprep.subr.bf16.mxu0 0
      %2346 = vmatpush1.bf16.msra.mxu0 0
      %2347 = vmatprep.subr.bf16.mxu0 0
      %2348 = vmatpush1.bf16.msra.mxu0 0
      %2349 = vmatprep.subr.bf16.mxu0 0
      %2350 = vmatpush1.bf16.msra.mxu0 0
      %2351 = vmatprep.subr.bf16.mxu0 0
      %2352 = vmatpush1.bf16.msra.mxu0 0
      %2353 = vmatprep.subr.bf16.mxu0 %v2333
      %2354 = vmatpush1.bf16.msra.mxu0 %v2330
      %2355 = vmatprep.subr.bf16.mxu0 0
      %2356 = vmatpush2.bf16.msra.mxu0 0
      %2357 = vmatprep.subr.bf16.mxu0 0
      %2358 = vmatpush2.bf16.msra.mxu0 0
      %2359 = vmatprep.subr.bf16.mxu0 0
      %2360 = vmatpush2.bf16.msra.mxu0 0
      %2361 = vmatprep.subr.bf16.mxu0 0
      %2362 = vmatpush2.bf16.msra.mxu0 0
      %2363 = vmatprep.subr.bf16.mxu0 0
      %2364 = vmatpush2.bf16.msra.mxu0 0
      %2365 = vmatprep.subr.bf16.mxu0 0
      %2366 = vmatpush2.bf16.msra.mxu0 0
      %2367 = vmatprep.subr.bf16.mxu0 0
      %2368 = vmatpush2.bf16.msra.mxu0 0
      %2369 = vmatprep.subr.bf16.mxu0 0
      %2370 = vmatpush2.bf16.msra.mxu0 0
      %2371 = vmatprep.mubr.bf16.mxu0 0
      %2372 = vmatmul.mubr.bf16.gmra.mxu0 %v2327
      %v2373 = vpop.f32.mrf.mxu0
      %v2374 = vadd.f32 0.0, %v2373
      %v2375 = vpop.f32.mrf.mxu0
      %v2376 = vadd.f32 0.0, %v2375
      %v2377 = vpop.f32.mrf.mxu0
      %v2378 = vadd.f32 0.0, %v2377
      %v2379 = vpop.f32.mrf.mxu0
      %v2380 = vadd.f32 0.0, %v2379
      %2381 = vdwg.mxu0
      %2382 = vmatprep.subr.bf16.mxu0 0
      %2383 = vmatpush1.bf16.msra.mxu0 0
      %2384 = vmatprep.subr.bf16.mxu0 0
      %2385 = vmatpush1.bf16.msra.mxu0 0
      %2386 = vmatprep.subr.bf16.mxu0 0
      %2387 = vmatpush1.bf16.msra.mxu0 0
      %2388 = vmatprep.subr.bf16.mxu0 0
      %2389 = vmatpush1.bf16.msra.mxu0 0
      %2390 = vmatprep.subr.bf16.mxu0 0
      %2391 = vmatpush1.bf16.msra.mxu0 0
      %2392 = vmatprep.subr.bf16.mxu0 0
      %2393 = vmatpush1.bf16.msra.mxu0 0
      %2394 = vmatprep.subr.bf16.mxu0 0
      %2395 = vmatpush1.bf16.msra.mxu0 0
      %2396 = vmatprep.subr.bf16.mxu0 %v2337
      %2397 = vmatpush1.bf16.msra.mxu0 %v2335
      %2398 = vmatprep.subr.bf16.mxu0 0
      %2399 = vmatpush2.bf16.msra.mxu0 0
      %2400 = vmatprep.subr.bf16.mxu0 0
      %2401 = vmatpush2.bf16.msra.mxu0 0
      %2402 = vmatprep.subr.bf16.mxu0 0
      %2403 = vmatpush2.bf16.msra.mxu0 0
      %2404 = vmatprep.subr.bf16.mxu0 0
      %2405 = vmatpush2.bf16.msra.mxu0 0
      %2406 = vmatprep.subr.bf16.mxu0 0
      %2407 = vmatpush2.bf16.msra.mxu0 0
      %2408 = vmatprep.subr.bf16.mxu0 0
      %2409 = vmatpush2.bf16.msra.mxu0 0
      %2410 = vmatprep.subr.bf16.mxu0 0
      %2411 = vmatpush2.bf16.msra.mxu0 0
      %2412 = vmatprep.subr.bf16.mxu0 0
      %2413 = vmatpush2.bf16.msra.mxu0 0
      %2414 = vmatprep.mubr.bf16.mxu0 0
      %2415 = vmatmul.mubr.bf16.gmra.mxu0 %v2327
      %v2416 = vpop.f32.mrf.mxu0
      %v2417 = vadd.f32 0.0, %v2416
      %v2418 = vpop.f32.mrf.mxu0
      %v2419 = vadd.f32 0.0, %v2418
      %v2420 = vpop.f32.mrf.mxu0
      %v2421 = vadd.f32 0.0, %v2420
      %v2422 = vpop.f32.mrf.mxu0
      %v2423 = vadd.f32 0.0, %v2422
      %2424 = vdwg.mxu0
      %v2425 = vadd.f32 %v2292, %v2374
      %v2426 = vadd.f32 %v2293, %v2376
      %v2427 = vadd.f32 %v2294, %v2417
      %v2428 = vadd.f32 %v2295, %v2419
      %v2429 = vadd.f32 %v2296, %v2378
      %v2430 = vadd.f32 %v2297, %v2380
      %v2431 = vadd.f32 %v2298, %v2421
      %v2432 = vadd.f32 %v2299, %v2423
      %s2433 = scalar_lea.vmem %s305, 128
      %v2434 = vld [vmem:[%s2433] sm:$0xf]
      %v2435 = vld [vmem:[%s2433 + $0x4] sm:$0xf]
      %2436 = vrot.lane.b32.xlu0 %v329, 18
      %v2437 = vpop.permute.xlu0 %2436
      %2438 = vrot.lane.b32.xlu0 %v330, 18
      %v2439 = vpop.permute.xlu0 %2438
      %2440 = vrot.lane.b32.xlu0 %v331, 18
      %v2441 = vpop.permute.xlu0 %2440
      %2442 = vrot.lane.b32.xlu0 %v322, 18
      %v2443 = vpop.permute.xlu0 %2442
      %vm2444 = vcmask 146432
      %v2445 = vsel %vm2444, %v2437, %v2439
      %v2446 = vsel %vm2444, %v2439, %v2441
      %v2447 = vsel %vm2444, %v2441, %v2443
      %2448 = vrot.lane.b32.xlu0 %v329, 34
      %v2449 = vpop.permute.xlu0 %2448
      %vm2450 = vcmask 277504
      %v2453 = vsel %vm2450, %v2447, %v2449
      %v2456 = vunpack.c.l.b16 %v2434
      %v2457 = vunpack.c.l.b16 %v2435
      %v2458 = vpack.c.b16 %v2457, %v2456
      %v2460 = vsel %vm374, %v2458, 0
      %v2463 = vsel %vm378, %v2445, 0
      %v2466 = vsel %vm378, %v2446, 0
      %v2468 = vsel %vm378, %v2453, 0
      %v2470 = vsel %vm378, %v2449, 0
      %2472 = vmatprep.subr.bf16.mxu0 0
      %2473 = vmatpush1.bf16.msra.mxu0 0
      %2474 = vmatprep.subr.bf16.mxu0 0
      %2475 = vmatpush1.bf16.msra.mxu0 0
      %2476 = vmatprep.subr.bf16.mxu0 0
      %2477 = vmatpush1.bf16.msra.mxu0 0
      %2478 = vmatprep.subr.bf16.mxu0 0
      %2479 = vmatpush1.bf16.msra.mxu0 0
      %2480 = vmatprep.subr.bf16.mxu0 0
      %2481 = vmatpush1.bf16.msra.mxu0 0
      %2482 = vmatprep.subr.bf16.mxu0 0
      %2483 = vmatpush1.bf16.msra.mxu0 0
      %2484 = vmatprep.subr.bf16.mxu0 0
      %2485 = vmatpush1.bf16.msra.mxu0 0
      %2486 = vmatprep.subr.bf16.mxu0 %v2466
      %2487 = vmatpush1.bf16.msra.mxu0 %v2463
      %2488 = vmatprep.subr.bf16.mxu0 0
      %2489 = vmatpush2.bf16.msra.mxu0 0
      %2490 = vmatprep.subr.bf16.mxu0 0
      %2491 = vmatpush2.bf16.msra.mxu0 0
      %2492 = vmatprep.subr.bf16.mxu0 0
      %2493 = vmatpush2.bf16.msra.mxu0 0
      %2494 = vmatprep.subr.bf16.mxu0 0
      %2495 = vmatpush2.bf16.msra.mxu0 0
      %2496 = vmatprep.subr.bf16.mxu0 0
      %2497 = vmatpush2.bf16.msra.mxu0 0
      %2498 = vmatprep.subr.bf16.mxu0 0
      %2499 = vmatpush2.bf16.msra.mxu0 0
      %2500 = vmatprep.subr.bf16.mxu0 0
      %2501 = vmatpush2.bf16.msra.mxu0 0
      %2502 = vmatprep.subr.bf16.mxu0 0
      %2503 = vmatpush2.bf16.msra.mxu0 0
      %2504 = vmatprep.mubr.bf16.mxu0 0
      %2505 = vmatmul.mubr.bf16.gmra.mxu0 %v2460
      %v2506 = vpop.f32.mrf.mxu0
      %v2507 = vadd.f32 0.0, %v2506
      %v2508 = vpop.f32.mrf.mxu0
      %v2509 = vadd.f32 0.0, %v2508
      %v2510 = vpop.f32.mrf.mxu0
      %v2511 = vadd.f32 0.0, %v2510
      %v2512 = vpop.f32.mrf.mxu0
      %v2513 = vadd.f32 0.0, %v2512
      %2514 = vdwg.mxu0
      %2515 = vmatprep.subr.bf16.mxu0 0
      %2516 = vmatpush1.bf16.msra.mxu0 0
      %2517 = vmatprep.subr.bf16.mxu0 0
      %2518 = vmatpush1.bf16.msra.mxu0 0
      %2519 = vmatprep.subr.bf16.mxu0 0
      %2520 = vmatpush1.bf16.msra.mxu0 0
      %2521 = vmatprep.subr.bf16.mxu0 0
      %2522 = vmatpush1.bf16.msra.mxu0 0
      %2523 = vmatprep.subr.bf16.mxu0 0
      %2524 = vmatpush1.bf16.msra.mxu0 0
      %2525 = vmatprep.subr.bf16.mxu0 0
      %2526 = vmatpush1.bf16.msra.mxu0 0
      %2527 = vmatprep.subr.bf16.mxu0 0
      %2528 = vmatpush1.bf16.msra.mxu0 0
      %2529 = vmatprep.subr.bf16.mxu0 %v2470
      %2530 = vmatpush1.bf16.msra.mxu0 %v2468
      %2531 = vmatprep.subr.bf16.mxu0 0
      %2532 = vmatpush2.bf16.msra.mxu0 0
      %2533 = vmatprep.subr.bf16.mxu0 0
      %2534 = vmatpush2.bf16.msra.mxu0 0
      %2535 = vmatprep.subr.bf16.mxu0 0
      %2536 = vmatpush2.bf16.msra.mxu0 0
      %2537 = vmatprep.subr.bf16.mxu0 0
      %2538 = vmatpush2.bf16.msra.mxu0 0
      %2539 = vmatprep.subr.bf16.mxu0 0
      %2540 = vmatpush2.bf16.msra.mxu0 0
      %2541 = vmatprep.subr.bf16.mxu0 0
      %2542 = vmatpush2.bf16.msra.mxu0 0
      %2543 = vmatprep.subr.bf16.mxu0 0
      %2544 = vmatpush2.bf16.msra.mxu0 0
      %2545 = vmatprep.subr.bf16.mxu0 0
      %2546 = vmatpush2.bf16.msra.mxu0 0
      %2547 = vmatprep.mubr.bf16.mxu0 0
      %2548 = vmatmul.mubr.bf16.gmra.mxu0 %v2460
      %v2549 = vpop.f32.mrf.mxu0
      %v2550 = vadd.f32 0.0, %v2549
      %v2551 = vpop.f32.mrf.mxu0
      %v2552 = vadd.f32 0.0, %v2551
      %v2553 = vpop.f32.mrf.mxu0
      %v2554 = vadd.f32 0.0, %v2553
      %v2555 = vpop.f32.mrf.mxu0
      %v2556 = vadd.f32 0.0, %v2555
      %2557 = vdwg.mxu0
      %v2558 = vadd.f32 %v2425, %v2507
      %v2559 = vadd.f32 %v2426, %v2509
      %v2560 = vadd.f32 %v2427, %v2550
      %v2561 = vadd.f32 %v2428, %v2552
      %v2562 = vadd.f32 %v2429, %v2511
      %v2563 = vadd.f32 %v2430, %v2513
      %v2564 = vadd.f32 %v2431, %v2554
      %v2565 = vadd.f32 %v2432, %v2556
      %s2566 = scalar_lea.vmem %s305, 136
      %v2567 = vld [vmem:[%s2566] sm:$0xf]
      %v2568 = vld [vmem:[%s2566 + $0x4] sm:$0xf]
      %2569 = vrot.lane.b32.xlu0 %v329, 17
      %v2570 = vpop.permute.xlu0 %2569
      %2571 = vrot.lane.b32.xlu0 %v330, 17
      %v2572 = vpop.permute.xlu0 %2571
      %2573 = vrot.lane.b32.xlu0 %v331, 17
      %v2574 = vpop.permute.xlu0 %2573
      %2575 = vrot.lane.b32.xlu0 %v322, 17
      %v2576 = vpop.permute.xlu0 %2575
      %vm2577 = vcmask 138240
      %v2578 = vsel %vm2577, %v2570, %v2572
      %v2579 = vsel %vm2577, %v2572, %v2574
      %v2580 = vsel %vm2577, %v2574, %v2576
      %2581 = vrot.lane.b32.xlu0 %v329, 33
      %v2582 = vpop.permute.xlu0 %2581
      %vm2583 = vcmask 269312
      %v2586 = vsel %vm2583, %v2580, %v2582
      %v2589 = vunpack.c.l.b16 %v2567
      %v2590 = vunpack.c.l.b16 %v2568
      %v2591 = vpack.c.b16 %v2590, %v2589
      %v2593 = vsel %vm374, %v2591, 0
      %v2596 = vsel %vm378, %v2578, 0
      %v2599 = vsel %vm378, %v2579, 0
      %v2601 = vsel %vm378, %v2586, 0
      %v2603 = vsel %vm378, %v2582, 0
      %2605 = vmatprep.subr.bf16.mxu0 0
      %2606 = vmatpush1.bf16.msra.mxu0 0
      %2607 = vmatprep.subr.bf16.mxu0 0
      %2608 = vmatpush1.bf16.msra.mxu0 0
      %2609 = vmatprep.subr.bf16.mxu0 0
      %2610 = vmatpush1.bf16.msra.mxu0 0
      %2611 = vmatprep.subr.bf16.mxu0 0
      %2612 = vmatpush1.bf16.msra.mxu0 0
      %2613 = vmatprep.subr.bf16.mxu0 0
      %2614 = vmatpush1.bf16.msra.mxu0 0
      %2615 = vmatprep.subr.bf16.mxu0 0
      %2616 = vmatpush1.bf16.msra.mxu0 0
      %2617 = vmatprep.subr.bf16.mxu0 0
      %2618 = vmatpush1.bf16.msra.mxu0 0
      %2619 = vmatprep.subr.bf16.mxu0 %v2599
      %2620 = vmatpush1.bf16.msra.mxu0 %v2596
      %2621 = vmatprep.subr.bf16.mxu0 0
      %2622 = vmatpush2.bf16.msra.mxu0 0
      %2623 = vmatprep.subr.bf16.mxu0 0
      %2624 = vmatpush2.bf16.msra.mxu0 0
      %2625 = vmatprep.subr.bf16.mxu0 0
      %2626 = vmatpush2.bf16.msra.mxu0 0
      %2627 = vmatprep.subr.bf16.mxu0 0
      %2628 = vmatpush2.bf16.msra.mxu0 0
      %2629 = vmatprep.subr.bf16.mxu0 0
      %2630 = vmatpush2.bf16.msra.mxu0 0
      %2631 = vmatprep.subr.bf16.mxu0 0
      %2632 = vmatpush2.bf16.msra.mxu0 0
      %2633 = vmatprep.subr.bf16.mxu0 0
      %2634 = vmatpush2.bf16.msra.mxu0 0
      %2635 = vmatprep.subr.bf16.mxu0 0
      %2636 = vmatpush2.bf16.msra.mxu0 0
      %2637 = vmatprep.mubr.bf16.mxu0 0
      %2638 = vmatmul.mubr.bf16.gmra.mxu0 %v2593
      %v2639 = vpop.f32.mrf.mxu0
      %v2640 = vadd.f32 0.0, %v2639
      %v2641 = vpop.f32.mrf.mxu0
      %v2642 = vadd.f32 0.0, %v2641
      %v2643 = vpop.f32.mrf.mxu0
      %v2644 = vadd.f32 0.0, %v2643
      %v2645 = vpop.f32.mrf.mxu0
      %v2646 = vadd.f32 0.0, %v2645
      %2647 = vdwg.mxu0
      %2648 = vmatprep.subr.bf16.mxu0 0
      %2649 = vmatpush1.bf16.msra.mxu0 0
      %2650 = vmatprep.subr.bf16.mxu0 0
      %2651 = vmatpush1.bf16.msra.mxu0 0
      %2652 = vmatprep.subr.bf16.mxu0 0
      %2653 = vmatpush1.bf16.msra.mxu0 0
      %2654 = vmatprep.subr.bf16.mxu0 0
      %2655 = vmatpush1.bf16.msra.mxu0 0
      %2656 = vmatprep.subr.bf16.mxu0 0
      %2657 = vmatpush1.bf16.msra.mxu0 0
      %2658 = vmatprep.subr.bf16.mxu0 0
      %2659 = vmatpush1.bf16.msra.mxu0 0
      %2660 = vmatprep.subr.bf16.mxu0 0
      %2661 = vmatpush1.bf16.msra.mxu0 0
      %2662 = vmatprep.subr.bf16.mxu0 %v2603
      %2663 = vmatpush1.bf16.msra.mxu0 %v2601
      %2664 = vmatprep.subr.bf16.mxu0 0
      %2665 = vmatpush2.bf16.msra.mxu0 0
      %2666 = vmatprep.subr.bf16.mxu0 0
      %2667 = vmatpush2.bf16.msra.mxu0 0
      %2668 = vmatprep.subr.bf16.mxu0 0
      %2669 = vmatpush2.bf16.msra.mxu0 0
      %2670 = vmatprep.subr.bf16.mxu0 0
      %2671 = vmatpush2.bf16.msra.mxu0 0
      %2672 = vmatprep.subr.bf16.mxu0 0
      %2673 = vmatpush2.bf16.msra.mxu0 0
      %2674 = vmatprep.subr.bf16.mxu0 0
      %2675 = vmatpush2.bf16.msra.mxu0 0
      %2676 = vmatprep.subr.bf16.mxu0 0
      %2677 = vmatpush2.bf16.msra.mxu0 0
      %2678 = vmatprep.subr.bf16.mxu0 0
      %2679 = vmatpush2.bf16.msra.mxu0 0
      %2680 = vmatprep.mubr.bf16.mxu0 0
      %2681 = vmatmul.mubr.bf16.gmra.mxu0 %v2593
      %v2682 = vpop.f32.mrf.mxu0
      %v2683 = vadd.f32 0.0, %v2682
      %v2684 = vpop.f32.mrf.mxu0
      %v2685 = vadd.f32 0.0, %v2684
      %v2686 = vpop.f32.mrf.mxu0
      %v2687 = vadd.f32 0.0, %v2686
      %v2688 = vpop.f32.mrf.mxu0
      %v2689 = vadd.f32 0.0, %v2688
      %2690 = vdwg.mxu0
      %v2691 = vadd.f32 %v2558, %v2640
      %v2692 = vadd.f32 %v2559, %v2642
      %v2693 = vadd.f32 %v2560, %v2683
      %v2694 = vadd.f32 %v2561, %v2685
      %v2695 = vadd.f32 %v2562, %v2644
      %v2696 = vadd.f32 %v2563, %v2646
      %v2697 = vadd.f32 %v2564, %v2687
      %v2698 = vadd.f32 %v2565, %v2689
      %v2699 = vld [vmem:[%s2] sm:$0xf]
      %v2700 = vxor.u32 %v2691, 2147483648
      %v2701 = vxor.u32 %v2692, 2147483648
      %v2702 = vxor.u32 %v2693, 2147483648
      %v2703 = vxor.u32 %v2694, 2147483648
      %v2704 = vxor.u32 %v2695, 2147483648
      %v2705 = vxor.u32 %v2696, 2147483648
      %v2706 = vxor.u32 %v2697, 2147483648
      %v2707 = vxor.u32 %v2698, 2147483648
      %v2708 = vmul.f32 %v2700, 1.442695
      %v2709 = vpow.pop %v2708
      %v2710 = vmul.f32 %v2701, 1.442695
      %v2711 = vpow.pop %v2710
      %v2712 = vmul.f32 %v2702, 1.442695
      %v2713 = vpow.pop %v2712
      %v2714 = vmul.f32 %v2703, 1.442695
      %v2715 = vpow.pop %v2714
      %v2716 = vmul.f32 %v2704, 1.442695
      %v2717 = vpow.pop %v2716
      %v2718 = vmul.f32 %v2705, 1.442695
      %v2719 = vpow.pop %v2718
      %v2720 = vmul.f32 %v2706, 1.442695
      %v2721 = vpow.pop %v2720
      %v2722 = vmul.f32 %v2707, 1.442695
      %v2723 = vpow.pop %v2722
      %v2724 = vadd.f32 %v2709, 1.0
      %v2725 = vadd.f32 %v2711, 1.0
      %v2726 = vadd.f32 %v2713, 1.0
      %v2727 = vadd.f32 %v2715, 1.0
      %v2728 = vadd.f32 %v2717, 1.0
      %v2729 = vadd.f32 %v2719, 1.0
      %v2730 = vadd.f32 %v2721, 1.0
      %v2731 = vadd.f32 %v2723, 1.0
      %v2732 = vrcp.pop %v2724
      %v2733 = vmul.f32 1.0, %v2732
      %v2734 = vrcp.pop %v2725
      %v2735 = vmul.f32 1.0, %v2734
      %v2736 = vrcp.pop %v2726
      %v2737 = vmul.f32 1.0, %v2736
      %v2738 = vrcp.pop %v2727
      %v2739 = vmul.f32 1.0, %v2738
      %v2740 = vrcp.pop %v2728
      %v2741 = vmul.f32 1.0, %v2740
      %v2742 = vrcp.pop %v2729
      %v2743 = vmul.f32 1.0, %v2742
      %v2744 = vrcp.pop %v2730
      %v2745 = vmul.f32 1.0, %v2744
      %v2746 = vrcp.pop %v2731
      %v2747 = vmul.f32 1.0, %v2746
      %v2748 = vmul.f32 %v2691, %v2733
      %v2749 = vmul.f32 %v2692, %v2735
      %v2750 = vmul.f32 %v2693, %v2737
      %v2751 = vmul.f32 %v2694, %v2739
      %v2752 = vmul.f32 %v2695, %v2741
      %v2753 = vmul.f32 %v2696, %v2743
      %v2754 = vmul.f32 %v2697, %v2745
      %v2755 = vmul.f32 %v2698, %v2747
      %v2756 = vmul.f32 %v2748, 1.6778524
      %v2757 = vmul.f32 %v2749, 1.6778524
      %v2758 = vmul.f32 %v2750, 1.6778524
      %v2759 = vmul.f32 %v2751, 1.6778524
      %v2760 = vmul.f32 %v2752, 1.6778524
      %v2761 = vmul.f32 %v2753, 1.6778524
      %v2762 = vmul.f32 %v2754, 1.6778524
      %v2763 = vmul.f32 %v2755, 1.6778524
      %v2765 = vlaneseq
      %v2766 = vshrl.u32 %v2765, 7
      %v2767 = vsub.s32 0, %v2766
      %v2768 = vrot.slane %v2699, %v2767
      %v2769 = vlaneseq
      %v2770 = vshrl.u32 %v2769, 7
      %v2771 = vsub.s32 1, %v2770
      %v2772 = vrot.slane %v2699, %v2771
      %v2773 = vlaneseq
      %v2774 = vshrl.u32 %v2773, 7
      %v2775 = vsub.s32 2, %v2774
      %v2776 = vrot.slane %v2699, %v2775
      %v2777 = vlaneseq
      %v2778 = vshrl.u32 %v2777, 7
      %v2779 = vsub.s32 3, %v2778
      %v2780 = vrot.slane %v2699, %v2779
      %v2785 = vmul.f32 %v2768, %v2756
      %v2786 = vmul.f32 %v2772, %v2757
      %v2787 = vmul.f32 %v2776, %v2758
      %v2788 = vmul.f32 %v2780, %v2759
      %v2789 = vmul.f32 %v2768, %v2760
      %v2790 = vmul.f32 %v2772, %v2761
      %v2791 = vmul.f32 %v2776, %v2762
      %v2792 = vmul.f32 %v2780, %v2763
      %v2793 = vpack.c.bf16 %v2789, %v2785
      %v2794 = vpack.c.bf16 %v2790, %v2786
      %v2795 = vpack.c.bf16 %v2791, %v2787
      %v2796 = vpack.c.bf16 %v2792, %v2788
      %v2797 = vld [vmem:[%s4] sm:$0xf]
      %2799 = vrot.lane.b32.xlu0 %v2796, 123
      %v2800 = vpop.permute.xlu0 %2799
      %2804 = vrot.lane.b32.xlu0 %v2793, 11
      %v2805 = vpop.permute.xlu0 %2804
      %2806 = vrot.lane.b32.xlu0 %v2794, 11
      %v2807 = vpop.permute.xlu0 %2806
      %2808 = vrot.lane.b32.xlu0 %v2795, 11
      %v2809 = vpop.permute.xlu0 %2808
      %2810 = vrot.lane.b32.xlu0 %v2796, 11
      %v2811 = vpop.permute.xlu0 %2810
      %v2812 = vsel %vm340, %v2805, %v2807
      %v2813 = vsel %vm340, %v2807, %v2809
      %v2814 = vsel %vm340, %v2809, %v2811
      %v2820 = vsel %vm344, %v2800, %v2805
      %s2822 = scalar_lea.vmem %s4, 4
      %v2823 = vld [vmem:[%s2822] sm:$0xf]
      %2824 = vrot.lane.b32.xlu0 %v2796, 122
      %v2825 = vpop.permute.xlu0 %2824
      %2826 = vrot.lane.b32.xlu0 %v2793, 10
      %v2827 = vpop.permute.xlu0 %2826
      %2828 = vrot.lane.b32.xlu0 %v2794, 10
      %v2829 = vpop.permute.xlu0 %2828
      %2830 = vrot.lane.b32.xlu0 %v2795, 10
      %v2831 = vpop.permute.xlu0 %2830
      %2832 = vrot.lane.b32.xlu0 %v2796, 10
      %v2833 = vpop.permute.xlu0 %2832
      %v2834 = vsel %vm361, %v2827, %v2829
      %v2835 = vsel %vm361, %v2829, %v2831
      %v2836 = vsel %vm361, %v2831, %v2833
      %v2842 = vsel %vm365, %v2825, %v2827
      %vm2844 = vcmask 130048
      %v2846 = vsel %vm2844, %v2823, 0
      %2848 = vmatprep.subr.bf16.mxu0 0
      %2849 = vmatpush1.bf16.msra.mxu0 0
      %2850 = vmatprep.subr.bf16.mxu0 0
      %2851 = vmatpush1.bf16.msra.mxu0 0
      %2852 = vmatprep.subr.bf16.mxu0 0
      %2853 = vmatpush1.bf16.msra.mxu0 0
      %2854 = vmatprep.subr.bf16.mxu0 0
      %2855 = vmatpush1.bf16.msra.mxu0 0
      %2856 = vmatprep.subr.bf16.mxu0 0
      %2857 = vmatpush1.bf16.msra.mxu0 0
      %2858 = vmatprep.subr.bf16.mxu0 0
      %2859 = vmatpush1.bf16.msra.mxu0 0
      %2860 = vmatprep.subr.bf16.mxu0 0
      %2861 = vmatpush1.bf16.msra.mxu0 0
      %2862 = vmatprep.subr.bf16.mxu0 %v2834
      %2863 = vmatpush1.bf16.msra.mxu0 %v2842
      %2864 = vmatprep.subr.bf16.mxu0 0
      %2865 = vmatpush2.bf16.msra.mxu0 0
      %2866 = vmatprep.subr.bf16.mxu0 0
      %2867 = vmatpush2.bf16.msra.mxu0 0
      %2868 = vmatprep.subr.bf16.mxu0 0
      %2869 = vmatpush2.bf16.msra.mxu0 0
      %2870 = vmatprep.subr.bf16.mxu0 0
      %2871 = vmatpush2.bf16.msra.mxu0 0
      %2872 = vmatprep.subr.bf16.mxu0 0
      %2873 = vmatpush2.bf16.msra.mxu0 0
      %2874 = vmatprep.subr.bf16.mxu0 0
      %2875 = vmatpush2.bf16.msra.mxu0 0
      %2876 = vmatprep.subr.bf16.mxu0 0
      %2877 = vmatpush2.bf16.msra.mxu0 0
      %2878 = vmatprep.subr.bf16.mxu0 0
      %2879 = vmatpush2.bf16.msra.mxu0 0
      %2880 = vmatprep.mubr.bf16.mxu0 0
      %2881 = vmatmul.mubr.bf16.gmra.mxu0 %v2846
      %v2882 = vpop.f32.mrf.mxu0
      %v2883 = vadd.f32 0.0, %v2882
      %v2884 = vpop.f32.mrf.mxu0
      %v2885 = vadd.f32 0.0, %v2884
      %v2886 = vpop.f32.mrf.mxu0
      %v2887 = vpop.f32.mrf.mxu0
      %2888 = vdwg.mxu0
      %2889 = vmatprep.subr.bf16.mxu0 0
      %2890 = vmatpush1.bf16.msra.mxu0 0
      %2891 = vmatprep.subr.bf16.mxu0 0
      %2892 = vmatpush1.bf16.msra.mxu0 0
      %2893 = vmatprep.subr.bf16.mxu0 0
      %2894 = vmatpush1.bf16.msra.mxu0 0
      %2895 = vmatprep.subr.bf16.mxu0 0
      %2896 = vmatpush1.bf16.msra.mxu0 0
      %2897 = vmatprep.subr.bf16.mxu0 0
      %2898 = vmatpush1.bf16.msra.mxu0 0
      %2899 = vmatprep.subr.bf16.mxu0 0
      %2900 = vmatpush1.bf16.msra.mxu0 0
      %2901 = vmatprep.subr.bf16.mxu0 0
      %2902 = vmatpush1.bf16.msra.mxu0 0
      %2903 = vmatprep.subr.bf16.mxu0 %v2836
      %2904 = vmatpush1.bf16.msra.mxu0 %v2835
      %2905 = vmatprep.subr.bf16.mxu0 0
      %2906 = vmatpush2.bf16.msra.mxu0 0
      %2907 = vmatprep.subr.bf16.mxu0 0
      %2908 = vmatpush2.bf16.msra.mxu0 0
      %2909 = vmatprep.subr.bf16.mxu0 0
      %2910 = vmatpush2.bf16.msra.mxu0 0
      %2911 = vmatprep.subr.bf16.mxu0 0
      %2912 = vmatpush2.bf16.msra.mxu0 0
      %2913 = vmatprep.subr.bf16.mxu0 0
      %2914 = vmatpush2.bf16.msra.mxu0 0
      %2915 = vmatprep.subr.bf16.mxu0 0
      %2916 = vmatpush2.bf16.msra.mxu0 0
      %2917 = vmatprep.subr.bf16.mxu0 0
      %2918 = vmatpush2.bf16.msra.mxu0 0
      %2919 = vmatprep.subr.bf16.mxu0 0
      %2920 = vmatpush2.bf16.msra.mxu0 0
      %2921 = vmatprep.mubr.bf16.mxu0 0
      %2922 = vmatmul.mubr.bf16.gmra.mxu0 %v2846
      %v2923 = vpop.f32.mrf.mxu0
      %v2924 = vadd.f32 0.0, %v2923
      %v2925 = vpop.f32.mrf.mxu0
      %v2926 = vadd.f32 0.0, %v2925
      %v2927 = vpop.f32.mrf.mxu0
      %v2928 = vpop.f32.mrf.mxu0
      %2929 = vdwg.mxu0
      %v2931 = vsel %vm2844, %v2797, 0
      %2933 = vmatprep.subr.bf16.mxu0 0
      %2934 = vmatpush1.bf16.msra.mxu0 0
      %2935 = vmatprep.subr.bf16.mxu0 0
      %2936 = vmatpush1.bf16.msra.mxu0 0
      %2937 = vmatprep.subr.bf16.mxu0 0
      %2938 = vmatpush1.bf16.msra.mxu0 0
      %2939 = vmatprep.subr.bf16.mxu0 0
      %2940 = vmatpush1.bf16.msra.mxu0 0
      %2941 = vmatprep.subr.bf16.mxu0 0
      %2942 = vmatpush1.bf16.msra.mxu0 0
      %2943 = vmatprep.subr.bf16.mxu0 0
      %2944 = vmatpush1.bf16.msra.mxu0 0
      %2945 = vmatprep.subr.bf16.mxu0 0
      %2946 = vmatpush1.bf16.msra.mxu0 0
      %2947 = vmatprep.subr.bf16.mxu0 %v2812
      %2948 = vmatpush1.bf16.msra.mxu0 %v2820
      %2949 = vmatprep.subr.bf16.mxu0 0
      %2950 = vmatpush2.bf16.msra.mxu0 0
      %2951 = vmatprep.subr.bf16.mxu0 0
      %2952 = vmatpush2.bf16.msra.mxu0 0
      %2953 = vmatprep.subr.bf16.mxu0 0
      %2954 = vmatpush2.bf16.msra.mxu0 0
      %2955 = vmatprep.subr.bf16.mxu0 0
      %2956 = vmatpush2.bf16.msra.mxu0 0
      %2957 = vmatprep.subr.bf16.mxu0 0
      %2958 = vmatpush2.bf16.msra.mxu0 0
      %2959 = vmatprep.subr.bf16.mxu0 0
      %2960 = vmatpush2.bf16.msra.mxu0 0
      %2961 = vmatprep.subr.bf16.mxu0 0
      %2962 = vmatpush2.bf16.msra.mxu0 0
      %2963 = vmatprep.subr.bf16.mxu0 0
      %2964 = vmatpush2.bf16.msra.mxu0 0
      %2965 = vmatprep.mubr.bf16.mxu0 0
      %2966 = vmatmul.mubr.bf16.gmra.mxu0 %v2931
      %v2967 = vpop.f32.mrf.mxu0
      %v2968 = vadd.f32 %v2883, %v2967
      %v2969 = vpop.f32.mrf.mxu0
      %v2970 = vadd.f32 %v2885, %v2969
      %v2971 = vpop.f32.mrf.mxu0
      %v2972 = vpop.f32.mrf.mxu0
      %2973 = vdwg.mxu0
      %2974 = vmatprep.subr.bf16.mxu0 0
      %2975 = vmatpush1.bf16.msra.mxu0 0
      %2976 = vmatprep.subr.bf16.mxu0 0
      %2977 = vmatpush1.bf16.msra.mxu0 0
      %2978 = vmatprep.subr.bf16.mxu0 0
      %2979 = vmatpush1.bf16.msra.mxu0 0
      %2980 = vmatprep.subr.bf16.mxu0 0
      %2981 = vmatpush1.bf16.msra.mxu0 0
      %2982 = vmatprep.subr.bf16.mxu0 0
      %2983 = vmatpush1.bf16.msra.mxu0 0
      %2984 = vmatprep.subr.bf16.mxu0 0
      %2985 = vmatpush1.bf16.msra.mxu0 0
      %2986 = vmatprep.subr.bf16.mxu0 0
      %2987 = vmatpush1.bf16.msra.mxu0 0
      %2988 = vmatprep.subr.bf16.mxu0 %v2814
      %2989 = vmatpush1.bf16.msra.mxu0 %v2813
      %2990 = vmatprep.subr.bf16.mxu0 0
      %2991 = vmatpush2.bf16.msra.mxu0 0
      %2992 = vmatprep.subr.bf16.mxu0 0
      %2993 = vmatpush2.bf16.msra.mxu0 0
      %2994 = vmatprep.subr.bf16.mxu0 0
      %2995 = vmatpush2.bf16.msra.mxu0 0
      %2996 = vmatprep.subr.bf16.mxu0 0
      %2997 = vmatpush2.bf16.msra.mxu0 0
      %2998 = vmatprep.subr.bf16.mxu0 0
      %2999 = vmatpush2.bf16.msra.mxu0 0
      %3000 = vmatprep.subr.bf16.mxu0 0
      %3001 = vmatpush2.bf16.msra.mxu0 0
      %3002 = vmatprep.subr.bf16.mxu0 0
      %3003 = vmatpush2.bf16.msra.mxu0 0
      %3004 = vmatprep.subr.bf16.mxu0 0
      %3005 = vmatpush2.bf16.msra.mxu0 0
      %3006 = vmatprep.mubr.bf16.mxu0 0
      %3007 = vmatmul.mubr.bf16.gmra.mxu0 %v2931
      %v3008 = vpop.f32.mrf.mxu0
      %v3009 = vadd.f32 %v2924, %v3008
      %v3010 = vpop.f32.mrf.mxu0
      %v3011 = vadd.f32 %v2926, %v3010
      %v3012 = vpop.f32.mrf.mxu0
      %v3013 = vpop.f32.mrf.mxu0
      %3014 = vdwg.mxu0
      %s3015 = scalar_lea.vmem %s4, 8
      %v3016 = vld [vmem:[%s3015] sm:$0xf]
      %3017 = vrot.lane.b32.xlu0 %v2796, 121
      %v3018 = vpop.permute.xlu0 %3017
      %3019 = vrot.lane.b32.xlu0 %v2793, 9
      %v3020 = vpop.permute.xlu0 %3019
      %3021 = vrot.lane.b32.xlu0 %v2794, 9
      %v3022 = vpop.permute.xlu0 %3021
      %3023 = vrot.lane.b32.xlu0 %v2795, 9
      %v3024 = vpop.permute.xlu0 %3023
      %3025 = vrot.lane.b32.xlu0 %v2796, 9
      %v3026 = vpop.permute.xlu0 %3025
      %v3027 = vsel %vm594, %v3020, %v3022
      %v3028 = vsel %vm594, %v3022, %v3024
      %v3029 = vsel %vm594, %v3024, %v3026
      %v3035 = vsel %vm598, %v3018, %v3020
      %v3038 = vsel %vm2844, %v3016, 0
      %3040 = vmatprep.subr.bf16.mxu0 0
      %3041 = vmatpush1.bf16.msra.mxu0 0
      %3042 = vmatprep.subr.bf16.mxu0 0
      %3043 = vmatpush1.bf16.msra.mxu0 0
      %3044 = vmatprep.subr.bf16.mxu0 0
      %3045 = vmatpush1.bf16.msra.mxu0 0
      %3046 = vmatprep.subr.bf16.mxu0 0
      %3047 = vmatpush1.bf16.msra.mxu0 0
      %3048 = vmatprep.subr.bf16.mxu0 0
      %3049 = vmatpush1.bf16.msra.mxu0 0
      %3050 = vmatprep.subr.bf16.mxu0 0
      %3051 = vmatpush1.bf16.msra.mxu0 0
      %3052 = vmatprep.subr.bf16.mxu0 0
      %3053 = vmatpush1.bf16.msra.mxu0 0
      %3054 = vmatprep.subr.bf16.mxu0 %v3027
      %3055 = vmatpush1.bf16.msra.mxu0 %v3035
      %3056 = vmatprep.subr.bf16.mxu0 0
      %3057 = vmatpush2.bf16.msra.mxu0 0
      %3058 = vmatprep.subr.bf16.mxu0 0
      %3059 = vmatpush2.bf16.msra.mxu0 0
      %3060 = vmatprep.subr.bf16.mxu0 0
      %3061 = vmatpush2.bf16.msra.mxu0 0
      %3062 = vmatprep.subr.bf16.mxu0 0
      %3063 = vmatpush2.bf16.msra.mxu0 0
      %3064 = vmatprep.subr.bf16.mxu0 0
      %3065 = vmatpush2.bf16.msra.mxu0 0
      %3066 = vmatprep.subr.bf16.mxu0 0
      %3067 = vmatpush2.bf16.msra.mxu0 0
      %3068 = vmatprep.subr.bf16.mxu0 0
      %3069 = vmatpush2.bf16.msra.mxu0 0
      %3070 = vmatprep.subr.bf16.mxu0 0
      %3071 = vmatpush2.bf16.msra.mxu0 0
      %3072 = vmatprep.mubr.bf16.mxu0 0
      %3073 = vmatmul.mubr.bf16.gmra.mxu0 %v3038
      %v3074 = vpop.f32.mrf.mxu0
      %v3075 = vadd.f32 0.0, %v3074
      %v3076 = vpop.f32.mrf.mxu0
      %v3077 = vadd.f32 0.0, %v3076
      %v3078 = vpop.f32.mrf.mxu0
      %v3079 = vpop.f32.mrf.mxu0
      %3080 = vdwg.mxu0
      %3081 = vmatprep.subr.bf16.mxu0 0
      %3082 = vmatpush1.bf16.msra.mxu0 0
      %3083 = vmatprep.subr.bf16.mxu0 0
      %3084 = vmatpush1.bf16.msra.mxu0 0
      %3085 = vmatprep.subr.bf16.mxu0 0
      %3086 = vmatpush1.bf16.msra.mxu0 0
      %3087 = vmatprep.subr.bf16.mxu0 0
      %3088 = vmatpush1.bf16.msra.mxu0 0
      %3089 = vmatprep.subr.bf16.mxu0 0
      %3090 = vmatpush1.bf16.msra.mxu0 0
      %3091 = vmatprep.subr.bf16.mxu0 0
      %3092 = vmatpush1.bf16.msra.mxu0 0
      %3093 = vmatprep.subr.bf16.mxu0 0
      %3094 = vmatpush1.bf16.msra.mxu0 0
      %3095 = vmatprep.subr.bf16.mxu0 %v3029
      %3096 = vmatpush1.bf16.msra.mxu0 %v3028
      %3097 = vmatprep.subr.bf16.mxu0 0
      %3098 = vmatpush2.bf16.msra.mxu0 0
      %3099 = vmatprep.subr.bf16.mxu0 0
      %3100 = vmatpush2.bf16.msra.mxu0 0
      %3101 = vmatprep.subr.bf16.mxu0 0
      %3102 = vmatpush2.bf16.msra.mxu0 0
      %3103 = vmatprep.subr.bf16.mxu0 0
      %3104 = vmatpush2.bf16.msra.mxu0 0
      %3105 = vmatprep.subr.bf16.mxu0 0
      %3106 = vmatpush2.bf16.msra.mxu0 0
      %3107 = vmatprep.subr.bf16.mxu0 0
      %3108 = vmatpush2.bf16.msra.mxu0 0
      %3109 = vmatprep.subr.bf16.mxu0 0
      %3110 = vmatpush2.bf16.msra.mxu0 0
      %3111 = vmatprep.subr.bf16.mxu0 0
      %3112 = vmatpush2.bf16.msra.mxu0 0
      %3113 = vmatprep.mubr.bf16.mxu0 0
      %3114 = vmatmul.mubr.bf16.gmra.mxu0 %v3038
      %v3115 = vpop.f32.mrf.mxu0
      %v3116 = vadd.f32 0.0, %v3115
      %v3117 = vpop.f32.mrf.mxu0
      %v3118 = vadd.f32 0.0, %v3117
      %v3119 = vpop.f32.mrf.mxu0
      %v3120 = vpop.f32.mrf.mxu0
      %3121 = vdwg.mxu0
      %v3122 = vadd.f32 %v2968, %v3075
      %v3123 = vadd.f32 %v2970, %v3077
      %v3124 = vadd.f32 %v3009, %v3116
      %v3125 = vadd.f32 %v3011, %v3118
      %s3126 = scalar_lea.vmem %s4, 12
      %v3127 = vld [vmem:[%s3126] sm:$0xf]
      %3128 = vrot.lane.b32.xlu0 %v2796, 113
      %v3129 = vpop.permute.xlu0 %3128
      %3130 = vrot.lane.b32.xlu0 %v2793, 1
      %v3131 = vpop.permute.xlu0 %3130
      %3132 = vrot.lane.b32.xlu0 %v2794, 1
      %v3133 = vpop.permute.xlu0 %3132
      %3134 = vrot.lane.b32.xlu0 %v2795, 1
      %v3135 = vpop.permute.xlu0 %3134
      %3136 = vrot.lane.b32.xlu0 %v2796, 1
      %v3137 = vpop.permute.xlu0 %3136
      %v3138 = vsel %vm728, %v3131, %v3133
      %v3139 = vsel %vm728, %v3133, %v3135
      %v3140 = vsel %vm728, %v3135, %v3137
      %v3146 = vsel %vm732, %v3129, %v3131
      %v3149 = vsel %vm2844, %v3127, 0
      %3151 = vmatprep.subr.bf16.mxu0 0
      %3152 = vmatpush1.bf16.msra.mxu0 0
      %3153 = vmatprep.subr.bf16.mxu0 0
      %3154 = vmatpush1.bf16.msra.mxu0 0
      %3155 = vmatprep.subr.bf16.mxu0 0
      %3156 = vmatpush1.bf16.msra.mxu0 0
      %3157 = vmatprep.subr.bf16.mxu0 0
      %3158 = vmatpush1.bf16.msra.mxu0 0
      %3159 = vmatprep.subr.bf16.mxu0 0
      %3160 = vmatpush1.bf16.msra.mxu0 0
      %3161 = vmatprep.subr.bf16.mxu0 0
      %3162 = vmatpush1.bf16.msra.mxu0 0
      %3163 = vmatprep.subr.bf16.mxu0 0
      %3164 = vmatpush1.bf16.msra.mxu0 0
      %3165 = vmatprep.subr.bf16.mxu0 %v3138
      %3166 = vmatpush1.bf16.msra.mxu0 %v3146
      %3167 = vmatprep.subr.bf16.mxu0 0
      %3168 = vmatpush2.bf16.msra.mxu0 0
      %3169 = vmatprep.subr.bf16.mxu0 0
      %3170 = vmatpush2.bf16.msra.mxu0 0
      %3171 = vmatprep.subr.bf16.mxu0 0
      %3172 = vmatpush2.bf16.msra.mxu0 0
      %3173 = vmatprep.subr.bf16.mxu0 0
      %3174 = vmatpush2.bf16.msra.mxu0 0
      %3175 = vmatprep.subr.bf16.mxu0 0
      %3176 = vmatpush2.bf16.msra.mxu0 0
      %3177 = vmatprep.subr.bf16.mxu0 0
      %3178 = vmatpush2.bf16.msra.mxu0 0
      %3179 = vmatprep.subr.bf16.mxu0 0
      %3180 = vmatpush2.bf16.msra.mxu0 0
      %3181 = vmatprep.subr.bf16.mxu0 0
      %3182 = vmatpush2.bf16.msra.mxu0 0
      %3183 = vmatprep.mubr.bf16.mxu0 0
      %3184 = vmatmul.mubr.bf16.gmra.mxu0 %v3149
      %v3185 = vpop.f32.mrf.mxu0
      %v3186 = vadd.f32 0.0, %v3185
      %v3187 = vpop.f32.mrf.mxu0
      %v3188 = vadd.f32 0.0, %v3187
      %v3189 = vpop.f32.mrf.mxu0
      %v3190 = vpop.f32.mrf.mxu0
      %3191 = vdwg.mxu0
      %3192 = vmatprep.subr.bf16.mxu0 0
      %3193 = vmatpush1.bf16.msra.mxu0 0
      %3194 = vmatprep.subr.bf16.mxu0 0
      %3195 = vmatpush1.bf16.msra.mxu0 0
      %3196 = vmatprep.subr.bf16.mxu0 0
      %3197 = vmatpush1.bf16.msra.mxu0 0
      %3198 = vmatprep.subr.bf16.mxu0 0
      %3199 = vmatpush1.bf16.msra.mxu0 0
      %3200 = vmatprep.subr.bf16.mxu0 0
      %3201 = vmatpush1.bf16.msra.mxu0 0
      %3202 = vmatprep.subr.bf16.mxu0 0
      %3203 = vmatpush1.bf16.msra.mxu0 0
      %3204 = vmatprep.subr.bf16.mxu0 0
      %3205 = vmatpush1.bf16.msra.mxu0 0
      %3206 = vmatprep.subr.bf16.mxu0 %v3140
      %3207 = vmatpush1.bf16.msra.mxu0 %v3139
      %3208 = vmatprep.subr.bf16.mxu0 0
      %3209 = vmatpush2.bf16.msra.mxu0 0
      %3210 = vmatprep.subr.bf16.mxu0 0
      %3211 = vmatpush2.bf16.msra.mxu0 0
      %3212 = vmatprep.subr.bf16.mxu0 0
      %3213 = vmatpush2.bf16.msra.mxu0 0
      %3214 = vmatprep.subr.bf16.mxu0 0
      %3215 = vmatpush2.bf16.msra.mxu0 0
      %3216 = vmatprep.subr.bf16.mxu0 0
      %3217 = vmatpush2.bf16.msra.mxu0 0
      %3218 = vmatprep.subr.bf16.mxu0 0
      %3219 = vmatpush2.bf16.msra.mxu0 0
      %3220 = vmatprep.subr.bf16.mxu0 0
      %3221 = vmatpush2.bf16.msra.mxu0 0
      %3222 = vmatprep.subr.bf16.mxu0 0
      %3223 = vmatpush2.bf16.msra.mxu0 0
      %3224 = vmatprep.mubr.bf16.mxu0 0
      %3225 = vmatmul.mubr.bf16.gmra.mxu0 %v3149
      %v3226 = vpop.f32.mrf.mxu0
      %v3227 = vadd.f32 0.0, %v3226
      %v3228 = vpop.f32.mrf.mxu0
      %v3229 = vadd.f32 0.0, %v3228
      %v3230 = vpop.f32.mrf.mxu0
      %v3231 = vpop.f32.mrf.mxu0
      %3232 = vdwg.mxu0
      %v3233 = vadd.f32 %v3122, %v3186
      %v3234 = vadd.f32 %v3123, %v3188
      %v3235 = vadd.f32 %v3124, %v3227
      %v3236 = vadd.f32 %v3125, %v3229
      %s3237 = scalar_lea.vmem %s4, 16
      %v3238 = vld [vmem:[%s3237] sm:$0xf]
      %v3240 = vsel %vm2844, %v3238, 0
      %3242 = vmatprep.subr.bf16.mxu0 0
      %3243 = vmatpush1.bf16.msra.mxu0 0
      %3244 = vmatprep.subr.bf16.mxu0 0
      %3245 = vmatpush1.bf16.msra.mxu0 0
      %3246 = vmatprep.subr.bf16.mxu0 0
      %3247 = vmatpush1.bf16.msra.mxu0 0
      %3248 = vmatprep.subr.bf16.mxu0 0
      %3249 = vmatpush1.bf16.msra.mxu0 0
      %3250 = vmatprep.subr.bf16.mxu0 0
      %3251 = vmatpush1.bf16.msra.mxu0 0
      %3252 = vmatprep.subr.bf16.mxu0 0
      %3253 = vmatpush1.bf16.msra.mxu0 0
      %3254 = vmatprep.subr.bf16.mxu0 0
      %3255 = vmatpush1.bf16.msra.mxu0 0
      %3256 = vmatprep.subr.bf16.mxu0 %v2794
      %3257 = vmatpush1.bf16.msra.mxu0 %v2793
      %3258 = vmatprep.subr.bf16.mxu0 0
      %3259 = vmatpush2.bf16.msra.mxu0 0
      %3260 = vmatprep.subr.bf16.mxu0 0
      %3261 = vmatpush2.bf16.msra.mxu0 0
      %3262 = vmatprep.subr.bf16.mxu0 0
      %3263 = vmatpush2.bf16.msra.mxu0 0
      %3264 = vmatprep.subr.bf16.mxu0 0
      %3265 = vmatpush2.bf16.msra.mxu0 0
      %3266 = vmatprep.subr.bf16.mxu0 0
      %3267 = vmatpush2.bf16.msra.mxu0 0
      %3268 = vmatprep.subr.bf16.mxu0 0
      %3269 = vmatpush2.bf16.msra.mxu0 0
      %3270 = vmatprep.subr.bf16.mxu0 0
      %3271 = vmatpush2.bf16.msra.mxu0 0
      %3272 = vmatprep.subr.bf16.mxu0 0
      %3273 = vmatpush2.bf16.msra.mxu0 0
      %3274 = vmatprep.mubr.bf16.mxu0 0
      %3275 = vmatmul.mubr.bf16.gmra.mxu0 %v3240
      %v3276 = vpop.f32.mrf.mxu0
      %v3277 = vadd.f32 0.0, %v3276
      %v3278 = vpop.f32.mrf.mxu0
      %v3279 = vadd.f32 0.0, %v3278
      %v3280 = vpop.f32.mrf.mxu0
      %v3281 = vpop.f32.mrf.mxu0
      %3282 = vdwg.mxu0
      %3283 = vmatprep.subr.bf16.mxu0 0
      %3284 = vmatpush1.bf16.msra.mxu0 0
      %3285 = vmatprep.subr.bf16.mxu0 0
      %3286 = vmatpush1.bf16.msra.mxu0 0
      %3287 = vmatprep.subr.bf16.mxu0 0
      %3288 = vmatpush1.bf16.msra.mxu0 0
      %3289 = vmatprep.subr.bf16.mxu0 0
      %3290 = vmatpush1.bf16.msra.mxu0 0
      %3291 = vmatprep.subr.bf16.mxu0 0
      %3292 = vmatpush1.bf16.msra.mxu0 0
      %3293 = vmatprep.subr.bf16.mxu0 0
      %3294 = vmatpush1.bf16.msra.mxu0 0
      %3295 = vmatprep.subr.bf16.mxu0 0
      %3296 = vmatpush1.bf16.msra.mxu0 0
      %3297 = vmatprep.subr.bf16.mxu0 %v2796
      %3298 = vmatpush1.bf16.msra.mxu0 %v2795
      %3299 = vmatprep.subr.bf16.mxu0 0
      %3300 = vmatpush2.bf16.msra.mxu0 0
      %3301 = vmatprep.subr.bf16.mxu0 0
      %3302 = vmatpush2.bf16.msra.mxu0 0
      %3303 = vmatprep.subr.bf16.mxu0 0
      %3304 = vmatpush2.bf16.msra.mxu0 0
      %3305 = vmatprep.subr.bf16.mxu0 0
      %3306 = vmatpush2.bf16.msra.mxu0 0
      %3307 = vmatprep.subr.bf16.mxu0 0
      %3308 = vmatpush2.bf16.msra.mxu0 0
      %3309 = vmatprep.subr.bf16.mxu0 0
      %3310 = vmatpush2.bf16.msra.mxu0 0
      %3311 = vmatprep.subr.bf16.mxu0 0
      %3312 = vmatpush2.bf16.msra.mxu0 0
      %3313 = vmatprep.subr.bf16.mxu0 0
      %3314 = vmatpush2.bf16.msra.mxu0 0
      %3315 = vmatprep.mubr.bf16.mxu0 0
      %3316 = vmatmul.mubr.bf16.gmra.mxu0 %v3240
      %v3317 = vpop.f32.mrf.mxu0
      %v3318 = vadd.f32 0.0, %v3317
      %v3319 = vpop.f32.mrf.mxu0
      %v3320 = vadd.f32 0.0, %v3319
      %v3321 = vpop.f32.mrf.mxu0
      %v3322 = vpop.f32.mrf.mxu0
      %3323 = vdwg.mxu0
      %v3324 = vadd.f32 %v3233, %v3277
      %v3325 = vadd.f32 %v3234, %v3279
      %v3326 = vadd.f32 %v3235, %v3318
      %v3327 = vadd.f32 %v3236, %v3320
      %s3328 = scalar_lea.vmem %s4, 20
      %v3329 = vld [vmem:[%s3328] sm:$0xf]
      %3330 = vrot.lane.b32.xlu0 %v2793, 127
      %v3331 = vpop.permute.xlu0 %3330
      %3332 = vrot.lane.b32.xlu0 %v2794, 127
      %v3333 = vpop.permute.xlu0 %3332
      %3334 = vrot.lane.b32.xlu0 %v2795, 127
      %v3335 = vpop.permute.xlu0 %3334
      %3336 = vrot.lane.b32.xlu0 %v2796, 127
      %v3337 = vpop.permute.xlu0 %3336
      %v3338 = vsel %vm977, %v3331, %v3333
      %v3339 = vsel %vm977, %v3333, %v3335
      %v3340 = vsel %vm977, %v3335, %v3337
      %3344 = vrot.lane.b32.xlu0 %v2793, 15
      %v3345 = vpop.permute.xlu0 %3344
      %v3348 = vsel %vm983, %v3337, %v3345
      %v3351 = vsel %vm2844, %v3329, 0
      %3353 = vmatprep.subr.bf16.mxu0 0
      %3354 = vmatpush1.bf16.msra.mxu0 0
      %3355 = vmatprep.subr.bf16.mxu0 0
      %3356 = vmatpush1.bf16.msra.mxu0 0
      %3357 = vmatprep.subr.bf16.mxu0 0
      %3358 = vmatpush1.bf16.msra.mxu0 0
      %3359 = vmatprep.subr.bf16.mxu0 0
      %3360 = vmatpush1.bf16.msra.mxu0 0
      %3361 = vmatprep.subr.bf16.mxu0 0
      %3362 = vmatpush1.bf16.msra.mxu0 0
      %3363 = vmatprep.subr.bf16.mxu0 0
      %3364 = vmatpush1.bf16.msra.mxu0 0
      %3365 = vmatprep.subr.bf16.mxu0 0
      %3366 = vmatpush1.bf16.msra.mxu0 0
      %3367 = vmatprep.subr.bf16.mxu0 %v3339
      %3368 = vmatpush1.bf16.msra.mxu0 %v3338
      %3369 = vmatprep.subr.bf16.mxu0 0
      %3370 = vmatpush2.bf16.msra.mxu0 0
      %3371 = vmatprep.subr.bf16.mxu0 0
      %3372 = vmatpush2.bf16.msra.mxu0 0
      %3373 = vmatprep.subr.bf16.mxu0 0
      %3374 = vmatpush2.bf16.msra.mxu0 0
      %3375 = vmatprep.subr.bf16.mxu0 0
      %3376 = vmatpush2.bf16.msra.mxu0 0
      %3377 = vmatprep.subr.bf16.mxu0 0
      %3378 = vmatpush2.bf16.msra.mxu0 0
      %3379 = vmatprep.subr.bf16.mxu0 0
      %3380 = vmatpush2.bf16.msra.mxu0 0
      %3381 = vmatprep.subr.bf16.mxu0 0
      %3382 = vmatpush2.bf16.msra.mxu0 0
      %3383 = vmatprep.subr.bf16.mxu0 0
      %3384 = vmatpush2.bf16.msra.mxu0 0
      %3385 = vmatprep.mubr.bf16.mxu0 0
      %3386 = vmatmul.mubr.bf16.gmra.mxu0 %v3351
      %v3387 = vpop.f32.mrf.mxu0
      %v3388 = vadd.f32 0.0, %v3387
      %v3389 = vpop.f32.mrf.mxu0
      %v3390 = vadd.f32 0.0, %v3389
      %v3391 = vpop.f32.mrf.mxu0
      %v3392 = vpop.f32.mrf.mxu0
      %3393 = vdwg.mxu0
      %3394 = vmatprep.subr.bf16.mxu0 0
      %3395 = vmatpush1.bf16.msra.mxu0 0
      %3396 = vmatprep.subr.bf16.mxu0 0
      %3397 = vmatpush1.bf16.msra.mxu0 0
      %3398 = vmatprep.subr.bf16.mxu0 0
      %3399 = vmatpush1.bf16.msra.mxu0 0
      %3400 = vmatprep.subr.bf16.mxu0 0
      %3401 = vmatpush1.bf16.msra.mxu0 0
      %3402 = vmatprep.subr.bf16.mxu0 0
      %3403 = vmatpush1.bf16.msra.mxu0 0
      %3404 = vmatprep.subr.bf16.mxu0 0
      %3405 = vmatpush1.bf16.msra.mxu0 0
      %3406 = vmatprep.subr.bf16.mxu0 0
      %3407 = vmatpush1.bf16.msra.mxu0 0
      %3408 = vmatprep.subr.bf16.mxu0 %v3348
      %3409 = vmatpush1.bf16.msra.mxu0 %v3340
      %3410 = vmatprep.subr.bf16.mxu0 0
      %3411 = vmatpush2.bf16.msra.mxu0 0
      %3412 = vmatprep.subr.bf16.mxu0 0
      %3413 = vmatpush2.bf16.msra.mxu0 0
      %3414 = vmatprep.subr.bf16.mxu0 0
      %3415 = vmatpush2.bf16.msra.mxu0 0
      %3416 = vmatprep.subr.bf16.mxu0 0
      %3417 = vmatpush2.bf16.msra.mxu0 0
      %3418 = vmatprep.subr.bf16.mxu0 0
      %3419 = vmatpush2.bf16.msra.mxu0 0
      %3420 = vmatprep.subr.bf16.mxu0 0
      %3421 = vmatpush2.bf16.msra.mxu0 0
      %3422 = vmatprep.subr.bf16.mxu0 0
      %3423 = vmatpush2.bf16.msra.mxu0 0
      %3424 = vmatprep.subr.bf16.mxu0 0
      %3425 = vmatpush2.bf16.msra.mxu0 0
      %3426 = vmatprep.mubr.bf16.mxu0 0
      %3427 = vmatmul.mubr.bf16.gmra.mxu0 %v3351
      %v3428 = vpop.f32.mrf.mxu0
      %v3429 = vadd.f32 0.0, %v3428
      %v3430 = vpop.f32.mrf.mxu0
      %v3431 = vadd.f32 0.0, %v3430
      %v3432 = vpop.f32.mrf.mxu0
      %v3433 = vpop.f32.mrf.mxu0
      %3434 = vdwg.mxu0
      %v3435 = vadd.f32 %v3324, %v3388
      %v3436 = vadd.f32 %v3325, %v3390
      %v3437 = vadd.f32 %v3326, %v3429
      %v3438 = vadd.f32 %v3327, %v3431
      %s3439 = scalar_lea.vmem %s4, 24
      %v3440 = vld [vmem:[%s3439] sm:$0xf]
      %3441 = vrot.lane.b32.xlu0 %v2793, 119
      %v3442 = vpop.permute.xlu0 %3441
      %3443 = vrot.lane.b32.xlu0 %v2794, 119
      %v3444 = vpop.permute.xlu0 %3443
      %3445 = vrot.lane.b32.xlu0 %v2795, 119
      %v3446 = vpop.permute.xlu0 %3445
      %3447 = vrot.lane.b32.xlu0 %v2796, 119
      %v3448 = vpop.permute.xlu0 %3447
      %v3449 = vsel %vm1111, %v3442, %v3444
      %v3450 = vsel %vm1111, %v3444, %v3446
      %v3451 = vsel %vm1111, %v3446, %v3448
      %3455 = vrot.lane.b32.xlu0 %v2793, 7
      %v3456 = vpop.permute.xlu0 %3455
      %v3459 = vsel %vm1117, %v3448, %v3456
      %v3462 = vsel %vm2844, %v3440, 0
      %3464 = vmatprep.subr.bf16.mxu0 0
      %3465 = vmatpush1.bf16.msra.mxu0 0
      %3466 = vmatprep.subr.bf16.mxu0 0
      %3467 = vmatpush1.bf16.msra.mxu0 0
      %3468 = vmatprep.subr.bf16.mxu0 0
      %3469 = vmatpush1.bf16.msra.mxu0 0
      %3470 = vmatprep.subr.bf16.mxu0 0
      %3471 = vmatpush1.bf16.msra.mxu0 0
      %3472 = vmatprep.subr.bf16.mxu0 0
      %3473 = vmatpush1.bf16.msra.mxu0 0
      %3474 = vmatprep.subr.bf16.mxu0 0
      %3475 = vmatpush1.bf16.msra.mxu0 0
      %3476 = vmatprep.subr.bf16.mxu0 0
      %3477 = vmatpush1.bf16.msra.mxu0 0
      %3478 = vmatprep.subr.bf16.mxu0 %v3450
      %3479 = vmatpush1.bf16.msra.mxu0 %v3449
      %3480 = vmatprep.subr.bf16.mxu0 0
      %3481 = vmatpush2.bf16.msra.mxu0 0
      %3482 = vmatprep.subr.bf16.mxu0 0
      %3483 = vmatpush2.bf16.msra.mxu0 0
      %3484 = vmatprep.subr.bf16.mxu0 0
      %3485 = vmatpush2.bf16.msra.mxu0 0
      %3486 = vmatprep.subr.bf16.mxu0 0
      %3487 = vmatpush2.bf16.msra.mxu0 0
      %3488 = vmatprep.subr.bf16.mxu0 0
      %3489 = vmatpush2.bf16.msra.mxu0 0
      %3490 = vmatprep.subr.bf16.mxu0 0
      %3491 = vmatpush2.bf16.msra.mxu0 0
      %3492 = vmatprep.subr.bf16.mxu0 0
      %3493 = vmatpush2.bf16.msra.mxu0 0
      %3494 = vmatprep.subr.bf16.mxu0 0
      %3495 = vmatpush2.bf16.msra.mxu0 0
      %3496 = vmatprep.mubr.bf16.mxu0 0
      %3497 = vmatmul.mubr.bf16.gmra.mxu0 %v3462
      %v3498 = vpop.f32.mrf.mxu0
      %v3499 = vadd.f32 0.0, %v3498
      %v3500 = vpop.f32.mrf.mxu0
      %v3501 = vadd.f32 0.0, %v3500
      %v3502 = vpop.f32.mrf.mxu0
      %v3503 = vpop.f32.mrf.mxu0
      %3504 = vdwg.mxu0
      %3505 = vmatprep.subr.bf16.mxu0 0
      %3506 = vmatpush1.bf16.msra.mxu0 0
      %3507 = vmatprep.subr.bf16.mxu0 0
      %3508 = vmatpush1.bf16.msra.mxu0 0
      %3509 = vmatprep.subr.bf16.mxu0 0
      %3510 = vmatpush1.bf16.msra.mxu0 0
      %3511 = vmatprep.subr.bf16.mxu0 0
      %3512 = vmatpush1.bf16.msra.mxu0 0
      %3513 = vmatprep.subr.bf16.mxu0 0
      %3514 = vmatpush1.bf16.msra.mxu0 0
      %3515 = vmatprep.subr.bf16.mxu0 0
      %3516 = vmatpush1.bf16.msra.mxu0 0
      %3517 = vmatprep.subr.bf16.mxu0 0
      %3518 = vmatpush1.bf16.msra.mxu0 0
      %3519 = vmatprep.subr.bf16.mxu0 %v3459
      %3520 = vmatpush1.bf16.msra.mxu0 %v3451
      %3521 = vmatprep.subr.bf16.mxu0 0
      %3522 = vmatpush2.bf16.msra.mxu0 0
      %3523 = vmatprep.subr.bf16.mxu0 0
      %3524 = vmatpush2.bf16.msra.mxu0 0
      %3525 = vmatprep.subr.bf16.mxu0 0
      %3526 = vmatpush2.bf16.msra.mxu0 0
      %3527 = vmatprep.subr.bf16.mxu0 0
      %3528 = vmatpush2.bf16.msra.mxu0 0
      %3529 = vmatprep.subr.bf16.mxu0 0
      %3530 = vmatpush2.bf16.msra.mxu0 0
      %3531 = vmatprep.subr.bf16.mxu0 0
      %3532 = vmatpush2.bf16.msra.mxu0 0
      %3533 = vmatprep.subr.bf16.mxu0 0
      %3534 = vmatpush2.bf16.msra.mxu0 0
      %3535 = vmatprep.subr.bf16.mxu0 0
      %3536 = vmatpush2.bf16.msra.mxu0 0
      %3537 = vmatprep.mubr.bf16.mxu0 0
      %3538 = vmatmul.mubr.bf16.gmra.mxu0 %v3462
      %v3539 = vpop.f32.mrf.mxu0
      %v3540 = vadd.f32 0.0, %v3539
      %v3541 = vpop.f32.mrf.mxu0
      %v3542 = vadd.f32 0.0, %v3541
      %v3543 = vpop.f32.mrf.mxu0
      %v3544 = vpop.f32.mrf.mxu0
      %3545 = vdwg.mxu0
      %v3546 = vadd.f32 %v3435, %v3499
      %v3547 = vadd.f32 %v3436, %v3501
      %v3548 = vadd.f32 %v3437, %v3540
      %v3549 = vadd.f32 %v3438, %v3542
      %s3550 = scalar_lea.vmem %s4, 28
      %v3551 = vld [vmem:[%s3550] sm:$0xf]
      %3552 = vrot.lane.b32.xlu0 %v2793, 118
      %v3553 = vpop.permute.xlu0 %3552
      %3554 = vrot.lane.b32.xlu0 %v2794, 118
      %v3555 = vpop.permute.xlu0 %3554
      %3556 = vrot.lane.b32.xlu0 %v2795, 118
      %v3557 = vpop.permute.xlu0 %3556
      %3558 = vrot.lane.b32.xlu0 %v2796, 118
      %v3559 = vpop.permute.xlu0 %3558
      %v3560 = vsel %vm1245, %v3553, %v3555
      %v3561 = vsel %vm1245, %v3555, %v3557
      %v3562 = vsel %vm1245, %v3557, %v3559
      %3566 = vrot.lane.b32.xlu0 %v2793, 6
      %v3567 = vpop.permute.xlu0 %3566
      %v3570 = vsel %vm1251, %v3559, %v3567
      %v3573 = vsel %vm2844, %v3551, 0
      %3575 = vmatprep.subr.bf16.mxu0 0
      %3576 = vmatpush1.bf16.msra.mxu0 0
      %3577 = vmatprep.subr.bf16.mxu0 0
      %3578 = vmatpush1.bf16.msra.mxu0 0
      %3579 = vmatprep.subr.bf16.mxu0 0
      %3580 = vmatpush1.bf16.msra.mxu0 0
      %3581 = vmatprep.subr.bf16.mxu0 0
      %3582 = vmatpush1.bf16.msra.mxu0 0
      %3583 = vmatprep.subr.bf16.mxu0 0
      %3584 = vmatpush1.bf16.msra.mxu0 0
      %3585 = vmatprep.subr.bf16.mxu0 0
      %3586 = vmatpush1.bf16.msra.mxu0 0
      %3587 = vmatprep.subr.bf16.mxu0 0
      %3588 = vmatpush1.bf16.msra.mxu0 0
      %3589 = vmatprep.subr.bf16.mxu0 %v3561
      %3590 = vmatpush1.bf16.msra.mxu0 %v3560
      %3591 = vmatprep.subr.bf16.mxu0 0
      %3592 = vmatpush2.bf16.msra.mxu0 0
      %3593 = vmatprep.subr.bf16.mxu0 0
      %3594 = vmatpush2.bf16.msra.mxu0 0
      %3595 = vmatprep.subr.bf16.mxu0 0
      %3596 = vmatpush2.bf16.msra.mxu0 0
      %3597 = vmatprep.subr.bf16.mxu0 0
      %3598 = vmatpush2.bf16.msra.mxu0 0
      %3599 = vmatprep.subr.bf16.mxu0 0
      %3600 = vmatpush2.bf16.msra.mxu0 0
      %3601 = vmatprep.subr.bf16.mxu0 0
      %3602 = vmatpush2.bf16.msra.mxu0 0
      %3603 = vmatprep.subr.bf16.mxu0 0
      %3604 = vmatpush2.bf16.msra.mxu0 0
      %3605 = vmatprep.subr.bf16.mxu0 0
      %3606 = vmatpush2.bf16.msra.mxu0 0
      %3607 = vmatprep.mubr.bf16.mxu0 0
      %3608 = vmatmul.mubr.bf16.gmra.mxu0 %v3573
      %v3609 = vpop.f32.mrf.mxu0
      %v3610 = vadd.f32 0.0, %v3609
      %v3611 = vpop.f32.mrf.mxu0
      %v3612 = vadd.f32 0.0, %v3611
      %v3613 = vpop.f32.mrf.mxu0
      %v3614 = vpop.f32.mrf.mxu0
      %3615 = vdwg.mxu0
      %3616 = vmatprep.subr.bf16.mxu0 0
      %3617 = vmatpush1.bf16.msra.mxu0 0
      %3618 = vmatprep.subr.bf16.mxu0 0
      %3619 = vmatpush1.bf16.msra.mxu0 0
      %3620 = vmatprep.subr.bf16.mxu0 0
      %3621 = vmatpush1.bf16.msra.mxu0 0
      %3622 = vmatprep.subr.bf16.mxu0 0
      %3623 = vmatpush1.bf16.msra.mxu0 0
      %3624 = vmatprep.subr.bf16.mxu0 0
      %3625 = vmatpush1.bf16.msra.mxu0 0
      %3626 = vmatprep.subr.bf16.mxu0 0
      %3627 = vmatpush1.bf16.msra.mxu0 0
      %3628 = vmatprep.subr.bf16.mxu0 0
      %3629 = vmatpush1.bf16.msra.mxu0 0
      %3630 = vmatprep.subr.bf16.mxu0 %v3570
      %3631 = vmatpush1.bf16.msra.mxu0 %v3562
      %3632 = vmatprep.subr.bf16.mxu0 0
      %3633 = vmatpush2.bf16.msra.mxu0 0
      %3634 = vmatprep.subr.bf16.mxu0 0
      %3635 = vmatpush2.bf16.msra.mxu0 0
      %3636 = vmatprep.subr.bf16.mxu0 0
      %3637 = vmatpush2.bf16.msra.mxu0 0
      %3638 = vmatprep.subr.bf16.mxu0 0
      %3639 = vmatpush2.bf16.msra.mxu0 0
      %3640 = vmatprep.subr.bf16.mxu0 0
      %3641 = vmatpush2.bf16.msra.mxu0 0
      %3642 = vmatprep.subr.bf16.mxu0 0
      %3643 = vmatpush2.bf16.msra.mxu0 0
      %3644 = vmatprep.subr.bf16.mxu0 0
      %3645 = vmatpush2.bf16.msra.mxu0 0
      %3646 = vmatprep.subr.bf16.mxu0 0
      %3647 = vmatpush2.bf16.msra.mxu0 0
      %3648 = vmatprep.mubr.bf16.mxu0 0
      %3649 = vmatmul.mubr.bf16.gmra.mxu0 %v3573
      %v3650 = vpop.f32.mrf.mxu0
      %v3651 = vadd.f32 0.0, %v3650
      %v3652 = vpop.f32.mrf.mxu0
      %v3653 = vadd.f32 0.0, %v3652
      %v3654 = vpop.f32.mrf.mxu0
      %v3655 = vpop.f32.mrf.mxu0
      %3656 = vdwg.mxu0
      %v3657 = vadd.f32 %v3546, %v3610
      %v3658 = vadd.f32 %v3547, %v3612
      %v3659 = vadd.f32 %v3548, %v3651
      %v3660 = vadd.f32 %v3549, %v3653
      %s3661 = scalar_lea.vmem %s4, 32
      %v3662 = vld [vmem:[%s3661] sm:$0xf]
      %3663 = vrot.lane.b32.xlu0 %v2793, 117
      %v3664 = vpop.permute.xlu0 %3663
      %3665 = vrot.lane.b32.xlu0 %v2794, 117
      %v3666 = vpop.permute.xlu0 %3665
      %3667 = vrot.lane.b32.xlu0 %v2795, 117
      %v3668 = vpop.permute.xlu0 %3667
      %3669 = vrot.lane.b32.xlu0 %v2796, 117
      %v3670 = vpop.permute.xlu0 %3669
      %v3671 = vsel %vm1379, %v3664, %v3666
      %v3672 = vsel %vm1379, %v3666, %v3668
      %v3673 = vsel %vm1379, %v3668, %v3670
      %3677 = vrot.lane.b32.xlu0 %v2793, 5
      %v3678 = vpop.permute.xlu0 %3677
      %v3681 = vsel %vm1385, %v3670, %v3678
      %v3684 = vsel %vm2844, %v3662, 0
      %3686 = vmatprep.subr.bf16.mxu0 0
      %3687 = vmatpush1.bf16.msra.mxu0 0
      %3688 = vmatprep.subr.bf16.mxu0 0
      %3689 = vmatpush1.bf16.msra.mxu0 0
      %3690 = vmatprep.subr.bf16.mxu0 0
      %3691 = vmatpush1.bf16.msra.mxu0 0
      %3692 = vmatprep.subr.bf16.mxu0 0
      %3693 = vmatpush1.bf16.msra.mxu0 0
      %3694 = vmatprep.subr.bf16.mxu0 0
      %3695 = vmatpush1.bf16.msra.mxu0 0
      %3696 = vmatprep.subr.bf16.mxu0 0
      %3697 = vmatpush1.bf16.msra.mxu0 0
      %3698 = vmatprep.subr.bf16.mxu0 0
      %3699 = vmatpush1.bf16.msra.mxu0 0
      %3700 = vmatprep.subr.bf16.mxu0 %v3672
      %3701 = vmatpush1.bf16.msra.mxu0 %v3671
      %3702 = vmatprep.subr.bf16.mxu0 0
      %3703 = vmatpush2.bf16.msra.mxu0 0
      %3704 = vmatprep.subr.bf16.mxu0 0
      %3705 = vmatpush2.bf16.msra.mxu0 0
      %3706 = vmatprep.subr.bf16.mxu0 0
      %3707 = vmatpush2.bf16.msra.mxu0 0
      %3708 = vmatprep.subr.bf16.mxu0 0
      %3709 = vmatpush2.bf16.msra.mxu0 0
      %3710 = vmatprep.subr.bf16.mxu0 0
      %3711 = vmatpush2.bf16.msra.mxu0 0
      %3712 = vmatprep.subr.bf16.mxu0 0
      %3713 = vmatpush2.bf16.msra.mxu0 0
      %3714 = vmatprep.subr.bf16.mxu0 0
      %3715 = vmatpush2.bf16.msra.mxu0 0
      %3716 = vmatprep.subr.bf16.mxu0 0
      %3717 = vmatpush2.bf16.msra.mxu0 0
      %3718 = vmatprep.mubr.bf16.mxu0 0
      %3719 = vmatmul.mubr.bf16.gmra.mxu0 %v3684
      %v3720 = vpop.f32.mrf.mxu0
      %v3721 = vadd.f32 0.0, %v3720
      %v3722 = vpop.f32.mrf.mxu0
      %v3723 = vadd.f32 0.0, %v3722
      %v3724 = vpop.f32.mrf.mxu0
      %v3725 = vpop.f32.mrf.mxu0
      %3726 = vdwg.mxu0
      %3727 = vmatprep.subr.bf16.mxu0 0
      %3728 = vmatpush1.bf16.msra.mxu0 0
      %3729 = vmatprep.subr.bf16.mxu0 0
      %3730 = vmatpush1.bf16.msra.mxu0 0
      %3731 = vmatprep.subr.bf16.mxu0 0
      %3732 = vmatpush1.bf16.msra.mxu0 0
      %3733 = vmatprep.subr.bf16.mxu0 0
      %3734 = vmatpush1.bf16.msra.mxu0 0
      %3735 = vmatprep.subr.bf16.mxu0 0
      %3736 = vmatpush1.bf16.msra.mxu0 0
      %3737 = vmatprep.subr.bf16.mxu0 0
      %3738 = vmatpush1.bf16.msra.mxu0 0
      %3739 = vmatprep.subr.bf16.mxu0 0
      %3740 = vmatpush1.bf16.msra.mxu0 0
      %3741 = vmatprep.subr.bf16.mxu0 %v3681
      %3742 = vmatpush1.bf16.msra.mxu0 %v3673
      %3743 = vmatprep.subr.bf16.mxu0 0
      %3744 = vmatpush2.bf16.msra.mxu0 0
      %3745 = vmatprep.subr.bf16.mxu0 0
      %3746 = vmatpush2.bf16.msra.mxu0 0
      %3747 = vmatprep.subr.bf16.mxu0 0
      %3748 = vmatpush2.bf16.msra.mxu0 0
      %3749 = vmatprep.subr.bf16.mxu0 0
      %3750 = vmatpush2.bf16.msra.mxu0 0
      %3751 = vmatprep.subr.bf16.mxu0 0
      %3752 = vmatpush2.bf16.msra.mxu0 0
      %3753 = vmatprep.subr.bf16.mxu0 0
      %3754 = vmatpush2.bf16.msra.mxu0 0
      %3755 = vmatprep.subr.bf16.mxu0 0
      %3756 = vmatpush2.bf16.msra.mxu0 0
      %3757 = vmatprep.subr.bf16.mxu0 0
      %3758 = vmatpush2.bf16.msra.mxu0 0
      %3759 = vmatprep.mubr.bf16.mxu0 0
      %3760 = vmatmul.mubr.bf16.gmra.mxu0 %v3684
      %v3761 = vpop.f32.mrf.mxu0
      %v3762 = vadd.f32 0.0, %v3761
      %v3763 = vpop.f32.mrf.mxu0
      %v3764 = vadd.f32 0.0, %v3763
      %v3765 = vpop.f32.mrf.mxu0
      %v3766 = vpop.f32.mrf.mxu0
      %3767 = vdwg.mxu0
      %v3768 = vadd.f32 %v3657, %v3721
      %v3769 = vadd.f32 %v3658, %v3723
      %v3770 = vadd.f32 %v3659, %v3762
      %v3771 = vadd.f32 %v3660, %v3764
      %s3772 = scalar_lea.vmem %s4, 36
      %v3773 = vld [vmem:[%s3772] sm:$0xf]
      %3774 = vrot.lane.b32.xlu0 %v2793, 39
      %v3775 = vpop.permute.xlu0 %3774
      %3776 = vrot.lane.b32.xlu0 %v2794, 39
      %v3777 = vpop.permute.xlu0 %3776
      %3778 = vrot.lane.b32.xlu0 %v2795, 39
      %v3779 = vpop.permute.xlu0 %3778
      %3780 = vrot.lane.b32.xlu0 %v2796, 39
      %v3781 = vpop.permute.xlu0 %3780
      %v3782 = vsel %vm1513, %v3775, %v3777
      %v3783 = vsel %vm1513, %v3777, %v3779
      %v3784 = vsel %vm1513, %v3779, %v3781
      %3787 = vrot.lane.b32.xlu0 %v2793, 55
      %v3788 = vpop.permute.xlu0 %3787
      %v3792 = vsel %vm1519, %v3784, %v3788
      %v3795 = vsel %vm2844, %v3773, 0
      %3797 = vmatprep.subr.bf16.mxu0 0
      %3798 = vmatpush1.bf16.msra.mxu0 0
      %3799 = vmatprep.subr.bf16.mxu0 0
      %3800 = vmatpush1.bf16.msra.mxu0 0
      %3801 = vmatprep.subr.bf16.mxu0 0
      %3802 = vmatpush1.bf16.msra.mxu0 0
      %3803 = vmatprep.subr.bf16.mxu0 0
      %3804 = vmatpush1.bf16.msra.mxu0 0
      %3805 = vmatprep.subr.bf16.mxu0 0
      %3806 = vmatpush1.bf16.msra.mxu0 0
      %3807 = vmatprep.subr.bf16.mxu0 0
      %3808 = vmatpush1.bf16.msra.mxu0 0
      %3809 = vmatprep.subr.bf16.mxu0 0
      %3810 = vmatpush1.bf16.msra.mxu0 0
      %3811 = vmatprep.subr.bf16.mxu0 %v3783
      %3812 = vmatpush1.bf16.msra.mxu0 %v3782
      %3813 = vmatprep.subr.bf16.mxu0 0
      %3814 = vmatpush2.bf16.msra.mxu0 0
      %3815 = vmatprep.subr.bf16.mxu0 0
      %3816 = vmatpush2.bf16.msra.mxu0 0
      %3817 = vmatprep.subr.bf16.mxu0 0
      %3818 = vmatpush2.bf16.msra.mxu0 0
      %3819 = vmatprep.subr.bf16.mxu0 0
      %3820 = vmatpush2.bf16.msra.mxu0 0
      %3821 = vmatprep.subr.bf16.mxu0 0
      %3822 = vmatpush2.bf16.msra.mxu0 0
      %3823 = vmatprep.subr.bf16.mxu0 0
      %3824 = vmatpush2.bf16.msra.mxu0 0
      %3825 = vmatprep.subr.bf16.mxu0 0
      %3826 = vmatpush2.bf16.msra.mxu0 0
      %3827 = vmatprep.subr.bf16.mxu0 0
      %3828 = vmatpush2.bf16.msra.mxu0 0
      %3829 = vmatprep.mubr.bf16.mxu0 0
      %3830 = vmatmul.mubr.bf16.gmra.mxu0 %v3795
      %v3831 = vpop.f32.mrf.mxu0
      %v3832 = vadd.f32 0.0, %v3831
      %v3833 = vpop.f32.mrf.mxu0
      %v3834 = vadd.f32 0.0, %v3833
      %v3835 = vpop.f32.mrf.mxu0
      %v3836 = vpop.f32.mrf.mxu0
      %3837 = vdwg.mxu0
      %3838 = vmatprep.subr.bf16.mxu0 0
      %3839 = vmatpush1.bf16.msra.mxu0 0
      %3840 = vmatprep.subr.bf16.mxu0 0
      %3841 = vmatpush1.bf16.msra.mxu0 0
      %3842 = vmatprep.subr.bf16.mxu0 0
      %3843 = vmatpush1.bf16.msra.mxu0 0
      %3844 = vmatprep.subr.bf16.mxu0 0
      %3845 = vmatpush1.bf16.msra.mxu0 0
      %3846 = vmatprep.subr.bf16.mxu0 0
      %3847 = vmatpush1.bf16.msra.mxu0 0
      %3848 = vmatprep.subr.bf16.mxu0 0
      %3849 = vmatpush1.bf16.msra.mxu0 0
      %3850 = vmatprep.subr.bf16.mxu0 0
      %3851 = vmatpush1.bf16.msra.mxu0 0
      %3852 = vmatprep.subr.bf16.mxu0 %v3788
      %3853 = vmatpush1.bf16.msra.mxu0 %v3792
      %3854 = vmatprep.subr.bf16.mxu0 0
      %3855 = vmatpush2.bf16.msra.mxu0 0
      %3856 = vmatprep.subr.bf16.mxu0 0
      %3857 = vmatpush2.bf16.msra.mxu0 0
      %3858 = vmatprep.subr.bf16.mxu0 0
      %3859 = vmatpush2.bf16.msra.mxu0 0
      %3860 = vmatprep.subr.bf16.mxu0 0
      %3861 = vmatpush2.bf16.msra.mxu0 0
      %3862 = vmatprep.subr.bf16.mxu0 0
      %3863 = vmatpush2.bf16.msra.mxu0 0
      %3864 = vmatprep.subr.bf16.mxu0 0
      %3865 = vmatpush2.bf16.msra.mxu0 0
      %3866 = vmatprep.subr.bf16.mxu0 0
      %3867 = vmatpush2.bf16.msra.mxu0 0
      %3868 = vmatprep.subr.bf16.mxu0 0
      %3869 = vmatpush2.bf16.msra.mxu0 0
      %3870 = vmatprep.mubr.bf16.mxu0 0
      %3871 = vmatmul.mubr.bf16.gmra.mxu0 %v3795
      %v3872 = vpop.f32.mrf.mxu0
      %v3873 = vadd.f32 0.0, %v3872
      %v3874 = vpop.f32.mrf.mxu0
      %v3875 = vadd.f32 0.0, %v3874
      %v3876 = vpop.f32.mrf.mxu0
      %v3877 = vpop.f32.mrf.mxu0
      %3878 = vdwg.mxu0
      %v3879 = vadd.f32 %v3768, %v3832
      %v3880 = vadd.f32 %v3769, %v3834
      %v3881 = vadd.f32 %v3770, %v3873
      %v3882 = vadd.f32 %v3771, %v3875
      %s3883 = scalar_lea.vmem %s4, 40
      %v3884 = vld [vmem:[%s3883] sm:$0xf]
      %3885 = vrot.lane.b32.xlu0 %v2793, 38
      %v3886 = vpop.permute.xlu0 %3885
      %3887 = vrot.lane.b32.xlu0 %v2794, 38
      %v3888 = vpop.permute.xlu0 %3887
      %3889 = vrot.lane.b32.xlu0 %v2795, 38
      %v3890 = vpop.permute.xlu0 %3889
      %3891 = vrot.lane.b32.xlu0 %v2796, 38
      %v3892 = vpop.permute.xlu0 %3891
      %v3893 = vsel %vm1646, %v3886, %v3888
      %v3894 = vsel %vm1646, %v3888, %v3890
      %v3895 = vsel %vm1646, %v3890, %v3892
      %3898 = vrot.lane.b32.xlu0 %v2793, 54
      %v3899 = vpop.permute.xlu0 %3898
      %v3903 = vsel %vm1652, %v3895, %v3899
      %v3906 = vsel %vm2844, %v3884, 0
      %3908 = vmatprep.subr.bf16.mxu0 0
      %3909 = vmatpush1.bf16.msra.mxu0 0
      %3910 = vmatprep.subr.bf16.mxu0 0
      %3911 = vmatpush1.bf16.msra.mxu0 0
      %3912 = vmatprep.subr.bf16.mxu0 0
      %3913 = vmatpush1.bf16.msra.mxu0 0
      %3914 = vmatprep.subr.bf16.mxu0 0
      %3915 = vmatpush1.bf16.msra.mxu0 0
      %3916 = vmatprep.subr.bf16.mxu0 0
      %3917 = vmatpush1.bf16.msra.mxu0 0
      %3918 = vmatprep.subr.bf16.mxu0 0
      %3919 = vmatpush1.bf16.msra.mxu0 0
      %3920 = vmatprep.subr.bf16.mxu0 0
      %3921 = vmatpush1.bf16.msra.mxu0 0
      %3922 = vmatprep.subr.bf16.mxu0 %v3894
      %3923 = vmatpush1.bf16.msra.mxu0 %v3893
      %3924 = vmatprep.subr.bf16.mxu0 0
      %3925 = vmatpush2.bf16.msra.mxu0 0
      %3926 = vmatprep.subr.bf16.mxu0 0
      %3927 = vmatpush2.bf16.msra.mxu0 0
      %3928 = vmatprep.subr.bf16.mxu0 0
      %3929 = vmatpush2.bf16.msra.mxu0 0
      %3930 = vmatprep.subr.bf16.mxu0 0
      %3931 = vmatpush2.bf16.msra.mxu0 0
      %3932 = vmatprep.subr.bf16.mxu0 0
      %3933 = vmatpush2.bf16.msra.mxu0 0
      %3934 = vmatprep.subr.bf16.mxu0 0
      %3935 = vmatpush2.bf16.msra.mxu0 0
      %3936 = vmatprep.subr.bf16.mxu0 0
      %3937 = vmatpush2.bf16.msra.mxu0 0
      %3938 = vmatprep.subr.bf16.mxu0 0
      %3939 = vmatpush2.bf16.msra.mxu0 0
      %3940 = vmatprep.mubr.bf16.mxu0 0
      %3941 = vmatmul.mubr.bf16.gmra.mxu0 %v3906
      %v3942 = vpop.f32.mrf.mxu0
      %v3943 = vadd.f32 0.0, %v3942
      %v3944 = vpop.f32.mrf.mxu0
      %v3945 = vadd.f32 0.0, %v3944
      %v3946 = vpop.f32.mrf.mxu0
      %v3947 = vpop.f32.mrf.mxu0
      %3948 = vdwg.mxu0
      %3949 = vmatprep.subr.bf16.mxu0 0
      %3950 = vmatpush1.bf16.msra.mxu0 0
      %3951 = vmatprep.subr.bf16.mxu0 0
      %3952 = vmatpush1.bf16.msra.mxu0 0
      %3953 = vmatprep.subr.bf16.mxu0 0
      %3954 = vmatpush1.bf16.msra.mxu0 0
      %3955 = vmatprep.subr.bf16.mxu0 0
      %3956 = vmatpush1.bf16.msra.mxu0 0
      %3957 = vmatprep.subr.bf16.mxu0 0
      %3958 = vmatpush1.bf16.msra.mxu0 0
      %3959 = vmatprep.subr.bf16.mxu0 0
      %3960 = vmatpush1.bf16.msra.mxu0 0
      %3961 = vmatprep.subr.bf16.mxu0 0
      %3962 = vmatpush1.bf16.msra.mxu0 0
      %3963 = vmatprep.subr.bf16.mxu0 %v3899
      %3964 = vmatpush1.bf16.msra.mxu0 %v3903
      %3965 = vmatprep.subr.bf16.mxu0 0
      %3966 = vmatpush2.bf16.msra.mxu0 0
      %3967 = vmatprep.subr.bf16.mxu0 0
      %3968 = vmatpush2.bf16.msra.mxu0 0
      %3969 = vmatprep.subr.bf16.mxu0 0
      %3970 = vmatpush2.bf16.msra.mxu0 0
      %3971 = vmatprep.subr.bf16.mxu0 0
      %3972 = vmatpush2.bf16.msra.mxu0 0
      %3973 = vmatprep.subr.bf16.mxu0 0
      %3974 = vmatpush2.bf16.msra.mxu0 0
      %3975 = vmatprep.subr.bf16.mxu0 0
      %3976 = vmatpush2.bf16.msra.mxu0 0
      %3977 = vmatprep.subr.bf16.mxu0 0
      %3978 = vmatpush2.bf16.msra.mxu0 0
      %3979 = vmatprep.subr.bf16.mxu0 0
      %3980 = vmatpush2.bf16.msra.mxu0 0
      %3981 = vmatprep.mubr.bf16.mxu0 0
      %3982 = vmatmul.mubr.bf16.gmra.mxu0 %v3906
      %v3983 = vpop.f32.mrf.mxu0
      %v3984 = vadd.f32 0.0, %v3983
      %v3985 = vpop.f32.mrf.mxu0
      %v3986 = vadd.f32 0.0, %v3985
      %v3987 = vpop.f32.mrf.mxu0
      %v3988 = vpop.f32.mrf.mxu0
      %3989 = vdwg.mxu0
      %v3990 = vadd.f32 %v3879, %v3943
      %v3991 = vadd.f32 %v3880, %v3945
      %v3992 = vadd.f32 %v3881, %v3984
      %v3993 = vadd.f32 %v3882, %v3986
      %s3994 = scalar_lea.vmem %s4, 44
      %v3995 = vld [vmem:[%s3994] sm:$0xf]
      %3996 = vrot.lane.b32.xlu0 %v2793, 37
      %v3997 = vpop.permute.xlu0 %3996
      %3998 = vrot.lane.b32.xlu0 %v2794, 37
      %v3999 = vpop.permute.xlu0 %3998
      %4000 = vrot.lane.b32.xlu0 %v2795, 37
      %v4001 = vpop.permute.xlu0 %4000
      %4002 = vrot.lane.b32.xlu0 %v2796, 37
      %v4003 = vpop.permute.xlu0 %4002
      %v4004 = vsel %vm1779, %v3997, %v3999
      %v4005 = vsel %vm1779, %v3999, %v4001
      %v4006 = vsel %vm1779, %v4001, %v4003
      %4009 = vrot.lane.b32.xlu0 %v2793, 53
      %v4010 = vpop.permute.xlu0 %4009
      %v4014 = vsel %vm1785, %v4006, %v4010
      %v4017 = vsel %vm2844, %v3995, 0
      %4019 = vmatprep.subr.bf16.mxu0 0
      %4020 = vmatpush1.bf16.msra.mxu0 0
      %4021 = vmatprep.subr.bf16.mxu0 0
      %4022 = vmatpush1.bf16.msra.mxu0 0
      %4023 = vmatprep.subr.bf16.mxu0 0
      %4024 = vmatpush1.bf16.msra.mxu0 0
      %4025 = vmatprep.subr.bf16.mxu0 0
      %4026 = vmatpush1.bf16.msra.mxu0 0
      %4027 = vmatprep.subr.bf16.mxu0 0
      %4028 = vmatpush1.bf16.msra.mxu0 0
      %4029 = vmatprep.subr.bf16.mxu0 0
      %4030 = vmatpush1.bf16.msra.mxu0 0
      %4031 = vmatprep.subr.bf16.mxu0 0
      %4032 = vmatpush1.bf16.msra.mxu0 0
      %4033 = vmatprep.subr.bf16.mxu0 %v4005
      %4034 = vmatpush1.bf16.msra.mxu0 %v4004
      %4035 = vmatprep.subr.bf16.mxu0 0
      %4036 = vmatpush2.bf16.msra.mxu0 0
      %4037 = vmatprep.subr.bf16.mxu0 0
      %4038 = vmatpush2.bf16.msra.mxu0 0
      %4039 = vmatprep.subr.bf16.mxu0 0
      %4040 = vmatpush2.bf16.msra.mxu0 0
      %4041 = vmatprep.subr.bf16.mxu0 0
      %4042 = vmatpush2.bf16.msra.mxu0 0
      %4043 = vmatprep.subr.bf16.mxu0 0
      %4044 = vmatpush2.bf16.msra.mxu0 0
      %4045 = vmatprep.subr.bf16.mxu0 0
      %4046 = vmatpush2.bf16.msra.mxu0 0
      %4047 = vmatprep.subr.bf16.mxu0 0
      %4048 = vmatpush2.bf16.msra.mxu0 0
      %4049 = vmatprep.subr.bf16.mxu0 0
      %4050 = vmatpush2.bf16.msra.mxu0 0
      %4051 = vmatprep.mubr.bf16.mxu0 0
      %4052 = vmatmul.mubr.bf16.gmra.mxu0 %v4017
      %v4053 = vpop.f32.mrf.mxu0
      %v4054 = vadd.f32 0.0, %v4053
      %v4055 = vpop.f32.mrf.mxu0
      %v4056 = vadd.f32 0.0, %v4055
      %v4057 = vpop.f32.mrf.mxu0
      %v4058 = vpop.f32.mrf.mxu0
      %4059 = vdwg.mxu0
      %4060 = vmatprep.subr.bf16.mxu0 0
      %4061 = vmatpush1.bf16.msra.mxu0 0
      %4062 = vmatprep.subr.bf16.mxu0 0
      %4063 = vmatpush1.bf16.msra.mxu0 0
      %4064 = vmatprep.subr.bf16.mxu0 0
      %4065 = vmatpush1.bf16.msra.mxu0 0
      %4066 = vmatprep.subr.bf16.mxu0 0
      %4067 = vmatpush1.bf16.msra.mxu0 0
      %4068 = vmatprep.subr.bf16.mxu0 0
      %4069 = vmatpush1.bf16.msra.mxu0 0
      %4070 = vmatprep.subr.bf16.mxu0 0
      %4071 = vmatpush1.bf16.msra.mxu0 0
      %4072 = vmatprep.subr.bf16.mxu0 0
      %4073 = vmatpush1.bf16.msra.mxu0 0
      %4074 = vmatprep.subr.bf16.mxu0 %v4010
      %4075 = vmatpush1.bf16.msra.mxu0 %v4014
      %4076 = vmatprep.subr.bf16.mxu0 0
      %4077 = vmatpush2.bf16.msra.mxu0 0
      %4078 = vmatprep.subr.bf16.mxu0 0
      %4079 = vmatpush2.bf16.msra.mxu0 0
      %4080 = vmatprep.subr.bf16.mxu0 0
      %4081 = vmatpush2.bf16.msra.mxu0 0
      %4082 = vmatprep.subr.bf16.mxu0 0
      %4083 = vmatpush2.bf16.msra.mxu0 0
      %4084 = vmatprep.subr.bf16.mxu0 0
      %4085 = vmatpush2.bf16.msra.mxu0 0
      %4086 = vmatprep.subr.bf16.mxu0 0
      %4087 = vmatpush2.bf16.msra.mxu0 0
      %4088 = vmatprep.subr.bf16.mxu0 0
      %4089 = vmatpush2.bf16.msra.mxu0 0
      %4090 = vmatprep.subr.bf16.mxu0 0
      %4091 = vmatpush2.bf16.msra.mxu0 0
      %4092 = vmatprep.mubr.bf16.mxu0 0
      %4093 = vmatmul.mubr.bf16.gmra.mxu0 %v4017
      %v4094 = vpop.f32.mrf.mxu0
      %v4095 = vadd.f32 0.0, %v4094
      %v4096 = vpop.f32.mrf.mxu0
      %v4097 = vadd.f32 0.0, %v4096
      %v4098 = vpop.f32.mrf.mxu0
      %v4099 = vpop.f32.mrf.mxu0
      %4100 = vdwg.mxu0
      %v4101 = vadd.f32 %v3990, %v4054
      %v4102 = vadd.f32 %v3991, %v4056
      %v4103 = vadd.f32 %v3992, %v4095
      %v4104 = vadd.f32 %v3993, %v4097
      %s4105 = scalar_lea.vmem %s4, 48
      %v4106 = vld [vmem:[%s4105] sm:$0xf]
      %4107 = vrot.lane.b32.xlu0 %v2793, 29
      %v4108 = vpop.permute.xlu0 %4107
      %4109 = vrot.lane.b32.xlu0 %v2794, 29
      %v4110 = vpop.permute.xlu0 %4109
      %4111 = vrot.lane.b32.xlu0 %v2795, 29
      %v4112 = vpop.permute.xlu0 %4111
      %4113 = vrot.lane.b32.xlu0 %v2796, 29
      %v4114 = vpop.permute.xlu0 %4113
      %v4115 = vsel %vm1912, %v4108, %v4110
      %v4116 = vsel %vm1912, %v4110, %v4112
      %v4117 = vsel %vm1912, %v4112, %v4114
      %4120 = vrot.lane.b32.xlu0 %v2793, 45
      %v4121 = vpop.permute.xlu0 %4120
      %v4125 = vsel %vm1918, %v4117, %v4121
      %v4128 = vsel %vm2844, %v4106, 0
      %4130 = vmatprep.subr.bf16.mxu0 0
      %4131 = vmatpush1.bf16.msra.mxu0 0
      %4132 = vmatprep.subr.bf16.mxu0 0
      %4133 = vmatpush1.bf16.msra.mxu0 0
      %4134 = vmatprep.subr.bf16.mxu0 0
      %4135 = vmatpush1.bf16.msra.mxu0 0
      %4136 = vmatprep.subr.bf16.mxu0 0
      %4137 = vmatpush1.bf16.msra.mxu0 0
      %4138 = vmatprep.subr.bf16.mxu0 0
      %4139 = vmatpush1.bf16.msra.mxu0 0
      %4140 = vmatprep.subr.bf16.mxu0 0
      %4141 = vmatpush1.bf16.msra.mxu0 0
      %4142 = vmatprep.subr.bf16.mxu0 0
      %4143 = vmatpush1.bf16.msra.mxu0 0
      %4144 = vmatprep.subr.bf16.mxu0 %v4116
      %4145 = vmatpush1.bf16.msra.mxu0 %v4115
      %4146 = vmatprep.subr.bf16.mxu0 0
      %4147 = vmatpush2.bf16.msra.mxu0 0
      %4148 = vmatprep.subr.bf16.mxu0 0
      %4149 = vmatpush2.bf16.msra.mxu0 0
      %4150 = vmatprep.subr.bf16.mxu0 0
      %4151 = vmatpush2.bf16.msra.mxu0 0
      %4152 = vmatprep.subr.bf16.mxu0 0
      %4153 = vmatpush2.bf16.msra.mxu0 0
      %4154 = vmatprep.subr.bf16.mxu0 0
      %4155 = vmatpush2.bf16.msra.mxu0 0
      %4156 = vmatprep.subr.bf16.mxu0 0
      %4157 = vmatpush2.bf16.msra.mxu0 0
      %4158 = vmatprep.subr.bf16.mxu0 0
      %4159 = vmatpush2.bf16.msra.mxu0 0
      %4160 = vmatprep.subr.bf16.mxu0 0
      %4161 = vmatpush2.bf16.msra.mxu0 0
      %4162 = vmatprep.mubr.bf16.mxu0 0
      %4163 = vmatmul.mubr.bf16.gmra.mxu0 %v4128
      %v4164 = vpop.f32.mrf.mxu0
      %v4165 = vadd.f32 0.0, %v4164
      %v4166 = vpop.f32.mrf.mxu0
      %v4167 = vadd.f32 0.0, %v4166
      %v4168 = vpop.f32.mrf.mxu0
      %v4169 = vpop.f32.mrf.mxu0
      %4170 = vdwg.mxu0
      %4171 = vmatprep.subr.bf16.mxu0 0
      %4172 = vmatpush1.bf16.msra.mxu0 0
      %4173 = vmatprep.subr.bf16.mxu0 0
      %4174 = vmatpush1.bf16.msra.mxu0 0
      %4175 = vmatprep.subr.bf16.mxu0 0
      %4176 = vmatpush1.bf16.msra.mxu0 0
      %4177 = vmatprep.subr.bf16.mxu0 0
      %4178 = vmatpush1.bf16.msra.mxu0 0
      %4179 = vmatprep.subr.bf16.mxu0 0
      %4180 = vmatpush1.bf16.msra.mxu0 0
      %4181 = vmatprep.subr.bf16.mxu0 0
      %4182 = vmatpush1.bf16.msra.mxu0 0
      %4183 = vmatprep.subr.bf16.mxu0 0
      %4184 = vmatpush1.bf16.msra.mxu0 0
      %4185 = vmatprep.subr.bf16.mxu0 %v4121
      %4186 = vmatpush1.bf16.msra.mxu0 %v4125
      %4187 = vmatprep.subr.bf16.mxu0 0
      %4188 = vmatpush2.bf16.msra.mxu0 0
      %4189 = vmatprep.subr.bf16.mxu0 0
      %4190 = vmatpush2.bf16.msra.mxu0 0
      %4191 = vmatprep.subr.bf16.mxu0 0
      %4192 = vmatpush2.bf16.msra.mxu0 0
      %4193 = vmatprep.subr.bf16.mxu0 0
      %4194 = vmatpush2.bf16.msra.mxu0 0
      %4195 = vmatprep.subr.bf16.mxu0 0
      %4196 = vmatpush2.bf16.msra.mxu0 0
      %4197 = vmatprep.subr.bf16.mxu0 0
      %4198 = vmatpush2.bf16.msra.mxu0 0
      %4199 = vmatprep.subr.bf16.mxu0 0
      %4200 = vmatpush2.bf16.msra.mxu0 0
      %4201 = vmatprep.subr.bf16.mxu0 0
      %4202 = vmatpush2.bf16.msra.mxu0 0
      %4203 = vmatprep.mubr.bf16.mxu0 0
      %4204 = vmatmul.mubr.bf16.gmra.mxu0 %v4128
      %v4205 = vpop.f32.mrf.mxu0
      %v4206 = vadd.f32 0.0, %v4205
      %v4207 = vpop.f32.mrf.mxu0
      %v4208 = vadd.f32 0.0, %v4207
      %v4209 = vpop.f32.mrf.mxu0
      %v4210 = vpop.f32.mrf.mxu0
      %4211 = vdwg.mxu0
      %v4212 = vadd.f32 %v4101, %v4165
      %v4213 = vadd.f32 %v4102, %v4167
      %v4214 = vadd.f32 %v4103, %v4206
      %v4215 = vadd.f32 %v4104, %v4208
      %s4216 = scalar_lea.vmem %s4, 52
      %v4217 = vld [vmem:[%s4216] sm:$0xf]
      %4218 = vrot.lane.b32.xlu0 %v2793, 28
      %v4219 = vpop.permute.xlu0 %4218
      %4220 = vrot.lane.b32.xlu0 %v2794, 28
      %v4221 = vpop.permute.xlu0 %4220
      %4222 = vrot.lane.b32.xlu0 %v2795, 28
      %v4223 = vpop.permute.xlu0 %4222
      %4224 = vrot.lane.b32.xlu0 %v2796, 28
      %v4225 = vpop.permute.xlu0 %4224
      %v4226 = vsel %vm2045, %v4219, %v4221
      %v4227 = vsel %vm2045, %v4221, %v4223
      %v4228 = vsel %vm2045, %v4223, %v4225
      %4231 = vrot.lane.b32.xlu0 %v2793, 44
      %v4232 = vpop.permute.xlu0 %4231
      %v4236 = vsel %vm2051, %v4228, %v4232
      %v4239 = vsel %vm2844, %v4217, 0
      %4241 = vmatprep.subr.bf16.mxu0 0
      %4242 = vmatpush1.bf16.msra.mxu0 0
      %4243 = vmatprep.subr.bf16.mxu0 0
      %4244 = vmatpush1.bf16.msra.mxu0 0
      %4245 = vmatprep.subr.bf16.mxu0 0
      %4246 = vmatpush1.bf16.msra.mxu0 0
      %4247 = vmatprep.subr.bf16.mxu0 0
      %4248 = vmatpush1.bf16.msra.mxu0 0
      %4249 = vmatprep.subr.bf16.mxu0 0
      %4250 = vmatpush1.bf16.msra.mxu0 0
      %4251 = vmatprep.subr.bf16.mxu0 0
      %4252 = vmatpush1.bf16.msra.mxu0 0
      %4253 = vmatprep.subr.bf16.mxu0 0
      %4254 = vmatpush1.bf16.msra.mxu0 0
      %4255 = vmatprep.subr.bf16.mxu0 %v4227
      %4256 = vmatpush1.bf16.msra.mxu0 %v4226
      %4257 = vmatprep.subr.bf16.mxu0 0
      %4258 = vmatpush2.bf16.msra.mxu0 0
      %4259 = vmatprep.subr.bf16.mxu0 0
      %4260 = vmatpush2.bf16.msra.mxu0 0
      %4261 = vmatprep.subr.bf16.mxu0 0
      %4262 = vmatpush2.bf16.msra.mxu0 0
      %4263 = vmatprep.subr.bf16.mxu0 0
      %4264 = vmatpush2.bf16.msra.mxu0 0
      %4265 = vmatprep.subr.bf16.mxu0 0
      %4266 = vmatpush2.bf16.msra.mxu0 0
      %4267 = vmatprep.subr.bf16.mxu0 0
      %4268 = vmatpush2.bf16.msra.mxu0 0
      %4269 = vmatprep.subr.bf16.mxu0 0
      %4270 = vmatpush2.bf16.msra.mxu0 0
      %4271 = vmatprep.subr.bf16.mxu0 0
      %4272 = vmatpush2.bf16.msra.mxu0 0
      %4273 = vmatprep.mubr.bf16.mxu0 0
      %4274 = vmatmul.mubr.bf16.gmra.mxu0 %v4239
      %v4275 = vpop.f32.mrf.mxu0
      %v4276 = vadd.f32 0.0, %v4275
      %v4277 = vpop.f32.mrf.mxu0
      %v4278 = vadd.f32 0.0, %v4277
      %v4279 = vpop.f32.mrf.mxu0
      %v4280 = vpop.f32.mrf.mxu0
      %4281 = vdwg.mxu0
      %4282 = vmatprep.subr.bf16.mxu0 0
      %4283 = vmatpush1.bf16.msra.mxu0 0
      %4284 = vmatprep.subr.bf16.mxu0 0
      %4285 = vmatpush1.bf16.msra.mxu0 0
      %4286 = vmatprep.subr.bf16.mxu0 0
      %4287 = vmatpush1.bf16.msra.mxu0 0
      %4288 = vmatprep.subr.bf16.mxu0 0
      %4289 = vmatpush1.bf16.msra.mxu0 0
      %4290 = vmatprep.subr.bf16.mxu0 0
      %4291 = vmatpush1.bf16.msra.mxu0 0
      %4292 = vmatprep.subr.bf16.mxu0 0
      %4293 = vmatpush1.bf16.msra.mxu0 0
      %4294 = vmatprep.subr.bf16.mxu0 0
      %4295 = vmatpush1.bf16.msra.mxu0 0
      %4296 = vmatprep.subr.bf16.mxu0 %v4232
      %4297 = vmatpush1.bf16.msra.mxu0 %v4236
      %4298 = vmatprep.subr.bf16.mxu0 0
      %4299 = vmatpush2.bf16.msra.mxu0 0
      %4300 = vmatprep.subr.bf16.mxu0 0
      %4301 = vmatpush2.bf16.msra.mxu0 0
      %4302 = vmatprep.subr.bf16.mxu0 0
      %4303 = vmatpush2.bf16.msra.mxu0 0
      %4304 = vmatprep.subr.bf16.mxu0 0
      %4305 = vmatpush2.bf16.msra.mxu0 0
      %4306 = vmatprep.subr.bf16.mxu0 0
      %4307 = vmatpush2.bf16.msra.mxu0 0
      %4308 = vmatprep.subr.bf16.mxu0 0
      %4309 = vmatpush2.bf16.msra.mxu0 0
      %4310 = vmatprep.subr.bf16.mxu0 0
      %4311 = vmatpush2.bf16.msra.mxu0 0
      %4312 = vmatprep.subr.bf16.mxu0 0
      %4313 = vmatpush2.bf16.msra.mxu0 0
      %4314 = vmatprep.mubr.bf16.mxu0 0
      %4315 = vmatmul.mubr.bf16.gmra.mxu0 %v4239
      %v4316 = vpop.f32.mrf.mxu0
      %v4317 = vadd.f32 0.0, %v4316
      %v4318 = vpop.f32.mrf.mxu0
      %v4319 = vadd.f32 0.0, %v4318
      %v4320 = vpop.f32.mrf.mxu0
      %v4321 = vpop.f32.mrf.mxu0
      %4322 = vdwg.mxu0
      %v4323 = vadd.f32 %v4212, %v4276
      %v4324 = vadd.f32 %v4213, %v4278
      %v4325 = vadd.f32 %v4214, %v4317
      %v4326 = vadd.f32 %v4215, %v4319
      %s4327 = scalar_lea.vmem %s4, 56
      %v4328 = vld [vmem:[%s4327] sm:$0xf]
      %4329 = vrot.lane.b32.xlu0 %v2793, 27
      %v4330 = vpop.permute.xlu0 %4329
      %4331 = vrot.lane.b32.xlu0 %v2794, 27
      %v4332 = vpop.permute.xlu0 %4331
      %4333 = vrot.lane.b32.xlu0 %v2795, 27
      %v4334 = vpop.permute.xlu0 %4333
      %4335 = vrot.lane.b32.xlu0 %v2796, 27
      %v4336 = vpop.permute.xlu0 %4335
      %v4337 = vsel %vm2178, %v4330, %v4332
      %v4338 = vsel %vm2178, %v4332, %v4334
      %v4339 = vsel %vm2178, %v4334, %v4336
      %4342 = vrot.lane.b32.xlu0 %v2793, 43
      %v4343 = vpop.permute.xlu0 %4342
      %v4347 = vsel %vm2184, %v4339, %v4343
      %v4350 = vsel %vm2844, %v4328, 0
      %4352 = vmatprep.subr.bf16.mxu0 0
      %4353 = vmatpush1.bf16.msra.mxu0 0
      %4354 = vmatprep.subr.bf16.mxu0 0
      %4355 = vmatpush1.bf16.msra.mxu0 0
      %4356 = vmatprep.subr.bf16.mxu0 0
      %4357 = vmatpush1.bf16.msra.mxu0 0
      %4358 = vmatprep.subr.bf16.mxu0 0
      %4359 = vmatpush1.bf16.msra.mxu0 0
      %4360 = vmatprep.subr.bf16.mxu0 0
      %4361 = vmatpush1.bf16.msra.mxu0 0
      %4362 = vmatprep.subr.bf16.mxu0 0
      %4363 = vmatpush1.bf16.msra.mxu0 0
      %4364 = vmatprep.subr.bf16.mxu0 0
      %4365 = vmatpush1.bf16.msra.mxu0 0
      %4366 = vmatprep.subr.bf16.mxu0 %v4338
      %4367 = vmatpush1.bf16.msra.mxu0 %v4337
      %4368 = vmatprep.subr.bf16.mxu0 0
      %4369 = vmatpush2.bf16.msra.mxu0 0
      %4370 = vmatprep.subr.bf16.mxu0 0
      %4371 = vmatpush2.bf16.msra.mxu0 0
      %4372 = vmatprep.subr.bf16.mxu0 0
      %4373 = vmatpush2.bf16.msra.mxu0 0
      %4374 = vmatprep.subr.bf16.mxu0 0
      %4375 = vmatpush2.bf16.msra.mxu0 0
      %4376 = vmatprep.subr.bf16.mxu0 0
      %4377 = vmatpush2.bf16.msra.mxu0 0
      %4378 = vmatprep.subr.bf16.mxu0 0
      %4379 = vmatpush2.bf16.msra.mxu0 0
      %4380 = vmatprep.subr.bf16.mxu0 0
      %4381 = vmatpush2.bf16.msra.mxu0 0
      %4382 = vmatprep.subr.bf16.mxu0 0
      %4383 = vmatpush2.bf16.msra.mxu0 0
      %4384 = vmatprep.mubr.bf16.mxu0 0
      %4385 = vmatmul.mubr.bf16.gmra.mxu0 %v4350
      %v4386 = vpop.f32.mrf.mxu0
      %v4387 = vadd.f32 0.0, %v4386
      %v4388 = vpop.f32.mrf.mxu0
      %v4389 = vadd.f32 0.0, %v4388
      %v4390 = vpop.f32.mrf.mxu0
      %v4391 = vpop.f32.mrf.mxu0
      %4392 = vdwg.mxu0
      %4393 = vmatprep.subr.bf16.mxu0 0
      %4394 = vmatpush1.bf16.msra.mxu0 0
      %4395 = vmatprep.subr.bf16.mxu0 0
      %4396 = vmatpush1.bf16.msra.mxu0 0
      %4397 = vmatprep.subr.bf16.mxu0 0
      %4398 = vmatpush1.bf16.msra.mxu0 0
      %4399 = vmatprep.subr.bf16.mxu0 0
      %4400 = vmatpush1.bf16.msra.mxu0 0
      %4401 = vmatprep.subr.bf16.mxu0 0
      %4402 = vmatpush1.bf16.msra.mxu0 0
      %4403 = vmatprep.subr.bf16.mxu0 0
      %4404 = vmatpush1.bf16.msra.mxu0 0
      %4405 = vmatprep.subr.bf16.mxu0 0
      %4406 = vmatpush1.bf16.msra.mxu0 0
      %4407 = vmatprep.subr.bf16.mxu0 %v4343
      %4408 = vmatpush1.bf16.msra.mxu0 %v4347
      %4409 = vmatprep.subr.bf16.mxu0 0
      %4410 = vmatpush2.bf16.msra.mxu0 0
      %4411 = vmatprep.subr.bf16.mxu0 0
      %4412 = vmatpush2.bf16.msra.mxu0 0
      %4413 = vmatprep.subr.bf16.mxu0 0
      %4414 = vmatpush2.bf16.msra.mxu0 0
      %4415 = vmatprep.subr.bf16.mxu0 0
      %4416 = vmatpush2.bf16.msra.mxu0 0
      %4417 = vmatprep.subr.bf16.mxu0 0
      %4418 = vmatpush2.bf16.msra.mxu0 0
      %4419 = vmatprep.subr.bf16.mxu0 0
      %4420 = vmatpush2.bf16.msra.mxu0 0
      %4421 = vmatprep.subr.bf16.mxu0 0
      %4422 = vmatpush2.bf16.msra.mxu0 0
      %4423 = vmatprep.subr.bf16.mxu0 0
      %4424 = vmatpush2.bf16.msra.mxu0 0
      %4425 = vmatprep.mubr.bf16.mxu0 0
      %4426 = vmatmul.mubr.bf16.gmra.mxu0 %v4350
      %v4427 = vpop.f32.mrf.mxu0
      %v4428 = vadd.f32 0.0, %v4427
      %v4429 = vpop.f32.mrf.mxu0
      %v4430 = vadd.f32 0.0, %v4429
      %v4431 = vpop.f32.mrf.mxu0
      %v4432 = vpop.f32.mrf.mxu0
      %4433 = vdwg.mxu0
      %v4434 = vadd.f32 %v4323, %v4387
      %v4435 = vadd.f32 %v4324, %v4389
      %v4436 = vadd.f32 %v4325, %v4428
      %v4437 = vadd.f32 %v4326, %v4430
      %s4438 = scalar_lea.vmem %s4, 60
      %v4439 = vld [vmem:[%s4438] sm:$0xf]
      %4440 = vrot.lane.b32.xlu0 %v2793, 19
      %v4441 = vpop.permute.xlu0 %4440
      %4442 = vrot.lane.b32.xlu0 %v2794, 19
      %v4443 = vpop.permute.xlu0 %4442
      %4444 = vrot.lane.b32.xlu0 %v2795, 19
      %v4445 = vpop.permute.xlu0 %4444
      %4446 = vrot.lane.b32.xlu0 %v2796, 19
      %v4447 = vpop.permute.xlu0 %4446
      %v4448 = vsel %vm2311, %v4441, %v4443
      %v4449 = vsel %vm2311, %v4443, %v4445
      %v4450 = vsel %vm2311, %v4445, %v4447
      %4453 = vrot.lane.b32.xlu0 %v2793, 35
      %v4454 = vpop.permute.xlu0 %4453
      %v4458 = vsel %vm2317, %v4450, %v4454
      %v4461 = vsel %vm2844, %v4439, 0
      %4463 = vmatprep.subr.bf16.mxu0 0
      %4464 = vmatpush1.bf16.msra.mxu0 0
      %4465 = vmatprep.subr.bf16.mxu0 0
      %4466 = vmatpush1.bf16.msra.mxu0 0
      %4467 = vmatprep.subr.bf16.mxu0 0
      %4468 = vmatpush1.bf16.msra.mxu0 0
      %4469 = vmatprep.subr.bf16.mxu0 0
      %4470 = vmatpush1.bf16.msra.mxu0 0
      %4471 = vmatprep.subr.bf16.mxu0 0
      %4472 = vmatpush1.bf16.msra.mxu0 0
      %4473 = vmatprep.subr.bf16.mxu0 0
      %4474 = vmatpush1.bf16.msra.mxu0 0
      %4475 = vmatprep.subr.bf16.mxu0 0
      %4476 = vmatpush1.bf16.msra.mxu0 0
      %4477 = vmatprep.subr.bf16.mxu0 %v4449
      %4478 = vmatpush1.bf16.msra.mxu0 %v4448
      %4479 = vmatprep.subr.bf16.mxu0 0
      %4480 = vmatpush2.bf16.msra.mxu0 0
      %4481 = vmatprep.subr.bf16.mxu0 0
      %4482 = vmatpush2.bf16.msra.mxu0 0
      %4483 = vmatprep.subr.bf16.mxu0 0
      %4484 = vmatpush2.bf16.msra.mxu0 0
      %4485 = vmatprep.subr.bf16.mxu0 0
      %4486 = vmatpush2.bf16.msra.mxu0 0
      %4487 = vmatprep.subr.bf16.mxu0 0
      %4488 = vmatpush2.bf16.msra.mxu0 0
      %4489 = vmatprep.subr.bf16.mxu0 0
      %4490 = vmatpush2.bf16.msra.mxu0 0
      %4491 = vmatprep.subr.bf16.mxu0 0
      %4492 = vmatpush2.bf16.msra.mxu0 0
      %4493 = vmatprep.subr.bf16.mxu0 0
      %4494 = vmatpush2.bf16.msra.mxu0 0
      %4495 = vmatprep.mubr.bf16.mxu0 0
      %4496 = vmatmul.mubr.bf16.gmra.mxu0 %v4461
      %v4497 = vpop.f32.mrf.mxu0
      %v4498 = vadd.f32 0.0, %v4497
      %v4499 = vpop.f32.mrf.mxu0
      %v4500 = vadd.f32 0.0, %v4499
      %v4501 = vpop.f32.mrf.mxu0
      %v4502 = vpop.f32.mrf.mxu0
      %4503 = vdwg.mxu0
      %4504 = vmatprep.subr.bf16.mxu0 0
      %4505 = vmatpush1.bf16.msra.mxu0 0
      %4506 = vmatprep.subr.bf16.mxu0 0
      %4507 = vmatpush1.bf16.msra.mxu0 0
      %4508 = vmatprep.subr.bf16.mxu0 0
      %4509 = vmatpush1.bf16.msra.mxu0 0
      %4510 = vmatprep.subr.bf16.mxu0 0
      %4511 = vmatpush1.bf16.msra.mxu0 0
      %4512 = vmatprep.subr.bf16.mxu0 0
      %4513 = vmatpush1.bf16.msra.mxu0 0
      %4514 = vmatprep.subr.bf16.mxu0 0
      %4515 = vmatpush1.bf16.msra.mxu0 0
      %4516 = vmatprep.subr.bf16.mxu0 0
      %4517 = vmatpush1.bf16.msra.mxu0 0
      %4518 = vmatprep.subr.bf16.mxu0 %v4454
      %4519 = vmatpush1.bf16.msra.mxu0 %v4458
      %4520 = vmatprep.subr.bf16.mxu0 0
      %4521 = vmatpush2.bf16.msra.mxu0 0
      %4522 = vmatprep.subr.bf16.mxu0 0
      %4523 = vmatpush2.bf16.msra.mxu0 0
      %4524 = vmatprep.subr.bf16.mxu0 0
      %4525 = vmatpush2.bf16.msra.mxu0 0
      %4526 = vmatprep.subr.bf16.mxu0 0
      %4527 = vmatpush2.bf16.msra.mxu0 0
      %4528 = vmatprep.subr.bf16.mxu0 0
      %4529 = vmatpush2.bf16.msra.mxu0 0
      %4530 = vmatprep.subr.bf16.mxu0 0
      %4531 = vmatpush2.bf16.msra.mxu0 0
      %4532 = vmatprep.subr.bf16.mxu0 0
      %4533 = vmatpush2.bf16.msra.mxu0 0
      %4534 = vmatprep.subr.bf16.mxu0 0
      %4535 = vmatpush2.bf16.msra.mxu0 0
      %4536 = vmatprep.mubr.bf16.mxu0 0
      %4537 = vmatmul.mubr.bf16.gmra.mxu0 %v4461
      %v4538 = vpop.f32.mrf.mxu0
      %v4539 = vadd.f32 0.0, %v4538
      %v4540 = vpop.f32.mrf.mxu0
      %v4541 = vadd.f32 0.0, %v4540
      %v4542 = vpop.f32.mrf.mxu0
      %v4543 = vpop.f32.mrf.mxu0
      %4544 = vdwg.mxu0
      %v4545 = vadd.f32 %v4434, %v4498
      %v4546 = vadd.f32 %v4435, %v4500
      %v4547 = vadd.f32 %v4436, %v4539
      %v4548 = vadd.f32 %v4437, %v4541
      %s4549 = scalar_lea.vmem %s4, 64
      %v4550 = vld [vmem:[%s4549] sm:$0xf]
      %4551 = vrot.lane.b32.xlu0 %v2793, 18
      %v4552 = vpop.permute.xlu0 %4551
      %4553 = vrot.lane.b32.xlu0 %v2794, 18
      %v4554 = vpop.permute.xlu0 %4553
      %4555 = vrot.lane.b32.xlu0 %v2795, 18
      %v4556 = vpop.permute.xlu0 %4555
      %4557 = vrot.lane.b32.xlu0 %v2796, 18
      %v4558 = vpop.permute.xlu0 %4557
      %v4559 = vsel %vm2444, %v4552, %v4554
      %v4560 = vsel %vm2444, %v4554, %v4556
      %v4561 = vsel %vm2444, %v4556, %v4558
      %4564 = vrot.lane.b32.xlu0 %v2793, 34
      %v4565 = vpop.permute.xlu0 %4564
      %v4569 = vsel %vm2450, %v4561, %v4565
      %v4572 = vsel %vm2844, %v4550, 0
      %4574 = vmatprep.subr.bf16.mxu0 0
      %4575 = vmatpush1.bf16.msra.mxu0 0
      %4576 = vmatprep.subr.bf16.mxu0 0
      %4577 = vmatpush1.bf16.msra.mxu0 0
      %4578 = vmatprep.subr.bf16.mxu0 0
      %4579 = vmatpush1.bf16.msra.mxu0 0
      %4580 = vmatprep.subr.bf16.mxu0 0
      %4581 = vmatpush1.bf16.msra.mxu0 0
      %4582 = vmatprep.subr.bf16.mxu0 0
      %4583 = vmatpush1.bf16.msra.mxu0 0
      %4584 = vmatprep.subr.bf16.mxu0 0
      %4585 = vmatpush1.bf16.msra.mxu0 0
      %4586 = vmatprep.subr.bf16.mxu0 0
      %4587 = vmatpush1.bf16.msra.mxu0 0
      %4588 = vmatprep.subr.bf16.mxu0 %v4560
      %4589 = vmatpush1.bf16.msra.mxu0 %v4559
      %4590 = vmatprep.subr.bf16.mxu0 0
      %4591 = vmatpush2.bf16.msra.mxu0 0
      %4592 = vmatprep.subr.bf16.mxu0 0
      %4593 = vmatpush2.bf16.msra.mxu0 0
      %4594 = vmatprep.subr.bf16.mxu0 0
      %4595 = vmatpush2.bf16.msra.mxu0 0
      %4596 = vmatprep.subr.bf16.mxu0 0
      %4597 = vmatpush2.bf16.msra.mxu0 0
      %4598 = vmatprep.subr.bf16.mxu0 0
      %4599 = vmatpush2.bf16.msra.mxu0 0
      %4600 = vmatprep.subr.bf16.mxu0 0
      %4601 = vmatpush2.bf16.msra.mxu0 0
      %4602 = vmatprep.subr.bf16.mxu0 0
      %4603 = vmatpush2.bf16.msra.mxu0 0
      %4604 = vmatprep.subr.bf16.mxu0 0
      %4605 = vmatpush2.bf16.msra.mxu0 0
      %4606 = vmatprep.mubr.bf16.mxu0 0
      %4607 = vmatmul.mubr.bf16.gmra.mxu0 %v4572
      %v4608 = vpop.f32.mrf.mxu0
      %v4609 = vadd.f32 0.0, %v4608
      %v4610 = vpop.f32.mrf.mxu0
      %v4611 = vadd.f32 0.0, %v4610
      %v4612 = vpop.f32.mrf.mxu0
      %v4613 = vpop.f32.mrf.mxu0
      %4614 = vdwg.mxu0
      %4615 = vmatprep.subr.bf16.mxu0 0
      %4616 = vmatpush1.bf16.msra.mxu0 0
      %4617 = vmatprep.subr.bf16.mxu0 0
      %4618 = vmatpush1.bf16.msra.mxu0 0
      %4619 = vmatprep.subr.bf16.mxu0 0
      %4620 = vmatpush1.bf16.msra.mxu0 0
      %4621 = vmatprep.subr.bf16.mxu0 0
      %4622 = vmatpush1.bf16.msra.mxu0 0
      %4623 = vmatprep.subr.bf16.mxu0 0
      %4624 = vmatpush1.bf16.msra.mxu0 0
      %4625 = vmatprep.subr.bf16.mxu0 0
      %4626 = vmatpush1.bf16.msra.mxu0 0
      %4627 = vmatprep.subr.bf16.mxu0 0
      %4628 = vmatpush1.bf16.msra.mxu0 0
      %4629 = vmatprep.subr.bf16.mxu0 %v4565
      %4630 = vmatpush1.bf16.msra.mxu0 %v4569
      %4631 = vmatprep.subr.bf16.mxu0 0
      %4632 = vmatpush2.bf16.msra.mxu0 0
      %4633 = vmatprep.subr.bf16.mxu0 0
      %4634 = vmatpush2.bf16.msra.mxu0 0
      %4635 = vmatprep.subr.bf16.mxu0 0
      %4636 = vmatpush2.bf16.msra.mxu0 0
      %4637 = vmatprep.subr.bf16.mxu0 0
      %4638 = vmatpush2.bf16.msra.mxu0 0
      %4639 = vmatprep.subr.bf16.mxu0 0
      %4640 = vmatpush2.bf16.msra.mxu0 0
      %4641 = vmatprep.subr.bf16.mxu0 0
      %4642 = vmatpush2.bf16.msra.mxu0 0
      %4643 = vmatprep.subr.bf16.mxu0 0
      %4644 = vmatpush2.bf16.msra.mxu0 0
      %4645 = vmatprep.subr.bf16.mxu0 0
      %4646 = vmatpush2.bf16.msra.mxu0 0
      %4647 = vmatprep.mubr.bf16.mxu0 0
      %4648 = vmatmul.mubr.bf16.gmra.mxu0 %v4572
      %v4649 = vpop.f32.mrf.mxu0
      %v4650 = vadd.f32 0.0, %v4649
      %v4651 = vpop.f32.mrf.mxu0
      %v4652 = vadd.f32 0.0, %v4651
      %v4653 = vpop.f32.mrf.mxu0
      %v4654 = vpop.f32.mrf.mxu0
      %4655 = vdwg.mxu0
      %v4656 = vadd.f32 %v4545, %v4609
      %v4657 = vadd.f32 %v4546, %v4611
      %v4658 = vadd.f32 %v4547, %v4650
      %v4659 = vadd.f32 %v4548, %v4652
      %s4660 = scalar_lea.vmem %s4, 68
      %v4661 = vld [vmem:[%s4660] sm:$0xf]
      %4662 = vrot.lane.b32.xlu0 %v2793, 17
      %v4663 = vpop.permute.xlu0 %4662
      %4664 = vrot.lane.b32.xlu0 %v2794, 17
      %v4665 = vpop.permute.xlu0 %4664
      %4666 = vrot.lane.b32.xlu0 %v2795, 17
      %v4667 = vpop.permute.xlu0 %4666
      %4668 = vrot.lane.b32.xlu0 %v2796, 17
      %v4669 = vpop.permute.xlu0 %4668
      %v4670 = vsel %vm2577, %v4663, %v4665
      %v4671 = vsel %vm2577, %v4665, %v4667
      %v4672 = vsel %vm2577, %v4667, %v4669
      %4675 = vrot.lane.b32.xlu0 %v2793, 33
      %v4676 = vpop.permute.xlu0 %4675
      %v4680 = vsel %vm2583, %v4672, %v4676
      %v4683 = vsel %vm2844, %v4661, 0
      %4685 = vmatprep.subr.bf16.mxu0 0
      %4686 = vmatpush1.bf16.msra.mxu0 0
      %4687 = vmatprep.subr.bf16.mxu0 0
      %4688 = vmatpush1.bf16.msra.mxu0 0
      %4689 = vmatprep.subr.bf16.mxu0 0
      %4690 = vmatpush1.bf16.msra.mxu0 0
      %4691 = vmatprep.subr.bf16.mxu0 0
      %4692 = vmatpush1.bf16.msra.mxu0 0
      %4693 = vmatprep.subr.bf16.mxu0 0
      %4694 = vmatpush1.bf16.msra.mxu0 0
      %4695 = vmatprep.subr.bf16.mxu0 0
      %4696 = vmatpush1.bf16.msra.mxu0 0
      %4697 = vmatprep.subr.bf16.mxu0 0
      %4698 = vmatpush1.bf16.msra.mxu0 0
      %4699 = vmatprep.subr.bf16.mxu0 %v4671
      %4700 = vmatpush1.bf16.msra.mxu0 %v4670
      %4701 = vmatprep.subr.bf16.mxu0 0
      %4702 = vmatpush2.bf16.msra.mxu0 0
      %4703 = vmatprep.subr.bf16.mxu0 0
      %4704 = vmatpush2.bf16.msra.mxu0 0
      %4705 = vmatprep.subr.bf16.mxu0 0
      %4706 = vmatpush2.bf16.msra.mxu0 0
      %4707 = vmatprep.subr.bf16.mxu0 0
      %4708 = vmatpush2.bf16.msra.mxu0 0
      %4709 = vmatprep.subr.bf16.mxu0 0
      %4710 = vmatpush2.bf16.msra.mxu0 0
      %4711 = vmatprep.subr.bf16.mxu0 0
      %4712 = vmatpush2.bf16.msra.mxu0 0
      %4713 = vmatprep.subr.bf16.mxu0 0
      %4714 = vmatpush2.bf16.msra.mxu0 0
      %4715 = vmatprep.subr.bf16.mxu0 0
      %4716 = vmatpush2.bf16.msra.mxu0 0
      %4717 = vmatprep.mubr.bf16.mxu0 0
      %4718 = vmatmul.mubr.bf16.gmra.mxu0 %v4683
      %v4719 = vpop.f32.mrf.mxu0
      %v4720 = vadd.f32 0.0, %v4719
      %v4721 = vpop.f32.mrf.mxu0
      %v4722 = vadd.f32 0.0, %v4721
      %v4723 = vpop.f32.mrf.mxu0
      %v4724 = vpop.f32.mrf.mxu0
      %4725 = vdwg.mxu0
      %4726 = vmatprep.subr.bf16.mxu0 0
      %4727 = vmatpush1.bf16.msra.mxu0 0
      %4728 = vmatprep.subr.bf16.mxu0 0
      %4729 = vmatpush1.bf16.msra.mxu0 0
      %4730 = vmatprep.subr.bf16.mxu0 0
      %4731 = vmatpush1.bf16.msra.mxu0 0
      %4732 = vmatprep.subr.bf16.mxu0 0
      %4733 = vmatpush1.bf16.msra.mxu0 0
      %4734 = vmatprep.subr.bf16.mxu0 0
      %4735 = vmatpush1.bf16.msra.mxu0 0
      %4736 = vmatprep.subr.bf16.mxu0 0
      %4737 = vmatpush1.bf16.msra.mxu0 0
      %4738 = vmatprep.subr.bf16.mxu0 0
      %4739 = vmatpush1.bf16.msra.mxu0 0
      %4740 = vmatprep.subr.bf16.mxu0 %v4676
      %4741 = vmatpush1.bf16.msra.mxu0 %v4680
      %4742 = vmatprep.subr.bf16.mxu0 0
      %4743 = vmatpush2.bf16.msra.mxu0 0
      %4744 = vmatprep.subr.bf16.mxu0 0
      %4745 = vmatpush2.bf16.msra.mxu0 0
      %4746 = vmatprep.subr.bf16.mxu0 0
      %4747 = vmatpush2.bf16.msra.mxu0 0
      %4748 = vmatprep.subr.bf16.mxu0 0
      %4749 = vmatpush2.bf16.msra.mxu0 0
      %4750 = vmatprep.subr.bf16.mxu0 0
      %4751 = vmatpush2.bf16.msra.mxu0 0
      %4752 = vmatprep.subr.bf16.mxu0 0
      %4753 = vmatpush2.bf16.msra.mxu0 0
      %4754 = vmatprep.subr.bf16.mxu0 0
      %4755 = vmatpush2.bf16.msra.mxu0 0
      %4756 = vmatprep.subr.bf16.mxu0 0
      %4757 = vmatpush2.bf16.msra.mxu0 0
      %4758 = vmatprep.mubr.bf16.mxu0 0
      %4759 = vmatmul.mubr.bf16.gmra.mxu0 %v4683
      %v4760 = vpop.f32.mrf.mxu0
      %v4761 = vadd.f32 0.0, %v4760
      %v4762 = vpop.f32.mrf.mxu0
      %v4763 = vadd.f32 0.0, %v4762
      %v4764 = vpop.f32.mrf.mxu0
      %v4765 = vpop.f32.mrf.mxu0
      %4766 = vdwg.mxu0
      %v4767 = vadd.f32 %v4656, %v4720
      %v4768 = vadd.f32 %v4657, %v4722
      %v4769 = vadd.f32 %v4658, %v4761
      %v4770 = vadd.f32 %v4659, %v4763
      %v4771 = vld [vmem:[%s300] sm:$0xff]
      %v4772 = vld [vmem:[%s300 + $0x8] sm:$0xff]
      %v4773 = vld [vmem:[%s300 + $0x10] sm:$0xff]
      %v4774 = vld [vmem:[%s300 + $0x18] sm:$0xff]
      %v4775 = vmul.f32 %v4771, 0.70710677
      %v4776 = vmul.f32 %v4772, 0.70710677
      %v4777 = vmul.f32 %v4773, 0.70710677
      %v4778 = vmul.f32 %v4774, 0.70710677
      %v4779 = vmul.f32 %v4767, 0.70710677
      %v4780 = vmul.f32 %v4768, 0.70710677
      %v4781 = vmul.f32 %v4769, 0.70710677
      %v4782 = vmul.f32 %v4770, 0.70710677
      %v4783 = vadd.f32 %v4775, %v4779
      %v4784 = vadd.f32 %v4776, %v4780
      %v4785 = vadd.f32 %v4777, %v4781
      %v4786 = vadd.f32 %v4778, %v4782
      %v4787 = vmax.f32 %v4783, -256.0
      %v4788 = vmax.f32 %v4784, -256.0
      %v4789 = vmax.f32 %v4785, -256.0
      %v4790 = vmax.f32 %v4786, -256.0
      %v4791 = vmin.f32 %v4787, 256.0
      %v4792 = vmin.f32 %v4788, 256.0
      %v4793 = vmin.f32 %v4789, 256.0
      %v4794 = vmin.f32 %v4790, 256.0
      %4795 = vst [vmem:[%s314] sm:$0xff] %v4791
      %4796 = vst [vmem:[%s314 + $0x8] sm:$0xff] %v4792
      %4797 = vst [vmem:[%s314 + $0x10] sm:$0xff] %v4793
      %4798 = vst.msk [vmem:[%s314 + $0x18] sm:$0xff] %vm2844, %v4794
      %p4799 = scmp.lt.s32.totalorder %s20, 1
      %s4800 = scalar_select %p4799, %s20, 1
      %p4801 = scmp.lt.s32.totalorder %s21, 1
      %s4802 = scalar_select %p4801, %s21, 1
      %s4803 = smul.addr %s4802, 4
      %s4804 = smul.addr %s4800, 8
      %s4805 = sadd.s32 %s4803, %s4804
      %s4806 = smul.addr %s4805, 8
      %s4807 = scalar_lea.vmem %s5, %s4806
      // Predicated region
      $region41: #{block_forward_pallas.1} parent=39 // pred_check
        %p4808 = pneg %p172
      $region42: #{block_forward_pallas.1} parent=39 // pred_check_branch
        %4810 = sbr.rel (%p4808) target = $region44
      $region43: #{block_forward_pallas.1} parent=39 // pred_region
        _
      $region44: #{block_forward_pallas.1} parent=39 // pred_fallthru
        _
    $region40: #{block_forward_pallas.1} parent=5 // pred_fallthru
      _
    %p4811 = scmp.le.s32.totalorder 2, %s11
    // Predicated region
    $region45: #{block_forward_pallas.1} parent=5 // pred_check
      %p4812 = pneg %p4811
    $region46: #{block_forward_pallas.1} parent=5 // pred_check_branch
      %4814 = sbr.rel (%p4812) target = $region48
    $region47: #{block_forward_pallas.1} parent=5 // pred_region
      %s4815 = ssub.s32 %s11, 2
      // Predicated region
      $region49: #{block_forward_pallas.1} parent=47 // pred_check
        %p4816 = pneg %p178
      $region50: #{block_forward_pallas.1} parent=47 // pred_check_branch
        %4818 = sbr.rel (%p4816) target = $region52
      $region51: #{block_forward_pallas.1} parent=47 // pred_region
        %p4819 = scmp.lt.s32.totalorder %s22, 1
        %s4820 = scalar_select %p4819, %s22, 1
        %p4821 = scmp.lt.s32.totalorder %s23, 1
        %s4822 = scalar_select %p4821, %s23, 1
        %s4823 = smul.addr %s4822, 4
        %s4824 = smul.addr %s4820, 8
        %s4825 = sadd.s32 %s4823, %s4824
        %s4826 = smul.addr %s4825, 8
        %s4827 = scalar_lea.vmem %s5, %s4826
      $region52: #{block_forward_pallas.1} parent=47 // pred_fallthru
        _
    $region48: #{block_forward_pallas.1} parent=5 // pred_fallthru
      _
  $region6: #{block_forward_pallas.1} parent=0 // loop_footer
    %s15 = sadd.s32 1, %s11
  $region7: #{block_forward_pallas.1} parent=0 // loop_footer_branch
    %10 = sbr.rel target = $region3
  $region8: #{block_forward_pallas.1} parent=0 // loop_exit
    _

</llo_original>
